<compile_context>
chip_gen: v7x
topology: tpu7x:2x2x1
jax: 0.10.0
libtpu: 0.0.40
codegen_flags: <defaults>
</compile_context>

<pallas_src>
import functools

import jax
import jax.numpy as jnp
from jax.experimental import pallas as pl
from jax.experimental.pallas import tpu as pltpu

EPS = 1e-3  # BatchNorm2d eps used by the module


# ---------------------------------------------------------------------------
# Helpers
# ---------------------------------------------------------------------------
def _pick_tile_m(m):
    """Largest M-tile (multiple of 8, capped at 2048) dividing m."""
    for cand in (2048, 1024, 512, 256, 128, 64, 32, 16, 8):
        if cand <= m and m % cand == 0:
            return cand
    return m


def _smem_spec():
    return pl.BlockSpec(memory_space=pltpu.MemorySpace.SMEM)


def _sumsq(y):
    """Stack per-channel sum and sum-of-squares -> (2, C)."""
    return jnp.concatenate(
        [jnp.sum(y, axis=0, keepdims=True),
         jnp.sum(y * y, axis=0, keepdims=True)], axis=0)


def _fold_bn(stats, gamma, beta, m_total):
    """(sum, sumsq) over M -> per-channel (scale, shift): BN(y) = y*scale+shift."""
    mean = stats[0:1] / m_total
    var = stats[1:2] / m_total - mean * mean        # biased batch var (training)
    scale = gamma * jax.lax.rsqrt(var + EPS)
    shift = beta - mean * scale
    return scale, shift


def _has_other(p):
    return (p['output_channels'] != p['input_channels']) or p['upsample']


# ---------------------------------------------------------------------------
# Kernel 1: 1x1 input conv (+ optional other-path 1x1 conv) + BN stats
# (only used for the very first module; later modules get it fused in bridge)
# ---------------------------------------------------------------------------
def _pw_in_kernel(*refs, has_other):
    if has_other:
        x_ref, w_in_ref, w_o_ref, y1_ref, yo_ref, s1_ref, so_ref = refs
    else:
        x_ref, w_in_ref, y1_ref, s1_ref = refs

    @pl.when(pl.program_id(0) == 0)
    def _():
        s1_ref[...] = jnp.zeros_like(s1_ref)
        if has_other:
            so_ref[...] = jnp.zeros_like(so_ref)

    x = x_ref[...]
    y1 = jnp.dot(x, w_in_ref[...], preferred_element_type=jnp.float32)
    y1_ref[...] = y1
    s1_ref[...] += _sumsq(y1)
    if has_other:
        yo = jnp.dot(x, w_o_ref[...], preferred_element_type=jnp.float32)
        yo_ref[...] = yo
        so_ref[...] += _sumsq(yo)


def pw_in(x2d, w_in, w_other, *, tm):
    m, cin = x2d.shape
    cint = w_in.shape[1]
    has_other = w_other is not None

    args = [x2d, w_in]
    in_specs = [pl.BlockSpec((tm, cin), lambda i: (i, 0)),
                pl.BlockSpec((cin, cint), lambda i: (0, 0))]
    out_shape = [jax.ShapeDtypeStruct((m, cint), jnp.float32)]
    out_specs = [pl.BlockSpec((tm, cint), lambda i: (i, 0))]
    if has_other:
        cout = w_other.shape[1]
        args.append(w_other)
        in_specs.append(pl.BlockSpec((cin, cout), lambda i: (0, 0)))
        out_shape.append(jax.ShapeDtypeStruct((m, cout), jnp.float32))
        out_specs.append(pl.BlockSpec((tm, cout), lambda i: (i, 0)))
    out_shape.append(jax.ShapeDtypeStruct((2, cint), jnp.float32))
    out_specs.append(pl.BlockSpec((2, cint), lambda i: (0, 0)))
    if has_other:
        out_shape.append(jax.ShapeDtypeStruct((2, cout), jnp.float32))
        out_specs.append(pl.BlockSpec((2, cout), lambda i: (0, 0)))

    return pl.pallas_call(
        functools.partial(_pw_in_kernel, has_other=has_other),
        grid=(m // tm,),
        in_specs=in_specs,
        out_specs=tuple(out_specs),
        out_shape=tuple(out_shape),
        compiler_params=pltpu.CompilerParams(
            dimension_semantics=("arbitrary",)),
    )(*args)


# ---------------------------------------------------------------------------
# Kernel 2: BN1 + PReLU + 3x3 conv (pad 1) as a single im2col matmul + stats
# ---------------------------------------------------------------------------
def _conv3_kernel(y1_ref, sc_ref, sh_ref, w9_ref, a_ref, y2_ref, s2_ref,
                  *, h, w, cint):
    @pl.when(pl.program_id(0) == 0)
    def _():
        s2_ref[...] = jnp.zeros_like(s2_ref)

    sc = sc_ref[...].reshape(1, 1, cint)
    sh = sh_ref[...].reshape(1, 1, cint)
    a = a_ref[0]
    h1 = y1_ref[...] * sc + sh
    h1 = jnp.where(h1 > 0, h1, a * h1)

    zr = jnp.zeros((1, w, cint), jnp.float32)
    zc = jnp.zeros((h + 2, 1, cint), jnp.float32)
    xp = jnp.concatenate([zr, h1, zr], axis=0)
    xp = jnp.concatenate([zc, xp, zc], axis=1)      # (h+2, w+2, cint)
    taps = [xp[dy:dy + h, dx:dx + w, :] for dy in range(3) for dx in range(3)]
    patches = jnp.concatenate(taps, axis=-1).reshape(h * w, 9 * cint)
    # NOTE: middle_conv bias omitted -- a per-channel bias right before a
    # training-mode BatchNorm cancels exactly (identical forward output).
    y2 = jnp.dot(patches, w9_ref[...], preferred_element_type=jnp.float32)
    y2_ref[...] = y2
    s2_ref[...] += _sumsq(y2)


def conv3x3(y1_4d, scale1, shift1, w9flat, a_in):
    n, h, w, cint = y1_4d.shape
    y2, s2 = pl.pallas_call(
        functools.partial(_conv3_kernel, h=h, w=w, cint=cint),
        grid=(n,),
        in_specs=[
            pl.BlockSpec((None, h, w, cint), lambda b: (b, 0, 0, 0)),
            pl.BlockSpec((1, cint), lambda b: (0, 0)),
            pl.BlockSpec((1, cint), lambda b: (0, 0)),
            pl.BlockSpec((9 * cint, cint), lambda b: (0, 0)),
            _smem_spec(),
        ],
        out_specs=(
            pl.BlockSpec((None, h * w, cint), lambda b: (b, 0, 0)),
            pl.BlockSpec((2, cint), lambda b: (0, 0)),
        ),
        out_shape=(
            jax.ShapeDtypeStruct((n, h * w, cint), jnp.float32),
            jax.ShapeDtypeStruct((2, cint), jnp.float32),
        ),
        compiler_params=pltpu.CompilerParams(
            dimension_semantics=("arbitrary",)),
    )(y1_4d, scale1, shift1, w9flat, a_in)
    return y2.reshape(n * h * w, cint), s2


# ---------------------------------------------------------------------------
# Kernel 3: BN2 + PReLU + 1x1 output conv + stats
# ---------------------------------------------------------------------------
def _pw_out_kernel(y2_ref, sc_ref, sh_ref, w_out_ref, a_ref, y3_ref, s3_ref):
    @pl.when(pl.program_id(0) == 0)
    def _():
        s3_ref[...] = jnp.zeros_like(s3_ref)

    a = a_ref[0]
    h2 = y2_ref[...] * sc_ref[...] + sh_ref[...]
    h2 = jnp.where(h2 > 0, h2, a * h2)
    y3 = jnp.dot(h2, w_out_ref[...], preferred_element_type=jnp.float32)
    y3_ref[...] = y3
    s3_ref[...] += _sumsq(y3)


def pw_out(y2, scale2, shift2, w_out, a_mid, *, tm):
    m, cint = y2.shape
    cout = w_out.shape[1]
    return pl.pallas_call(
        _pw_out_kernel,
        grid=(m // tm,),
        in_specs=[
            pl.BlockSpec((tm, cint), lambda i: (i, 0)),
            pl.BlockSpec((1, cint), lambda i: (0, 0)),
            pl.BlockSpec((1, cint), lambda i: (0, 0)),
            pl.BlockSpec((cint, cout), lambda i: (0, 0)),
            _smem_spec(),
        ],
        out_specs=(
            pl.BlockSpec((tm, cout), lambda i: (i, 0)),
            pl.BlockSpec((2, cout), lambda i: (0, 0)),
        ),
        out_shape=(
            jax.ShapeDtypeStruct((m, cout), jnp.float32),
            jax.ShapeDtypeStruct((2, cout), jnp.float32),
        ),
        compiler_params=pltpu.CompilerParams(
            dimension_semantics=("arbitrary",)),
    )(y2, scale2, shift2, w_out, a_mid)


# ---------------------------------------------------------------------------
# Kernel 4: module boundary bridge
#   BN3 + other-path BN (or identity) + residual + module PReLU
#   + NEXT module's 1x1 input conv (+ next other-path 1x1 conv) + stats
# ---------------------------------------------------------------------------
def _bridge_kernel(*refs, cur_bn_other, next_has_other, need_act):
    refs = list(refs)
    y3_ref = refs.pop(0)
    oth_ref = refs.pop(0)
    sc3_ref = refs.pop(0)
    sh3_ref = refs.pop(0)
    if cur_bn_other:
        sco_ref = refs.pop(0)
        sho_ref = refs.pop(0)
    a_ref = refs.pop(0)
    w_in_ref = refs.pop(0)
    if next_has_other:
        w_on_ref = refs.pop(0)
    # outputs
    if need_act:
        act_ref = refs.pop(0)
    y1n_ref = refs.pop(0)
    if next_has_other:
        yon_ref = refs.pop(0)
    s1n_ref = refs.pop(0)
    if next_has_other:
        son_ref = refs.pop(0)

    @pl.when(pl.program_id(0) == 0)
    def _():
        s1n_ref[...] = jnp.zeros_like(s1n_ref)
        if next_has_other:
            son_ref[...] = jnp.zeros_like(son_ref)

    a = a_ref[0]
    main = y3_ref[...] * sc3_ref[...] + sh3_ref[...]
    if cur_bn_other:
        other = oth_ref[...] * sco_ref[...] + sho_ref[...]
    else:
        other = oth_ref[...]
    y = main + other
    act = jnp.where(y > 0, y, a * y)
    if need_act:
        act_ref[...] = act

    y1 = jnp.dot(act, w_in_ref[...], preferred_element_type=jnp.float32)
    y1n_ref[...] = y1
    s1n_ref[...] += _sumsq(y1)
    if next_has_other:
        yo = jnp.dot(act, w_on_ref[...], preferred_element_type=jnp.float32)
        yon_ref[...] = yo
        son_ref[...] += _sumsq(yo)


def bridge(y3, other_src, scale3, shift3, scale_o, shift_o, a_mod, pnext, *, tm):
    m, cout = y3.shape
    cur_bn_other = scale_o is not None
    next_has_other = _has_other(pnext)
    need_act = not next_has_other
    cint_n = pnext['output_channels'] // 4
    assert pnext['input_channels'] == cout

    args = [y3, other_src, scale3, shift3]
    in_specs = [pl.BlockSpec((tm, cout), lambda i: (i, 0)),
                pl.BlockSpec((tm, cout), lambda i: (i, 0)),
                pl.BlockSpec((1, cout), lambda i: (0, 0)),
                pl.BlockSpec((1, cout), lambda i: (0, 0))]
    if cur_bn_other:
        args += [scale_o, shift_o]
        in_specs += [pl.BlockSpec((1, cout), lambda i: (0, 0)),
                     pl.BlockSpec((1, cout), lambda i: (0, 0))]
    args += [a_mod, pnext['w_in']]
    in_specs += [_smem_spec(),
                 pl.BlockSpec((cout, cint_n), lambda i: (0, 0))]
    if next_has_other:
        cout_n = pnext['output_channels']
        args.append(pnext['w_other'])
        in_specs.append(pl.BlockSpec((cout, cout_n), lambda i: (0, 0)))

    out_shape = []
    out_specs = []
    if need_act:
        out_shape.append(jax.ShapeDtypeStruct((m, cout), jnp.float32))
        out_specs.append(pl.BlockSpec((tm, cout), lambda i: (i, 0)))
    out_shape.append(jax.ShapeDtypeStruct((m, cint_n), jnp.float32))
    out_specs.append(pl.BlockSpec((tm, cint_n), lambda i: (i, 0)))
    if next_has_other:
        out_shape.append(jax.ShapeDtypeStruct((m, cout_n), jnp.float32))
        out_specs.append(pl.BlockSpec((tm, cout_n), lambda i: (i, 0)))
    out_shape.append(jax.ShapeDtypeStruct((2, cint_n), jnp.float32))
    out_specs.append(pl.BlockSpec((2, cint_n), lambda i: (0, 0)))
    if next_has_other:
        out_shape.append(jax.ShapeDtypeStruct((2, cout_n), jnp.float32))
        out_specs.append(pl.BlockSpec((2, cout_n), lambda i: (0, 0)))

    return pl.pallas_call(
        functools.partial(_bridge_kernel, cur_bn_other=cur_bn_other,
                          next_has_other=next_has_other, need_act=need_act),
        grid=(m // tm,),
        in_specs=in_specs,
        out_specs=tuple(out_specs),
        out_shape=tuple(out_shape),
        compiler_params=pltpu.CompilerParams(
            dimension_semantics=("arbitrary",)),
    )(*args)


# ---------------------------------------------------------------------------
# Kernel 5: final head
#   last module's BN3 + other BN/identity + residual + PReLU
#   + ConvTranspose2d(32, nclasses, 2, stride=2, bias) as ONE matmul
# ---------------------------------------------------------------------------
def _final_kernel(*refs, cur_bn_other):
    refs = list(refs)
    y3_ref = refs.pop(0)
    oth_ref = refs.pop(0)
    sc3_ref = refs.pop(0)
    sh3_ref = refs.pop(0)
    if cur_bn_other:
        sco_ref = refs.pop(0)
        sho_ref = refs.pop(0)
    a_ref = refs.pop(0)
    w_ref = refs.pop(0)
    b_ref = refs.pop(0)
    o_ref = refs.pop(0)

    a = a_ref[0]
    main = y3_ref[...] * sc3_ref[...] + sh3_ref[...]
    if cur_bn_other:
        other = oth_ref[...] * sco_ref[...] + sho_ref[...]
    else:
        other = oth_ref[...]
    y = main + other
    act = jnp.where(y > 0, y, a * y)
    o_ref[...] = jnp.dot(act, w_ref[...],
                         preferred_element_type=jnp.float32) + b_ref[...]


def final_head(y3, other_src, scale3, shift3, scale_o, shift_o, a_mod,
               w_cat, bias_cat, *, tm):
    m, cout = y3.shape
    cur_bn_other = scale_o is not None
    ncl4 = w_cat.shape[1]

    args = [y3, other_src, scale3, shift3]
    in_specs = [pl.BlockSpec((tm, cout), lambda i: (i, 0)),
                pl.BlockSpec((tm, cout), lambda i: (i, 0)),
                pl.BlockSpec((1, cout), lambda i: (0, 0)),
                pl.BlockSpec((1, cout), lambda i: (0, 0))]
    if cur_bn_other:
        args += [scale_o, shift_o]
        in_specs += [pl.BlockSpec((1, cout), lambda i: (0, 0)),
                     pl.BlockSpec((1, cout), lambda i: (0, 0))]
    args += [a_mod, w_cat, bias_cat]
    in_specs += [_smem_spec(),
                 pl.BlockSpec((cout, ncl4), lambda i: (0, 0)),
                 pl.BlockSpec((1, ncl4), lambda i: (0, 0))]

    return pl.pallas_call(
        functools.partial(_final_kernel, cur_bn_other=cur_bn_other),
        grid=(m // tm,),
        in_specs=in_specs,
        out_specs=pl.BlockSpec((tm, ncl4), lambda i: (i, 0)),
        out_shape=jax.ShapeDtypeStruct((m, ncl4), jnp.float32),
        compiler_params=pltpu.CompilerParams(
            dimension_semantics=("parallel",)),
    )(*args)


# ---------------------------------------------------------------------------
# EnetDecoder forward (glue)
# ---------------------------------------------------------------------------
def enet_decoder_forward(x_nchw, layer_params, w_cat, bias_cat):
    for p in layer_params:
        if p['upsample']:
            # TODO(synk): upsample path (ConvTranspose2d stride-2 main path
            # and MaxUnpool2d other path) not implemented.
            raise NotImplementedError

    x = jnp.transpose(x_nchw, (0, 2, 3, 1))          # NCHW -> NHWC
    n, h, w, cin0 = x.shape
    m = n * h * w
    tm = _pick_tile_m(m)
    x2d = x.reshape(m, cin0)
    num_layers = len(layer_params)

    # --- first module: 1x1 input conv (+ other-path conv) + stats ---
    p0 = layer_params[0]
    if _has_other(p0):
        y1, yo, s1, so = pw_in(x2d, p0['w_in'], p0['w_other'], tm=tm)
        other_src, other_bn = yo, (p0['g_other'], p0['b_other'])
    else:
        y1, s1 = pw_in(x2d, p0['w_in'], None, tm=tm)
        other_src, other_bn, so = x2d, None, None

    out2d = None
    for i, p in enumerate(layer_params):
        cint = p['output_channels'] // 4

        scale1, shift1 = _fold_bn(s1, p['g_in'], p['b_in'], m)
        y2, s2 = conv3x3(y1.reshape(n, h, w, cint), scale1, shift1,
                         p['w9flat'], p['a_in'])
        scale2, shift2 = _fold_bn(s2, p['g_mid'], p['b_mid'], m)
        y3, s3 = pw_out(y2, scale2, shift2, p['w_out'], p['a_mid'], tm=tm)
        scale3, shift3 = _fold_bn(s3, p['g_out'], p['b_out'], m)
        if other_bn is not None:
            scale_o, shift_o = _fold_bn(so, other_bn[0], other_bn[1], m)
        else:
            scale_o = shift_o = None

        if i + 1 < num_layers:
            pnext = layer_params[i + 1]
            res = bridge(y3, other_src, scale3, shift3, scale_o, shift_o,
                         p['a_mod'], pnext, tm=tm)
            if _has_other(pnext):
                y1, yo, s1, so = res
                other_src, other_bn = yo, (pnext['g_other'], pnext['b_other'])
            else:
                act, y1, s1 = res
                other_src, other_bn, so = act, None, None
        else:
            out2d = final_head(y3, other_src, scale3, shift3, scale_o,
                               shift_o, p['a_mod'], w_cat, bias_cat, tm=tm)

    # (2,2) spatial interleave of the transposed conv: column = (2*di+dj)*ncl+c
    ncl = w_cat.shape[1] // 4
    out = out2d.reshape(n, h, w, 2, 2, ncl).transpose(0, 1, 3, 2, 4, 5)
    out = out.reshape(n, 2 * h, 2 * w, ncl)
    return jnp.transpose(out, (0, 3, 1, 2))           # NHWC -> NCHW


# ---------------------------------------------------------------------------
# Pure-jnp reference forward (same math, no Pallas)
# ---------------------------------------------------------------------------
def _ref_bn(y2d, gamma, beta):
    mean = jnp.mean(y2d, axis=0, keepdims=True)
    var = jnp.mean((y2d - mean) ** 2, axis=0, keepdims=True)
    return (y2d - mean) * jax.lax.rsqrt(var + EPS) * gamma + beta


def _ref_prelu(y, a):
    return jnp.where(y > 0, y, a * y)


def _ref_conv3(h1_4d, w9flat):
    n, h, w, c = h1_4d.shape
    xp = jnp.pad(h1_4d, ((0, 0), (1, 1), (1, 1), (0, 0)))
    taps = [xp[:, dy:dy + h, dx:dx + w, :] for dy in range(3) for dx in range(3)]
    patches = jnp.concatenate(taps, axis=-1).reshape(n * h * w, 9 * c)
    return patches @ w9flat


def ref_forward(x_nchw, layer_params, w_cat, bias_cat):
    x = jnp.transpose(x_nchw, (0, 2, 3, 1))
    n, h, w, _ = x.shape
    m = n * h * w
    for p in layer_params:
        cin, cout = p['input_channels'], p['output_channels']
        cint = cout // 4
        x2d = x.reshape(m, cin)
        y1 = x2d @ p['w_in']
        h1 = _ref_prelu(_ref_bn(y1, p['g_in'], p['b_in']), p['a_in'][0])
        y2 = _ref_conv3(h1.reshape(n, h, w, cint), p['w9flat'])
        h2 = _ref_prelu(_ref_bn(y2, p['g_mid'], p['b_mid']), p['a_mid'][0])
        y3 = h2 @ p['w_out']
        main = _ref_bn(y3, p['g_out'], p['b_out'])
        if 'w_other' in p:
            other = _ref_bn(x2d @ p['w_other'], p['g_other'], p['b_other'])
        else:
            other = x2d
        x = _ref_prelu(main + other, p['a_mod'][0]).reshape(n, h, w, cout)
    act2d = x.reshape(m, 32)
    out2d = act2d @ w_cat + bias_cat
    ncl = w_cat.shape[1] // 4
    out = out2d.reshape(n, h, w, 2, 2, ncl).transpose(0, 1, 3, 2, 4, 5)
    out = out.reshape(n, 2 * h, 2 * w, ncl)
    return jnp.transpose(out, (0, 3, 1, 2))


# ---------------------------------------------------------------------------
# Deterministic synthetic parameter init (shapes per module __init__)
# ---------------------------------------------------------------------------
def init_params(key, layer_cfgs, nclasses):
    layer_params = []
    for cfg in layer_cfgs:
        cin, cout = cfg['input_channels'], cfg['output_channels']
        cint = cout // 4
        keys = jax.random.split(key, 6)
        key = keys[-1]
        p = dict(cfg)
        # input_conv (1x1, no bias) + BN + PReLU
        p['w_in'] = 0.1 * jax.random.normal(keys[0], (cin, cint), jnp.float32)
        p['g_in'] = jnp.ones((1, cint), jnp.float32)
        p['b_in'] = jnp.zeros((1, cint), jnp.float32)
        p['a_in'] = jnp.full((1,), 0.25, jnp.float32)
        # middle_conv (3x3, pad 1) + BN + PReLU; weight stored im2col-flat
        # (9*cint, cint); conv bias omitted (cancels in training-mode BN).
        p['w9flat'] = 0.1 * jax.random.normal(keys[1], (9 * cint, cint),
                                              jnp.float32)
        p['g_mid'] = jnp.ones((1, cint), jnp.float32)
        p['b_mid'] = jnp.zeros((1, cint), jnp.float32)
        p['a_mid'] = jnp.full((1,), 0.25, jnp.float32)
        # output_conv (1x1, no bias) + BN
        p['w_out'] = 0.1 * jax.random.normal(keys[3], (cint, cout), jnp.float32)
        p['g_out'] = jnp.ones((1, cout), jnp.float32)
        p['b_out'] = jnp.zeros((1, cout), jnp.float32)
        # module PReLU
        p['a_mod'] = jnp.full((1,), 0.25, jnp.float32)
        # other path conv (only when channel count changes)
        if cout != cin or cfg['upsample']:
            p['w_other'] = 0.1 * jax.random.normal(keys[4], (cin, cout),
                                                   jnp.float32)
            p['g_other'] = jnp.ones((1, cout), jnp.float32)
            p['b_other'] = jnp.zeros((1, cout), jnp.float32)
        layer_params.append(p)

    # final ConvTranspose2d(32, nclasses, 2, stride=2): the 4 taps are
    # concatenated into one (32, 4*nclasses) matrix, column = (2*di+dj)*ncl + c.
    k1, k2 = jax.random.split(key)
    w4 = 0.1 * jax.random.normal(k1, (4, 32, nclasses), jnp.float32)
    w_cat = w4.transpose(1, 0, 2).reshape(32, 4 * nclasses)
    bias = 0.1 * jax.random.normal(k2, (1, nclasses), jnp.float32)
    bias_cat = jnp.tile(bias, (1, 4))
    return layer_params, w_cat, bias_cat


if __name__ == "__main__":
    key = jax.random.PRNGKey(0)
    kx, kp = jax.random.split(key)

    # small shapes: decoder input (N=2, C=16, H=8, W=8), two decoder modules,
    # last one outputs 32 channels to match the fixed-32 final ConvTranspose2d.
    N, CIN, H, W = 2, 16, 8, 8
    NCLASSES = 8
    layer_cfgs = [
        {'input_channels': 16, 'output_channels': 32, 'upsample': False},
        {'input_channels': 32, 'output_channels': 32, 'upsample': False},
    ]

    x_nchw = jax.random.normal(kx, (N, CIN, H, W), jnp.float32)
    layer_params, w_cat, bias_cat = init_params(kp, layer_cfgs, NCLASSES)

    fwd = jax.jit(lambda x: enet_decoder_forward(x, layer_params,
                                                 w_cat, bias_cat))
    out = fwd(x_nchw)
    jax.block_until_ready(out)

    assert out.shape == (N, NCLASSES, 2 * H, 2 * W), out.shape
    assert bool(jnp.all(jnp.isfinite(out)))

    ref = ref_forward(x_nchw, layer_params, w_cat, bias_cat)
    assert bool(jnp.allclose(out, ref, rtol=1e-3, atol=1e-3)), (
        float(jnp.max(jnp.abs(out - ref))))

    print("KERNEL_OK")
</pallas_src>

<mosaic_0001>
module attributes {stable_mosaic.version = 11 : i64} {
  func.func @_pw_out_kernel(%arg0: i32, %arg1: memref<128x8xf32, #tpu.memory_space<vmem>>, %arg2: memref<1x8xf32, #tpu.memory_space<vmem>>, %arg3: memref<1x8xf32, #tpu.memory_space<vmem>>, %arg4: memref<8x32xf32, #tpu.memory_space<vmem>>, %arg5: memref<1xf32, #tpu.memory_space<smem>>, %arg6: memref<128x32xf32, #tpu.memory_space<vmem>>, %arg7: memref<2x32xf32, #tpu.memory_space<vmem>>) attributes {dimension_semantics = [#tpu.dimension_semantics<arbitrary>], iteration_bounds = array<i64: 1>, scalar_prefetch = 0 : i64, scratch_operands = 0 : i64, tpu.core_type = #tpu.core_type<tc>, window_params = [{transform_indices = @transform_0, window_bounds = array<i64: 128, 8>}, {pipeline_mode = #tpu.pipeline_mode<synchronous>, transform_indices = @transform_1, window_bounds = array<i64: 1, 8>}, {pipeline_mode = #tpu.pipeline_mode<synchronous>, transform_indices = @transform_2, window_bounds = array<i64: 1, 8>}, {pipeline_mode = #tpu.pipeline_mode<synchronous>, transform_indices = @transform_3, window_bounds = array<i64: 8, 32>}, {transform_indices = @transform_4, window_bounds = array<i64: 1>}, {transform_indices = @transform_5, window_bounds = array<i64: 128, 32>}, {pipeline_mode = #tpu.pipeline_mode<synchronous>, transform_indices = @transform_6, window_bounds = array<i64: 2, 32>}]} {
    %c0_i32 = arith.constant 0 : i32
    %0 = arith.cmpi eq, %arg0, %c0_i32 : i32
    %1 = arith.extui %0 : i1 to i32
    %c0_i32_0 = arith.constant 0 : i32
    %2 = arith.cmpi ne, %1, %c0_i32_0 : i32
    scf.if %2 {
      %cst_18 = arith.constant 0.000000e+00 : f32
      %28 = vector.broadcast %cst_18 : f32 to vector<2x32xf32>
      %c0_19 = arith.constant 0 : index
      %c0_20 = arith.constant 0 : index
      %29 = vector.load %arg7[%c0_19, %c0_20] : memref<2x32xf32, #tpu.memory_space<vmem>>, vector<2x32xf32>
      tpu.vector_store %arg7[%c0_19, %c0_20], %28 {strides = array<i32>} : memref<2x32xf32, #tpu.memory_space<vmem>>, vector<2x32xf32>,
    } else {
    }
    %c0 = arith.constant 0 : index
    %3 = memref.load %arg5[%c0] : memref<1xf32, #tpu.memory_space<smem>>
    %c0_1 = arith.constant 0 : index
    %c0_2 = arith.constant 0 : index
    %4 = vector.load %arg1[%c0_1, %c0_2] : memref<128x8xf32, #tpu.memory_space<vmem>>, vector<128x8xf32>
    %c0_3 = arith.constant 0 : index
    %c0_4 = arith.constant 0 : index
    %5 = vector.load %arg2[%c0_3, %c0_4] : memref<1x8xf32, #tpu.memory_space<vmem>>, vector<1x8xf32>
    %6 = vector.broadcast %5 : vector<1x8xf32> to vector<128x8xf32>
    %7 = arith.mulf %4, %6 : vector<128x8xf32>
    %c0_5 = arith.constant 0 : index
    %c0_6 = arith.constant 0 : index
    %8 = vector.load %arg3[%c0_5, %c0_6] : memref<1x8xf32, #tpu.memory_space<vmem>>, vector<1x8xf32>
    %9 = vector.broadcast %8 : vector<1x8xf32> to vector<128x8xf32>
    %10 = arith.addf %7, %9 : vector<128x8xf32>
    %cst = arith.constant 0.000000e+00 : f32
    %11 = vector.broadcast %cst : f32 to vector<128x8xf32>
    %12 = arith.cmpf ogt, %10, %11 : vector<128x8xf32>
    %13 = vector.broadcast %3 : f32 to vector<128x8xf32>
    %14 = arith.mulf %13, %10 : vector<128x8xf32>
    %15 = arith.select %12, %10, %14 : vector<128x8xi1>, vector<128x8xf32>
    %c0_7 = arith.constant 0 : index
    %c0_8 = arith.constant 0 : index
    %16 = vector.load %arg4[%c0_7, %c0_8] : memref<8x32xf32, #tpu.memory_space<vmem>>, vector<8x32xf32>
    %cst_9 = arith.constant dense<0.000000e+00> : vector<128x32xf32>
    %17 = tpu.matmul %15, %16, %cst_9 {dimension_numbers = #tpu.dot_dimension_numbers<[1], [0], [0], [1], [0, 0, 1, 1], [], []>} : vector<128x8xf32>, vector<8x32xf32>, vector<128x32xf32> -> vector<128x32xf32>
    %c0_10 = arith.constant 0 : index
    %c0_11 = arith.constant 0 : index
    %18 = vector.load %arg6[%c0_10, %c0_11] : memref<128x32xf32, #tpu.memory_space<vmem>>, vector<128x32xf32>
    tpu.vector_store %arg6[%c0_10, %c0_11], %17 {strides = array<i32>} : memref<128x32xf32, #tpu.memory_space<vmem>>, vector<128x32xf32>,
    %c0_12 = arith.constant 0 : index
    %c0_13 = arith.constant 0 : index
    %19 = vector.load %arg7[%c0_12, %c0_13] : memref<2x32xf32, #tpu.memory_space<vmem>>, vector<2x32xf32>
    %cst_14 = arith.constant dense<0.000000e+00> : vector<32xf32>
    %20 = vector.multi_reduction <add>, %17, %cst_14 [0] : vector<128x32xf32> to vector<32xf32>
    %21 = vector.shape_cast %20 : vector<32xf32> to vector<1x32xf32>
    %22 = arith.mulf %17, %17 : vector<128x32xf32>
    %cst_15 = arith.constant dense<0.000000e+00> : vector<32xf32>
    %23 = vector.multi_reduction <add>, %22, %cst_15 [0] : vector<128x32xf32> to vector<32xf32>
    %24 = vector.shape_cast %23 : vector<32xf32> to vector<1x32xf32>
    %25 = tpu.concatenate %21, %24 in 0 : vector<1x32xf32>, vector<1x32xf32> -> vector<2x32xf32>
    %26 = arith.addf %19, %25 : vector<2x32xf32>
    %c0_16 = arith.constant 0 : index
    %c0_17 = arith.constant 0 : index
    %27 = vector.load %arg7[%c0_16, %c0_17] : memref<2x32xf32, #tpu.memory_space<vmem>>, vector<2x32xf32>
    tpu.vector_store %arg7[%c0_16, %c0_17], %26 {strides = array<i32>} : memref<2x32xf32, #tpu.memory_space<vmem>>, vector<2x32xf32>,
    return
  }
  func.func @transform_0(%arg0: i32) -> (i32, i32) {
    %c0_i32 = arith.constant 0 : i32
    %c0_i32_0 = arith.constant 0 : i32
    return %arg0, %c0_i32 : i32, i32
  }
  func.func @transform_1(%arg0: i32) -> (i32, i32) {
    %c0_i32 = arith.constant 0 : i32
    %c0_i32_0 = arith.constant 0 : i32
    %c0_i32_1 = arith.constant 0 : i32
    return %c0_i32, %c0_i32_0 : i32, i32
  }
  func.func @transform_2(%arg0: i32) -> (i32, i32) {
    %c0_i32 = arith.constant 0 : i32
    %c0_i32_0 = arith.constant 0 : i32
    %c0_i32_1 = arith.constant 0 : i32
    return %c0_i32, %c0_i32_0 : i32, i32
  }
  func.func @transform_3(%arg0: i32) -> (i32, i32) {
    %c0_i32 = arith.constant 0 : i32
    %c0_i32_0 = arith.constant 0 : i32
    %c0_i32_1 = arith.constant 0 : i32
    return %c0_i32, %c0_i32_0 : i32, i32
  }
  func.func @transform_4(%arg0: i32) -> i32 {
    %c0_i32 = arith.constant 0 : i32
    %c0_i32_0 = arith.constant 0 : i32
    return %c0_i32 : i32
  }
  func.func @transform_5(%arg0: i32) -> (i32, i32) {
    %c0_i32 = arith.constant 0 : i32
    %c0_i32_0 = arith.constant 0 : i32
    return %arg0, %c0_i32 : i32, i32
  }
  func.func @transform_6(%arg0: i32) -> (i32, i32) {
    %c0_i32 = arith.constant 0 : i32
    %c0_i32_0 = arith.constant 0 : i32
    %c0_i32_1 = arith.constant 0 : i32
    return %c0_i32, %c0_i32_0 : i32, i32
  }
}

module attributes {stable_mosaic.version = 11 : i64} {
  func.func @_pw_in_kernel(%arg0: i32, %arg1: memref<128x16xf32, #tpu.memory_space<vmem>>, %arg2: memref<16x8xf32, #tpu.memory_space<vmem>>, %arg3: memref<16x32xf32, #tpu.memory_space<vmem>>, %arg4: memref<128x8xf32, #tpu.memory_space<vmem>>, %arg5: memref<128x32xf32, #tpu.memory_space<vmem>>, %arg6: memref<2x8xf32, #tpu.memory_space<vmem>>, %arg7: memref<2x32xf32, #tpu.memory_space<vmem>>) attributes {dimension_semantics = [#tpu.dimension_semantics<arbitrary>], iteration_bounds = array<i64: 1>, scalar_prefetch = 0 : i64, scratch_operands = 0 : i64, tpu.core_type = #tpu.core_type<tc>, window_params = [{transform_indices = @transform_0, window_bounds = array<i64: 128, 16>}, {pipeline_mode = #tpu.pipeline_mode<synchronous>, transform_indices = @transform_1, window_bounds = array<i64: 16, 8>}, {pipeline_mode = #tpu.pipeline_mode<synchronous>, transform_indices = @transform_2, window_bounds = array<i64: 16, 32>}, {transform_indices = @transform_3, window_bounds = array<i64: 128, 8>}, {transform_indices = @transform_4, window_bounds = array<i64: 128, 32>}, {pipeline_mode = #tpu.pipeline_mode<synchronous>, transform_indices = @transform_5, window_bounds = array<i64: 2, 8>}, {pipeline_mode = #tpu.pipeline_mode<synchronous>, transform_indices = @transform_6, window_bounds = array<i64: 2, 32>}]} {
    %c0_i32 = arith.constant 0 : i32
    %0 = arith.cmpi eq, %arg0, %c0_i32 : i32
    %1 = arith.extui %0 : i1 to i32
    %c0_i32_0 = arith.constant 0 : i32
    %2 = arith.cmpi ne, %1, %c0_i32_0 : i32
    scf.if %2 {
      %cst_23 = arith.constant 0.000000e+00 : f32
      %28 = vector.broadcast %cst_23 : f32 to vector<2x8xf32>
      %c0_24 = arith.constant 0 : index
      %c0_25 = arith.constant 0 : index
      %29 = vector.load %arg6[%c0_24, %c0_25] : memref<2x8xf32, #tpu.memory_space<vmem>>, vector<2x8xf32>
      tpu.vector_store %arg6[%c0_24, %c0_25], %28 {strides = array<i32>} : memref<2x8xf32, #tpu.memory_space<vmem>>, vector<2x8xf32>,
      %cst_26 = arith.constant 0.000000e+00 : f32
      %30 = vector.broadcast %cst_26 : f32 to vector<2x32xf32>
      %c0_27 = arith.constant 0 : index
      %c0_28 = arith.constant 0 : index
      %31 = vector.load %arg7[%c0_27, %c0_28] : memref<2x32xf32, #tpu.memory_space<vmem>>, vector<2x32xf32>
      tpu.vector_store %arg7[%c0_27, %c0_28], %30 {strides = array<i32>} : memref<2x32xf32, #tpu.memory_space<vmem>>, vector<2x32xf32>,
    } else {
    }
    %c0 = arith.constant 0 : index
    %c0_1 = arith.constant 0 : index
    %3 = vector.load %arg1[%c0, %c0_1] : memref<128x16xf32, #tpu.memory_space<vmem>>, vector<128x16xf32>
    %c0_2 = arith.constant 0 : index
    %c0_3 = arith.constant 0 : index
    %4 = vector.load %arg2[%c0_2, %c0_3] : memref<16x8xf32, #tpu.memory_space<vmem>>, vector<16x8xf32>
    %cst = arith.constant dense<0.000000e+00> : vector<128x8xf32>
    %5 = tpu.matmul %3, %4, %cst {dimension_numbers = #tpu.dot_dimension_numbers<[1], [0], [0], [1], [0, 0, 1, 1], [], []>} : vector<128x16xf32>, vector<16x8xf32>, vector<128x8xf32> -> vector<128x8xf32>
    %c0_4 = arith.constant 0 : index
    %c0_5 = arith.constant 0 : index
    %6 = vector.load %arg4[%c0_4, %c0_5] : memref<128x8xf32, #tpu.memory_space<vmem>>, vector<128x8xf32>
    tpu.vector_store %arg4[%c0_4, %c0_5], %5 {strides = array<i32>} : memref<128x8xf32, #tpu.memory_space<vmem>>, vector<128x8xf32>,
    %c0_6 = arith.constant 0 : index
    %c0_7 = arith.constant 0 : index
    %7 = vector.load %arg6[%c0_6, %c0_7] : memref<2x8xf32, #tpu.memory_space<vmem>>, vector<2x8xf32>
    %cst_8 = arith.constant dense<0.000000e+00> : vector<8xf32>
    %8 = vector.multi_reduction <add>, %5, %cst_8 [0] : vector<128x8xf32> to vector<8xf32>
    %9 = vector.shape_cast %8 : vector<8xf32> to vector<1x8xf32>
    %10 = arith.mulf %5, %5 : vector<128x8xf32>
    %cst_9 = arith.constant dense<0.000000e+00> : vector<8xf32>
    %11 = vector.multi_reduction <add>, %10, %cst_9 [0] : vector<128x8xf32> to vector<8xf32>
    %12 = vector.shape_cast %11 : vector<8xf32> to vector<1x8xf32>
    %13 = tpu.concatenate %9, %12 in 0 : vector<1x8xf32>, vector<1x8xf32> -> vector<2x8xf32>
    %14 = arith.addf %7, %13 : vector<2x8xf32>
    %c0_10 = arith.constant 0 : index
    %c0_11 = arith.constant 0 : index
    %15 = vector.load %arg6[%c0_10, %c0_11] : memref<2x8xf32, #tpu.memory_space<vmem>>, vector<2x8xf32>
    tpu.vector_store %arg6[%c0_10, %c0_11], %14 {strides = array<i32>} : memref<2x8xf32, #tpu.memory_space<vmem>>, vector<2x8xf32>,
    %c0_12 = arith.constant 0 : index
    %c0_13 = arith.constant 0 : index
    %16 = vector.load %arg3[%c0_12, %c0_13] : memref<16x32xf32, #tpu.memory_space<vmem>>, vector<16x32xf32>
    %cst_14 = arith.constant dense<0.000000e+00> : vector<128x32xf32>
    %17 = tpu.matmul %3, %16, %cst_14 {dimension_numbers = #tpu.dot_dimension_numbers<[1], [0], [0], [1], [0, 0, 1, 1], [], []>} : vector<128x16xf32>, vector<16x32xf32>, vector<128x32xf32> -> vector<128x32xf32>
    %c0_15 = arith.constant 0 : index
    %c0_16 = arith.constant 0 : index
    %18 = vector.load %arg5[%c0_15, %c0_16] : memref<128x32xf32, #tpu.memory_space<vmem>>, vector<128x32xf32>
    tpu.vector_store %arg5[%c0_15, %c0_16], %17 {strides = array<i32>} : memref<128x32xf32, #tpu.memory_space<vmem>>, vector<128x32xf32>,
    %c0_17 = arith.constant 0 : index
    %c0_18 = arith.constant 0 : index
    %19 = vector.load %arg7[%c0_17, %c0_18] : memref<2x32xf32, #tpu.memory_space<vmem>>, vector<2x32xf32>
    %cst_19 = arith.constant dense<0.000000e+00> : vector<32xf32>
    %20 = vector.multi_reduction <add>, %17, %cst_19 [0] : vector<128x32xf32> to vector<32xf32>
    %21 = vector.shape_cast %20 : vector<32xf32> to vector<1x32xf32>
    %22 = arith.mulf %17, %17 : vector<128x32xf32>
    %cst_20 = arith.constant dense<0.000000e+00> : vector<32xf32>
    %23 = vector.multi_reduction <add>, %22, %cst_20 [0] : vector<128x32xf32> to vector<32xf32>
    %24 = vector.shape_cast %23 : vector<32xf32> to vector<1x32xf32>
    %25 = tpu.concatenate %21, %24 in 0 : vector<1x32xf32>, vector<1x32xf32> -> vector<2x32xf32>
    %26 = arith.addf %19, %25 : vector<2x32xf32>
    %c0_21 = arith.constant 0 : index
    %c0_22 = arith.constant 0 : index
    %27 = vector.load %arg7[%c0_21, %c0_22] : memref<2x32xf32, #tpu.memory_space<vmem>>, vector<2x32xf32>
    tpu.vector_store %arg7[%c0_21, %c0_22], %26 {strides = array<i32>} : memref<2x32xf32, #tpu.memory_space<vmem>>, vector<2x32xf32>,
    return
  }
  func.func @transform_0(%arg0: i32) -> (i32, i32) {
    %c0_i32 = arith.constant 0 : i32
    %c0_i32_0 = arith.constant 0 : i32
    return %arg0, %c0_i32 : i32, i32
  }
  func.func @transform_1(%arg0: i32) -> (i32, i32) {
    %c0_i32 = arith.constant 0 : i32
    %c0_i32_0 = arith.constant 0 : i32
    %c0_i32_1 = arith.constant 0 : i32
    return %c0_i32, %c0_i32_0 : i32, i32
  }
  func.func @transform_2(%arg0: i32) -> (i32, i32) {
    %c0_i32 = arith.constant 0 : i32
    %c0_i32_0 = arith.constant 0 : i32
    %c0_i32_1 = arith.constant 0 : i32
    return %c0_i32, %c0_i32_0 : i32, i32
  }
  func.func @transform_3(%arg0: i32) -> (i32, i32) {
    %c0_i32 = arith.constant 0 : i32
    %c0_i32_0 = arith.constant 0 : i32
    return %arg0, %c0_i32 : i32, i32
  }
  func.func @transform_4(%arg0: i32) -> (i32, i32) {
    %c0_i32 = arith.constant 0 : i32
    %c0_i32_0 = arith.constant 0 : i32
    return %arg0, %c0_i32 : i32, i32
  }
  func.func @transform_5(%arg0: i32) -> (i32, i32) {
    %c0_i32 = arith.constant 0 : i32
    %c0_i32_0 = arith.constant 0 : i32
    %c0_i32_1 = arith.constant 0 : i32
    return %c0_i32, %c0_i32_0 : i32, i32
  }
  func.func @transform_6(%arg0: i32) -> (i32, i32) {
    %c0_i32 = arith.constant 0 : i32
    %c0_i32_0 = arith.constant 0 : i32
    %c0_i32_1 = arith.constant 0 : i32
    return %c0_i32, %c0_i32_0 : i32, i32
  }
}

module attributes {stable_mosaic.version = 11 : i64} {
  func.func @_conv3_kernel(%arg0: i32, %arg1: memref<1x8x8x8xf32, #tpu.memory_space<vmem>>, %arg2: memref<1x8xf32, #tpu.memory_space<vmem>>, %arg3: memref<1x8xf32, #tpu.memory_space<vmem>>, %arg4: memref<72x8xf32, #tpu.memory_space<vmem>>, %arg5: memref<1xf32, #tpu.memory_space<smem>>, %arg6: memref<1x64x8xf32, #tpu.memory_space<vmem>>, %arg7: memref<2x8xf32, #tpu.memory_space<vmem>>) attributes {dimension_semantics = [#tpu.dimension_semantics<arbitrary>], iteration_bounds = array<i64: 2>, scalar_prefetch = 0 : i64, scratch_operands = 0 : i64, tpu.core_type = #tpu.core_type<tc>, window_params = [{transform_indices = @transform_0, window_bounds = array<i64: 1, 8, 8, 8>}, {pipeline_mode = #tpu.pipeline_mode<synchronous>, transform_indices = @transform_1, window_bounds = array<i64: 1, 8>}, {pipeline_mode = #tpu.pipeline_mode<synchronous>, transform_indices = @transform_2, window_bounds = array<i64: 1, 8>}, {pipeline_mode = #tpu.pipeline_mode<synchronous>, transform_indices = @transform_3, window_bounds = array<i64: 72, 8>}, {transform_indices = @transform_4, window_bounds = array<i64: 1>}, {transform_indices = @transform_5, window_bounds = array<i64: 1, 64, 8>}, {pipeline_mode = #tpu.pipeline_mode<synchronous>, transform_indices = @transform_6, window_bounds = array<i64: 2, 8>}]} {
    %c0_i32 = arith.constant 0 : i32
    %0 = arith.cmpi eq, %arg0, %c0_i32 : i32
    %1 = arith.extui %0 : i1 to i32
    %c0_i32_0 = arith.constant 0 : i32
    %2 = arith.cmpi ne, %1, %c0_i32_0 : i32
    scf.if %2 {
      %cst_23 = arith.constant 0.000000e+00 : f32
      %48 = vector.broadcast %cst_23 : f32 to vector<2x8xf32>
      %c0_24 = arith.constant 0 : index
      %c0_25 = arith.constant 0 : index
      %49 = vector.load %arg7[%c0_24, %c0_25] : memref<2x8xf32, #tpu.memory_space<vmem>>, vector<2x8xf32>
      tpu.vector_store %arg7[%c0_24, %c0_25], %48 {strides = array<i32>} : memref<2x8xf32, #tpu.memory_space<vmem>>, vector<2x8xf32>,
    } else {
    }
    %c0 = arith.constant 0 : index
    %c0_1 = arith.constant 0 : index
    %3 = vector.load %arg2[%c0, %c0_1] : memref<1x8xf32, #tpu.memory_space<vmem>>, vector<1x8xf32>
    %4 = vector.shape_cast %3 : vector<1x8xf32> to vector<1x1x8xf32>
    %c0_2 = arith.constant 0 : index
    %c0_3 = arith.constant 0 : index
    %5 = vector.load %arg3[%c0_2, %c0_3] : memref<1x8xf32, #tpu.memory_space<vmem>>, vector<1x8xf32>
    %6 = vector.shape_cast %5 : vector<1x8xf32> to vector<1x1x8xf32>
    %c0_4 = arith.constant 0 : index
    %7 = memref.load %arg5[%c0_4] : memref<1xf32, #tpu.memory_space<smem>>
    %c0_5 = arith.constant 0 : index
    %c0_6 = arith.constant 0 : index
    %c0_7 = arith.constant 0 : index
    %c0_8 = arith.constant 0 : index
    %8 = vector.load %arg1[%c0_5, %c0_6, %c0_7, %c0_8] : memref<1x8x8x8xf32, #tpu.memory_space<vmem>>, vector<1x8x8x8xf32>
    %9 = vector.shape_cast %8 : vector<1x8x8x8xf32> to vector<8x8x8xf32>
    %10 = vector.broadcast %4 : vector<1x1x8xf32> to vector<8x8x8xf32>
    %11 = arith.mulf %9, %10 : vector<8x8x8xf32>
    %12 = vector.broadcast %6 : vector<1x1x8xf32> to vector<8x8x8xf32>
    %13 = arith.addf %11, %12 : vector<8x8x8xf32>
    %cst = arith.constant 0.000000e+00 : f32
    %14 = vector.broadcast %cst : f32 to vector<8x8x8xf32>
    %15 = arith.cmpf ogt, %13, %14 : vector<8x8x8xf32>
    %16 = vector.broadcast %7 : f32 to vector<8x8x8xf32>
    %17 = arith.mulf %16, %13 : vector<8x8x8xf32>
    %18 = arith.select %15, %13, %17 : vector<8x8x8xi1>, vector<8x8x8xf32>
    %cst_9 = arith.constant 0.000000e+00 : f32
    %19 = vector.broadcast %cst_9 : f32 to vector<1x8x8xf32>
    %cst_10 = arith.constant 0.000000e+00 : f32
    %20 = vector.broadcast %cst_10 : f32 to vector<10x1x8xf32>
    %21 = tpu.concatenate %19, %18, %19 in 0 : vector<1x8x8xf32>, vector<8x8x8xf32>, vector<1x8x8xf32> -> vector<10x8x8xf32>
    %22 = tpu.concatenate %20, %21, %20 in 1 : vector<10x1x8xf32>, vector<10x8x8xf32>, vector<10x1x8xf32> -> vector<10x10x8xf32>
    %23 = vector.extract_strided_slice %22 {offsets = [0, 0, 0], sizes = [8, 8, 8], strides = [1, 1, 1]} : vector<10x10x8xf32> to vector<8x8x8xf32>
    %24 = vector.extract_strided_slice %22 {offsets = [0, 1, 0], sizes = [8, 8, 8], strides = [1, 1, 1]} : vector<10x10x8xf32> to vector<8x8x8xf32>
    %25 = vector.extract_strided_slice %22 {offsets = [0, 2, 0], sizes = [8, 8, 8], strides = [1, 1, 1]} : vector<10x10x8xf32> to vector<8x8x8xf32>
    %26 = vector.extract_strided_slice %22 {offsets = [1, 0, 0], sizes = [8, 8, 8], strides = [1, 1, 1]} : vector<10x10x8xf32> to vector<8x8x8xf32>
    %27 = vector.extract_strided_slice %22 {offsets = [1, 1, 0], sizes = [8, 8, 8], strides = [1, 1, 1]} : vector<10x10x8xf32> to vector<8x8x8xf32>
    %28 = vector.extract_strided_slice %22 {offsets = [1, 2, 0], sizes = [8, 8, 8], strides = [1, 1, 1]} : vector<10x10x8xf32> to vector<8x8x8xf32>
    %29 = vector.extract_strided_slice %22 {offsets = [2, 0, 0], sizes = [8, 8, 8], strides = [1, 1, 1]} : vector<10x10x8xf32> to vector<8x8x8xf32>
    %30 = vector.extract_strided_slice %22 {offsets = [2, 1, 0], sizes = [8, 8, 8], strides = [1, 1, 1]} : vector<10x10x8xf32> to vector<8x8x8xf32>
    %31 = vector.extract_strided_slice %22 {offsets = [2, 2, 0], sizes = [8, 8, 8], strides = [1, 1, 1]} : vector<10x10x8xf32> to vector<8x8x8xf32>
    %32 = tpu.concatenate %23, %24, %25, %26, %27, %28, %29, %30, %31 in 2 : vector<8x8x8xf32>, vector<8x8x8xf32>, vector<8x8x8xf32>, vector<8x8x8xf32>, vector<8x8x8xf32>, vector<8x8x8xf32>, vector<8x8x8xf32>, vector<8x8x8xf32>, vector<8x8x8xf32> -> vector<8x8x72xf32>
    %33 = vector.shape_cast %32 : vector<8x8x72xf32> to vector<64x72xf32>
    %c0_11 = arith.constant 0 : index
    %c0_12 = arith.constant 0 : index
    %34 = vector.load %arg4[%c0_11, %c0_12] : memref<72x8xf32, #tpu.memory_space<vmem>>, vector<72x8xf32>
    %cst_13 = arith.constant dense<0.000000e+00> : vector<64x8xf32>
    %35 = tpu.matmul %33, %34, %cst_13 {dimension_numbers = #tpu.dot_dimension_numbers<[1], [0], [0], [1], [0, 0, 1, 1], [], []>} : vector<64x72xf32>, vector<72x8xf32>, vector<64x8xf32> -> vector<64x8xf32>
    %c0_14 = arith.constant 0 : index
    %c0_15 = arith.constant 0 : index
    %c0_16 = arith.constant 0 : index
    %36 = vector.load %arg6[%c0_14, %c0_15, %c0_16] : memref<1x64x8xf32, #tpu.memory_space<vmem>>, vector<1x64x8xf32>
    %37 = vector.shape_cast %36 : vector<1x64x8xf32> to vector<64x8xf32>
    %38 = vector.shape_cast %35 : vector<64x8xf32> to vector<1x64x8xf32>
    tpu.vector_store %arg6[%c0_14, %c0_15, %c0_16], %38 {strides = array<i32>} : memref<1x64x8xf32, #tpu.memory_space<vmem>>, vector<1x64x8xf32>,
    %c0_17 = arith.constant 0 : index
    %c0_18 = arith.constant 0 : index
    %39 = vector.load %arg7[%c0_17, %c0_18] : memref<2x8xf32, #tpu.memory_space<vmem>>, vector<2x8xf32>
    %cst_19 = arith.constant dense<0.000000e+00> : vector<8xf32>
    %40 = vector.multi_reduction <add>, %35, %cst_19 [0] : vector<64x8xf32> to vector<8xf32>
    %41 = vector.shape_cast %40 : vector<8xf32> to vector<1x8xf32>
    %42 = arith.mulf %35, %35 : vector<64x8xf32>
    %cst_20 = arith.constant dense<0.000000e+00> : vector<8xf32>
    %43 = vector.multi_reduction <add>, %42, %cst_20 [0] : vector<64x8xf32> to vector<8xf32>
    %44 = vector.shape_cast %43 : vector<8xf32> to vector<1x8xf32>
    %45 = tpu.concatenate %41, %44 in 0 : vector<1x8xf32>, vector<1x8xf32> -> vector<2x8xf32>
    %46 = arith.addf %39, %45 : vector<2x8xf32>
    %c0_21 = arith.constant 0 : index
    %c0_22 = arith.constant 0 : index
    %47 = vector.load %arg7[%c0_21, %c0_22] : memref<2x8xf32, #tpu.memory_space<vmem>>, vector<2x8xf32>
    tpu.vector_store %arg7[%c0_21, %c0_22], %46 {strides = array<i32>} : memref<2x8xf32, #tpu.memory_space<vmem>>, vector<2x8xf32>,
    return
  }
  func.func @transform_0(%arg0: i32) -> (i32, i32, i32, i32) {
    %c0_i32 = arith.constant 0 : i32
    %c0_i32_0 = arith.constant 0 : i32
    %c0_i32_1 = arith.constant 0 : i32
    %c0_i32_2 = arith.constant 0 : i32
    return %arg0, %c0_i32, %c0_i32_0, %c0_i32_1 : i32, i32, i32, i32
  }
  func.func @transform_1(%arg0: i32) -> (i32, i32) {
    %c0_i32 = arith.constant 0 : i32
    %c0_i32_0 = arith.constant 0 : i32
    %c0_i32_1 = arith.constant 0 : i32
    return %c0_i32, %c0_i32_0 : i32, i32
  }
  func.func @transform_2(%arg0: i32) -> (i32, i32) {
    %c0_i32 = arith.constant 0 : i32
    %c0_i32_0 = arith.constant 0 : i32
    %c0_i32_1 = arith.constant 0 : i32
    return %c0_i32, %c0_i32_0 : i32, i32
  }
  func.func @transform_3(%arg0: i32) -> (i32, i32) {
    %c0_i32 = arith.constant 0 : i32
    %c0_i32_0 = arith.constant 0 : i32
    %c0_i32_1 = arith.constant 0 : i32
    return %c0_i32, %c0_i32_0 : i32, i32
  }
  func.func @transform_4(%arg0: i32) -> i32 {
    %c0_i32 = arith.constant 0 : i32
    %c0_i32_0 = arith.constant 0 : i32
    return %c0_i32 : i32
  }
  func.func @transform_5(%arg0: i32) -> (i32, i32, i32) {
    %c0_i32 = arith.constant 0 : i32
    %c0_i32_0 = arith.constant 0 : i32
    %c0_i32_1 = arith.constant 0 : i32
    return %arg0, %c0_i32, %c0_i32_0 : i32, i32, i32
  }
  func.func @transform_6(%arg0: i32) -> (i32, i32) {
    %c0_i32 = arith.constant 0 : i32
    %c0_i32_0 = arith.constant 0 : i32
    %c0_i32_1 = arith.constant 0 : i32
    return %c0_i32, %c0_i32_0 : i32, i32
  }
}

module attributes {stable_mosaic.version = 11 : i64} {
  func.func @_bridge_kernel(%arg0: i32, %arg1: memref<128x32xf32, #tpu.memory_space<vmem>>, %arg2: memref<128x32xf32, #tpu.memory_space<vmem>>, %arg3: memref<1x32xf32, #tpu.memory_space<vmem>>, %arg4: memref<1x32xf32, #tpu.memory_space<vmem>>, %arg5: memref<1x32xf32, #tpu.memory_space<vmem>>, %arg6: memref<1x32xf32, #tpu.memory_space<vmem>>, %arg7: memref<1xf32, #tpu.memory_space<smem>>, %arg8: memref<32x8xf32, #tpu.memory_space<vmem>>, %arg9: memref<128x32xf32, #tpu.memory_space<vmem>>, %arg10: memref<128x8xf32, #tpu.memory_space<vmem>>, %arg11: memref<2x8xf32, #tpu.memory_space<vmem>>) attributes {dimension_semantics = [#tpu.dimension_semantics<arbitrary>], iteration_bounds = array<i64: 1>, scalar_prefetch = 0 : i64, scratch_operands = 0 : i64, tpu.core_type = #tpu.core_type<tc>, window_params = [{transform_indices = @transform_0, window_bounds = array<i64: 128, 32>}, {transform_indices = @transform_1, window_bounds = array<i64: 128, 32>}, {pipeline_mode = #tpu.pipeline_mode<synchronous>, transform_indices = @transform_2, window_bounds = array<i64: 1, 32>}, {pipeline_mode = #tpu.pipeline_mode<synchronous>, transform_indices = @transform_3, window_bounds = array<i64: 1, 32>}, {pipeline_mode = #tpu.pipeline_mode<synchronous>, transform_indices = @transform_4, window_bounds = array<i64: 1, 32>}, {pipeline_mode = #tpu.pipeline_mode<synchronous>, transform_indices = @transform_5, window_bounds = array<i64: 1, 32>}, {transform_indices = @transform_6, window_bounds = array<i64: 1>}, {pipeline_mode = #tpu.pipeline_mode<synchronous>, transform_indices = @transform_7, window_bounds = array<i64: 32, 8>}, {transform_indices = @transform_8, window_bounds = array<i64: 128, 32>}, {transform_indices = @transform_9, window_bounds = array<i64: 128, 8>}, {pipeline_mode = #tpu.pipeline_mode<synchronous>, transform_indices = @transform_10, window_bounds = array<i64: 2, 8>}]} {
    %c0_i32 = arith.constant 0 : i32
    %0 = arith.cmpi eq, %arg0, %c0_i32 : i32
    %1 = arith.extui %0 : i1 to i32
    %c0_i32_0 = arith.constant 0 : i32
    %2 = arith.cmpi ne, %1, %c0_i32_0 : i32
    scf.if %2 {
      %cst_26 = arith.constant 0.000000e+00 : f32
      %37 = vector.broadcast %cst_26 : f32 to vector<2x8xf32>
      %c0_27 = arith.constant 0 : index
      %c0_28 = arith.constant 0 : index
      %38 = vector.load %arg11[%c0_27, %c0_28] : memref<2x8xf32, #tpu.memory_space<vmem>>, vector<2x8xf32>
      tpu.vector_store %arg11[%c0_27, %c0_28], %37 {strides = array<i32>} : memref<2x8xf32, #tpu.memory_space<vmem>>, vector<2x8xf32>,
    } else {
    }
    %c0 = arith.constant 0 : index
    %3 = memref.load %arg7[%c0] : memref<1xf32, #tpu.memory_space<smem>>
    %c0_1 = arith.constant 0 : index
    %c0_2 = arith.constant 0 : index
    %4 = vector.load %arg1[%c0_1, %c0_2] : memref<128x32xf32, #tpu.memory_space<vmem>>, vector<128x32xf32>
    %c0_3 = arith.constant 0 : index
    %c0_4 = arith.constant 0 : index
    %5 = vector.load %arg3[%c0_3, %c0_4] : memref<1x32xf32, #tpu.memory_space<vmem>>, vector<1x32xf32>
    %6 = vector.broadcast %5 : vector<1x32xf32> to vector<128x32xf32>
    %7 = arith.mulf %4, %6 : vector<128x32xf32>
    %c0_5 = arith.constant 0 : index
    %c0_6 = arith.constant 0 : index
    %8 = vector.load %arg4[%c0_5, %c0_6] : memref<1x32xf32, #tpu.memory_space<vmem>>, vector<1x32xf32>
    %9 = vector.broadcast %8 : vector<1x32xf32> to vector<128x32xf32>
    %10 = arith.addf %7, %9 : vector<128x32xf32>
    %c0_7 = arith.constant 0 : index
    %c0_8 = arith.constant 0 : index
    %11 = vector.load %arg2[%c0_7, %c0_8] : memref<128x32xf32, #tpu.memory_space<vmem>>, vector<128x32xf32>
    %c0_9 = arith.constant 0 : index
    %c0_10 = arith.constant 0 : index
    %12 = vector.load %arg5[%c0_9, %c0_10] : memref<1x32xf32, #tpu.memory_space<vmem>>, vector<1x32xf32>
    %13 = vector.broadcast %12 : vector<1x32xf32> to vector<128x32xf32>
    %14 = arith.mulf %11, %13 : vector<128x32xf32>
    %c0_11 = arith.constant 0 : index
    %c0_12 = arith.constant 0 : index
    %15 = vector.load %arg6[%c0_11, %c0_12] : memref<1x32xf32, #tpu.memory_space<vmem>>, vector<1x32xf32>
    %16 = vector.broadcast %15 : vector<1x32xf32> to vector<128x32xf32>
    %17 = arith.addf %14, %16 : vector<128x32xf32>
    %18 = arith.addf %10, %17 : vector<128x32xf32>
    %cst = arith.constant 0.000000e+00 : f32
    %19 = vector.broadcast %cst : f32 to vector<128x32xf32>
    %20 = arith.cmpf ogt, %18, %19 : vector<128x32xf32>
    %21 = vector.broadcast %3 : f32 to vector<128x32xf32>
    %22 = arith.mulf %21, %18 : vector<128x32xf32>
    %23 = arith.select %20, %18, %22 : vector<128x32xi1>, vector<128x32xf32>
    %c0_13 = arith.constant 0 : index
    %c0_14 = arith.constant 0 : index
    %24 = vector.load %arg9[%c0_13, %c0_14] : memref<128x32xf32, #tpu.memory_space<vmem>>, vector<128x32xf32>
    tpu.vector_store %arg9[%c0_13, %c0_14], %23 {strides = array<i32>} : memref<128x32xf32, #tpu.memory_space<vmem>>, vector<128x32xf32>,
    %c0_15 = arith.constant 0 : index
    %c0_16 = arith.constant 0 : index
    %25 = vector.load %arg8[%c0_15, %c0_16] : memref<32x8xf32, #tpu.memory_space<vmem>>, vector<32x8xf32>
    %cst_17 = arith.constant dense<0.000000e+00> : vector<128x8xf32>
    %26 = tpu.matmul %23, %25, %cst_17 {dimension_numbers = #tpu.dot_dimension_numbers<[1], [0], [0], [1], [0, 0, 1, 1], [], []>} : vector<128x32xf32>, vector<32x8xf32>, vector<128x8xf32> -> vector<128x8xf32>
    %c0_18 = arith.constant 0 : index
    %c0_19 = arith.constant 0 : index
    %27 = vector.load %arg10[%c0_18, %c0_19] : memref<128x8xf32, #tpu.memory_space<vmem>>, vector<128x8xf32>
    tpu.vector_store %arg10[%c0_18, %c0_19], %26 {strides = array<i32>} : memref<128x8xf32, #tpu.memory_space<vmem>>, vector<128x8xf32>,
    %c0_20 = arith.constant 0 : index
    %c0_21 = arith.constant 0 : index
    %28 = vector.load %arg11[%c0_20, %c0_21] : memref<2x8xf32, #tpu.memory_space<vmem>>, vector<2x8xf32>
    %cst_22 = arith.constant dense<0.000000e+00> : vector<8xf32>
    %29 = vector.multi_reduction <add>, %26, %cst_22 [0] : vector<128x8xf32> to vector<8xf32>
    %30 = vector.shape_cast %29 : vector<8xf32> to vector<1x8xf32>
    %31 = arith.mulf %26, %26 : vector<128x8xf32>
    %cst_23 = arith.constant dense<0.000000e+00> : vector<8xf32>
    %32 = vector.multi_reduction <add>, %31, %cst_23 [0] : vector<128x8xf32> to vector<8xf32>
    %33 = vector.shape_cast %32 : vector<8xf32> to vector<1x8xf32>
    %34 = tpu.concatenate %30, %33 in 0 : vector<1x8xf32>, vector<1x8xf32> -> vector<2x8xf32>
    %35 = arith.addf %28, %34 : vector<2x8xf32>
    %c0_24 = arith.constant 0 : index
    %c0_25 = arith.constant 0 : index
    %36 = vector.load %arg11[%c0_24, %c0_25] : memref<2x8xf32, #tpu.memory_space<vmem>>, vector<2x8xf32>
    tpu.vector_store %arg11[%c0_24, %c0_25], %35 {strides = array<i32>} : memref<2x8xf32, #tpu.memory_space<vmem>>, vector<2x8xf32>,
    return
  }
  func.func @transform_0(%arg0: i32) -> (i32, i32) {
    %c0_i32 = arith.constant 0 : i32
    %c0_i32_0 = arith.constant 0 : i32
    return %arg0, %c0_i32 : i32, i32
  }
  func.func @transform_1(%arg0: i32) -> (i32, i32) {
    %c0_i32 = arith.constant 0 : i32
    %c0_i32_0 = arith.constant 0 : i32
    return %arg0, %c0_i32 : i32, i32
  }
  func.func @transform_2(%arg0: i32) -> (i32, i32) {
    %c0_i32 = arith.constant 0 : i32
    %c0_i32_0 = arith.constant 0 : i32
    %c0_i32_1 = arith.constant 0 : i32
    return %c0_i32, %c0_i32_0 : i32, i32
  }
  func.func @transform_3(%arg0: i32) -> (i32, i32) {
    %c0_i32 = arith.constant 0 : i32
    %c0_i32_0 = arith.constant 0 : i32
    %c0_i32_1 = arith.constant 0 : i32
    return %c0_i32, %c0_i32_0 : i32, i32
  }
  func.func @transform_4(%arg0: i32) -> (i32, i32) {
    %c0_i32 = arith.constant 0 : i32
    %c0_i32_0 = arith.constant 0 : i32
    %c0_i32_1 = arith.constant 0 : i32
    return %c0_i32, %c0_i32_0 : i32, i32
  }
  func.func @transform_5(%arg0: i32) -> (i32, i32) {
    %c0_i32 = arith.constant 0 : i32
    %c0_i32_0 = arith.constant 0 : i32
    %c0_i32_1 = arith.constant 0 : i32
    return %c0_i32, %c0_i32_0 : i32, i32
  }
  func.func @transform_6(%arg0: i32) -> i32 {
    %c0_i32 = arith.constant 0 : i32
    %c0_i32_0 = arith.constant 0 : i32
    return %c0_i32 : i32
  }
  func.func @transform_7(%arg0: i32) -> (i32, i32) {
    %c0_i32 = arith.constant 0 : i32
    %c0_i32_0 = arith.constant 0 : i32
    %c0_i32_1 = arith.constant 0 : i32
    return %c0_i32, %c0_i32_0 : i32, i32
  }
  func.func @transform_8(%arg0: i32) -> (i32, i32) {
    %c0_i32 = arith.constant 0 : i32
    %c0_i32_0 = arith.constant 0 : i32
    return %arg0, %c0_i32 : i32, i32
  }
  func.func @transform_9(%arg0: i32) -> (i32, i32) {
    %c0_i32 = arith.constant 0 : i32
    %c0_i32_0 = arith.constant 0 : i32
    return %arg0, %c0_i32 : i32, i32
  }
  func.func @transform_10(%arg0: i32) -> (i32, i32) {
    %c0_i32 = arith.constant 0 : i32
    %c0_i32_0 = arith.constant 0 : i32
    %c0_i32_1 = arith.constant 0 : i32
    return %c0_i32, %c0_i32_0 : i32, i32
  }
}

module attributes {stable_mosaic.version = 11 : i64} {
  func.func @_final_kernel(%arg0: i32, %arg1: memref<128x32xf32, #tpu.memory_space<vmem>>, %arg2: memref<128x32xf32, #tpu.memory_space<vmem>>, %arg3: memref<1x32xf32, #tpu.memory_space<vmem>>, %arg4: memref<1x32xf32, #tpu.memory_space<vmem>>, %arg5: memref<1xf32, #tpu.memory_space<smem>>, %arg6: memref<32x32xf32, #tpu.memory_space<vmem>>, %arg7: memref<1x32xf32, #tpu.memory_space<vmem>>, %arg8: memref<128x32xf32, #tpu.memory_space<vmem>>) attributes {dimension_semantics = [#tpu.dimension_semantics<parallel>], iteration_bounds = array<i64: 1>, scalar_prefetch = 0 : i64, scratch_operands = 0 : i64, tpu.core_type = #tpu.core_type<tc>, window_params = [{transform_indices = @transform_0, window_bounds = array<i64: 128, 32>}, {transform_indices = @transform_1, window_bounds = array<i64: 128, 32>}, {pipeline_mode = #tpu.pipeline_mode<synchronous>, transform_indices = @transform_2, window_bounds = array<i64: 1, 32>}, {pipeline_mode = #tpu.pipeline_mode<synchronous>, transform_indices = @transform_3, window_bounds = array<i64: 1, 32>}, {transform_indices = @transform_4, window_bounds = array<i64: 1>}, {pipeline_mode = #tpu.pipeline_mode<synchronous>, transform_indices = @transform_5, window_bounds = array<i64: 32, 32>}, {pipeline_mode = #tpu.pipeline_mode<synchronous>, transform_indices = @transform_6, window_bounds = array<i64: 1, 32>}, {transform_indices = @transform_7, window_bounds = array<i64: 128, 32>}]} {
    %c0 = arith.constant 0 : index
    %0 = memref.load %arg5[%c0] : memref<1xf32, #tpu.memory_space<smem>>
    %c0_0 = arith.constant 0 : index
    %c0_1 = arith.constant 0 : index
    %1 = vector.load %arg1[%c0_0, %c0_1] : memref<128x32xf32, #tpu.memory_space<vmem>>, vector<128x32xf32>
    %c0_2 = arith.constant 0 : index
    %c0_3 = arith.constant 0 : index
    %2 = vector.load %arg3[%c0_2, %c0_3] : memref<1x32xf32, #tpu.memory_space<vmem>>, vector<1x32xf32>
    %3 = vector.broadcast %2 : vector<1x32xf32> to vector<128x32xf32>
    %4 = arith.mulf %1, %3 : vector<128x32xf32>
    %c0_4 = arith.constant 0 : index
    %c0_5 = arith.constant 0 : index
    %5 = vector.load %arg4[%c0_4, %c0_5] : memref<1x32xf32, #tpu.memory_space<vmem>>, vector<1x32xf32>
    %6 = vector.broadcast %5 : vector<1x32xf32> to vector<128x32xf32>
    %7 = arith.addf %4, %6 : vector<128x32xf32>
    %c0_6 = arith.constant 0 : index
    %c0_7 = arith.constant 0 : index
    %8 = vector.load %arg2[%c0_6, %c0_7] : memref<128x32xf32, #tpu.memory_space<vmem>>, vector<128x32xf32>
    %9 = arith.addf %7, %8 : vector<128x32xf32>
    %cst = arith.constant 0.000000e+00 : f32
    %10 = vector.broadcast %cst : f32 to vector<128x32xf32>
    %11 = arith.cmpf ogt, %9, %10 : vector<128x32xf32>
    %12 = vector.broadcast %0 : f32 to vector<128x32xf32>
    %13 = arith.mulf %12, %9 : vector<128x32xf32>
    %14 = arith.select %11, %9, %13 : vector<128x32xi1>, vector<128x32xf32>
    %c0_8 = arith.constant 0 : index
    %c0_9 = arith.constant 0 : index
    %15 = vector.load %arg6[%c0_8, %c0_9] : memref<32x32xf32, #tpu.memory_space<vmem>>, vector<32x32xf32>
    %cst_10 = arith.constant dense<0.000000e+00> : vector<128x32xf32>
    %16 = tpu.matmul %14, %15, %cst_10 {dimension_numbers = #tpu.dot_dimension_numbers<[1], [0], [0], [1], [0, 0, 1, 1], [], []>} : vector<128x32xf32>, vector<32x32xf32>, vector<128x32xf32> -> vector<128x32xf32>
    %c0_11 = arith.constant 0 : index
    %c0_12 = arith.constant 0 : index
    %17 = vector.load %arg7[%c0_11, %c0_12] : memref<1x32xf32, #tpu.memory_space<vmem>>, vector<1x32xf32>
    %18 = vector.broadcast %17 : vector<1x32xf32> to vector<128x32xf32>
    %19 = arith.addf %16, %18 : vector<128x32xf32>
    %c0_13 = arith.constant 0 : index
    %c0_14 = arith.constant 0 : index
    %20 = vector.load %arg8[%c0_13, %c0_14] : memref<128x32xf32, #tpu.memory_space<vmem>>, vector<128x32xf32>
    tpu.vector_store %arg8[%c0_13, %c0_14], %19 {strides = array<i32>} : memref<128x32xf32, #tpu.memory_space<vmem>>, vector<128x32xf32>,
    return
  }
  func.func @transform_0(%arg0: i32) -> (i32, i32) {
    %c0_i32 = arith.constant 0 : i32
    %c0_i32_0 = arith.constant 0 : i32
    return %arg0, %c0_i32 : i32, i32
  }
  func.func @transform_1(%arg0: i32) -> (i32, i32) {
    %c0_i32 = arith.constant 0 : i32
    %c0_i32_0 = arith.constant 0 : i32
    return %arg0, %c0_i32 : i32, i32
  }
  func.func @transform_2(%arg0: i32) -> (i32, i32) {
    %c0_i32 = arith.constant 0 : i32
    %c0_i32_0 = arith.constant 0 : i32
    %c0_i32_1 = arith.constant 0 : i32
    return %c0_i32, %c0_i32_0 : i32, i32
  }
  func.func @transform_3(%arg0: i32) -> (i32, i32) {
    %c0_i32 = arith.constant 0 : i32
    %c0_i32_0 = arith.constant 0 : i32
    %c0_i32_1 = arith.constant 0 : i32
    return %c0_i32, %c0_i32_0 : i32, i32
  }
  func.func @transform_4(%arg0: i32) -> i32 {
    %c0_i32 = arith.constant 0 : i32
    %c0_i32_0 = arith.constant 0 : i32
    return %c0_i32 : i32
  }
  func.func @transform_5(%arg0: i32) -> (i32, i32) {
    %c0_i32 = arith.constant 0 : i32
    %c0_i32_0 = arith.constant 0 : i32
    %c0_i32_1 = arith.constant 0 : i32
    return %c0_i32, %c0_i32_0 : i32, i32
  }
  func.func @transform_6(%arg0: i32) -> (i32, i32) {
    %c0_i32 = arith.constant 0 : i32
    %c0_i32_0 = arith.constant 0 : i32
    %c0_i32_1 = arith.constant 0 : i32
    return %c0_i32, %c0_i32_0 : i32, i32
  }
  func.func @transform_7(%arg0: i32) -> (i32, i32) {
    %c0_i32 = arith.constant 0 : i32
    %c0_i32_0 = arith.constant 0 : i32
    return %arg0, %c0_i32 : i32, i32
  }
}

</mosaic_0001>

<llo_original>
// kernel: _lambda_.9
$region0: #{_lambda_.9}
  #allocation0 [shape = 'u32[]', space=smem, size = 0x4, offset = 0x4, fixed_abs, tag = 'smem constant byte address 0x4 - core index']
  #allocation1 [shape = 'u32[144,128]{1,0:T(1,128)}', space=vmem, size = 0x12000, scoped, tag = 'internal scratch']
  #allocation2 [shape = 'f32[1]{0:T(128)S(6)}', space=smem, size = 0x200, scoped, tag = 'scoped memory for _lambda_.9']
  %s0 = inlined_call_operand.vmem [shape: f32[128,8], index: 0, kind: input, shape index: {}]
  %s1 = inlined_call_operand.vmem [shape: f32[1,8], index: 1, kind: input, shape index: {}]
  %s2 = inlined_call_operand.vmem [shape: f32[1,8], index: 2, kind: input, shape index: {}]
  %s3 = inlined_call_operand.vmem [shape: f32[8,32], index: 3, kind: input, shape index: {}]
  %s4 = inlined_call_operand.<no memory space> [shape: f32[1], index: 4, kind: input, shape index: {}]
  %s5 = inlined_call_operand.vmem [shape: f32[128,32], index: 5, kind: output, shape index: {0}]
  %s6 = inlined_call_operand.vmem [shape: f32[2,32], index: 6, kind: output, shape index: {1}]
  %7 = xla_tuple %s5, %s6
  %s8 = sld [smem:[#allocation0]]
  $region42: #{_lambda_.9} parent=0
    _
  %s10 = ssub.s32 1, %s8
  %s11 = scalar_select 0, %s10, %s8
  %12 = sst [smem:[#allocation2]] %s4
  // Predicated region
  $region2: #{_lambda_.9} parent=0 // pred_check
    _
  $region3: #{_lambda_.9} parent=0 // pred_check_branch
    %14 = sbr.rel (0) target = $region5
  $region4: #{_lambda_.9} parent=0 // pred_region
    _
  $region5: #{_lambda_.9} parent=0 // pred_fallthru
    _
  // Predicated region
  $region6: #{_lambda_.9} parent=0 // pred_check
    _
  $region7: #{_lambda_.9} parent=0 // pred_check_branch
    %16 = sbr.rel (0) target = $region9
  $region8: #{_lambda_.9} parent=0 // pred_region
    _
  $region9: #{_lambda_.9} parent=0 // pred_fallthru
    _
  // Predicated region
  $region10: #{_lambda_.9} parent=0 // pred_check
    _
  $region11: #{_lambda_.9} parent=0 // pred_check_branch
    %18 = sbr.rel (0) target = $region13
  $region12: #{_lambda_.9} parent=0 // pred_region
    _
  $region13: #{_lambda_.9} parent=0 // pred_fallthru
    _
  // Predicated region
  $region14: #{_lambda_.9} parent=0 // pred_check
    _
  $region15: #{_lambda_.9} parent=0 // pred_check_branch
    %20 = sbr.rel (0) target = $region17
  $region16: #{_lambda_.9} parent=0 // pred_region
    _
  $region17: #{_lambda_.9} parent=0 // pred_fallthru
    _
  // Predicated region
  $region18: #{_lambda_.9} parent=0 // pred_check
    _
  $region19: #{_lambda_.9} parent=0 // pred_check_branch
    %22 = sbr.rel (0) target = $region21
  $region20: #{_lambda_.9} parent=0 // pred_region
    _
  $region21: #{_lambda_.9} parent=0 // pred_fallthru
    _
  %p23 = scmp.eq.s32.totalorder 0, 0
  // Predicated region
  $region22: #{_lambda_.9} parent=0 // pred_check
    %p24 = pneg %p23
  $region23: #{_lambda_.9} parent=0 // pred_check_branch
    %26 = sbr.rel (%p24) target = $region25
  $region24: #{_lambda_.9} parent=0 // pred_region
    %vm27 = vcmask 254976
    %28 = vst.msk [vmem:[%s6] sm:$0x3] %vm27, 0.0
  $region25: #{_lambda_.9} parent=0 // pred_fallthru
    _
  %s29 = sld [smem:[#allocation2]]
  %v30 = vld [vmem:[%s0] sm:$0xff]
  %v31 = vld [vmem:[%s0 + $0x8] sm:$0xff]
  %v32 = vld [vmem:[%s0 + $0x10] sm:$0xff]
  %v33 = vld [vmem:[%s0 + $0x18] sm:$0xff]
  %v34 = vld [vmem:[%s0 + $0x20] sm:$0xff]
  %v35 = vld [vmem:[%s0 + $0x28] sm:$0xff]
  %v36 = vld [vmem:[%s0 + $0x30] sm:$0xff]
  %v37 = vld [vmem:[%s0 + $0x38] sm:$0xff]
  %v38 = vld [vmem:[%s0 + $0x40] sm:$0xff]
  %v39 = vld [vmem:[%s0 + $0x48] sm:$0xff]
  %v40 = vld [vmem:[%s0 + $0x50] sm:$0xff]
  %v41 = vld [vmem:[%s0 + $0x58] sm:$0xff]
  %v42 = vld [vmem:[%s0 + $0x60] sm:$0xff]
  %v43 = vld [vmem:[%s0 + $0x68] sm:$0xff]
  %v44 = vld [vmem:[%s0 + $0x70] sm:$0xff]
  %v45 = vld [vmem:[%s0 + $0x78] sm:$0xff]
  %v46 = vld [vmem:[%s1] sm:$0x1]
  %v48 = vlaneseq
  %v49 = vshrl.u32 %v48, 7
  %v50 = vsub.s32 0, %v49
  %v51 = vrot.slane %v46, %v50
  %v53 = vmul.f32 %v30, %v51
  %v54 = vmul.f32 %v31, %v51
  %v55 = vmul.f32 %v32, %v51
  %v56 = vmul.f32 %v33, %v51
  %v57 = vmul.f32 %v34, %v51
  %v58 = vmul.f32 %v35, %v51
  %v59 = vmul.f32 %v36, %v51
  %v60 = vmul.f32 %v37, %v51
  %v61 = vmul.f32 %v38, %v51
  %v62 = vmul.f32 %v39, %v51
  %v63 = vmul.f32 %v40, %v51
  %v64 = vmul.f32 %v41, %v51
  %v65 = vmul.f32 %v42, %v51
  %v66 = vmul.f32 %v43, %v51
  %v67 = vmul.f32 %v44, %v51
  %v68 = vmul.f32 %v45, %v51
  %v69 = vld [vmem:[%s2] sm:$0x1]
  %v71 = vlaneseq
  %v72 = vshrl.u32 %v71, 7
  %v73 = vsub.s32 0, %v72
  %v74 = vrot.slane %v69, %v73
  %v76 = vadd.f32 %v53, %v74
  %v77 = vadd.f32 %v54, %v74
  %v78 = vadd.f32 %v55, %v74
  %v79 = vadd.f32 %v56, %v74
  %v80 = vadd.f32 %v57, %v74
  %v81 = vadd.f32 %v58, %v74
  %v82 = vadd.f32 %v59, %v74
  %v83 = vadd.f32 %v60, %v74
  %v84 = vadd.f32 %v61, %v74
  %v85 = vadd.f32 %v62, %v74
  %v86 = vadd.f32 %v63, %v74
  %v87 = vadd.f32 %v64, %v74
  %v88 = vadd.f32 %v65, %v74
  %v89 = vadd.f32 %v66, %v74
  %v90 = vadd.f32 %v67, %v74
  %v91 = vadd.f32 %v68, %v74
  %vm92 = vcmp.gt.f32.partialorder %v76, 0.0
  %vm93 = vcmp.gt.f32.partialorder %v77, 0.0
  %vm94 = vcmp.gt.f32.partialorder %v78, 0.0
  %vm95 = vcmp.gt.f32.partialorder %v79, 0.0
  %vm96 = vcmp.gt.f32.partialorder %v80, 0.0
  %vm97 = vcmp.gt.f32.partialorder %v81, 0.0
  %vm98 = vcmp.gt.f32.partialorder %v82, 0.0
  %vm99 = vcmp.gt.f32.partialorder %v83, 0.0
  %vm100 = vcmp.gt.f32.partialorder %v84, 0.0
  %vm101 = vcmp.gt.f32.partialorder %v85, 0.0
  %vm102 = vcmp.gt.f32.partialorder %v86, 0.0
  %vm103 = vcmp.gt.f32.partialorder %v87, 0.0
  %vm104 = vcmp.gt.f32.partialorder %v88, 0.0
  %vm105 = vcmp.gt.f32.partialorder %v89, 0.0
  %vm106 = vcmp.gt.f32.partialorder %v90, 0.0
  %vm107 = vcmp.gt.f32.partialorder %v91, 0.0
  %v108 = vstv %s29
  %v109 = vmul.f32 %v108, %v76
  %v110 = vmul.f32 %v108, %v77
  %v111 = vmul.f32 %v108, %v78
  %v112 = vmul.f32 %v108, %v79
  %v113 = vmul.f32 %v108, %v80
  %v114 = vmul.f32 %v108, %v81
  %v115 = vmul.f32 %v108, %v82
  %v116 = vmul.f32 %v108, %v83
  %v117 = vmul.f32 %v108, %v84
  %v118 = vmul.f32 %v108, %v85
  %v119 = vmul.f32 %v108, %v86
  %v120 = vmul.f32 %v108, %v87
  %v121 = vmul.f32 %v108, %v88
  %v122 = vmul.f32 %v108, %v89
  %v123 = vmul.f32 %v108, %v90
  %v124 = vmul.f32 %v108, %v91
  %v125 = vsel %vm92, %v76, %v109
  %v126 = vsel %vm93, %v77, %v110
  %v127 = vsel %vm94, %v78, %v111
  %v128 = vsel %vm95, %v79, %v112
  %v129 = vsel %vm96, %v80, %v113
  %v130 = vsel %vm97, %v81, %v114
  %v131 = vsel %vm98, %v82, %v115
  %v132 = vsel %vm99, %v83, %v116
  %v133 = vsel %vm100, %v84, %v117
  %v134 = vsel %vm101, %v85, %v118
  %v135 = vsel %vm102, %v86, %v119
  %v136 = vsel %vm103, %v87, %v120
  %v137 = vsel %vm104, %v88, %v121
  %v138 = vsel %vm105, %v89, %v122
  %v139 = vsel %vm106, %v90, %v123
  %v140 = vsel %vm107, %v91, %v124
  %v141 = vld [vmem:[%s3] sm:$0xff]
  %vm142 = vcmask 64512
  %v144 = vsel %vm142, %v125, 0
  %v147 = vsel %vm142, %v126, 0
  %v150 = vsel %vm142, %v127, 0
  %v153 = vsel %vm142, %v128, 0
  %v156 = vsel %vm142, %v129, 0
  %v159 = vsel %vm142, %v130, 0
  %v162 = vsel %vm142, %v131, 0
  %v165 = vsel %vm142, %v132, 0
  %v168 = vsel %vm142, %v133, 0
  %v171 = vsel %vm142, %v134, 0
  %v174 = vsel %vm142, %v135, 0
  %v177 = vsel %vm142, %v136, 0
  %v180 = vsel %vm142, %v137, 0
  %v183 = vsel %vm142, %v138, 0
  %v186 = vsel %vm142, %v139, 0
  %v189 = vsel %vm142, %v140, 0
  %191 = vmatprep.subr.mxu0 0.0
  %192 = vmatpush1.msra.mxu0 %v141
  %193 = vmatprep.subr.mxu0 0.0
  %194 = vmatpush1.msra.mxu0 0.0
  %195 = vmatprep.subr.mxu0 0.0
  %196 = vmatpush1.msra.mxu0 0.0
  %197 = vmatprep.subr.mxu0 0.0
  %198 = vmatpush1.msra.mxu0 0.0
  %199 = vmatprep.subr.mxu0 0.0
  %200 = vmatpush1.msra.mxu0 0.0
  %201 = vmatprep.subr.mxu0 0.0
  %202 = vmatpush1.msra.mxu0 0.0
  %203 = vmatprep.subr.mxu0 0.0
  %204 = vmatpush1.msra.mxu0 0.0
  %205 = vmatprep.subr.mxu0 0.0
  %206 = vmatpush1.msra.mxu0 0.0
  %207 = vmatprep.subr.mxu0 0.0
  %208 = vmatpush1.msra.mxu0 0.0
  %209 = vmatprep.subr.mxu0 0.0
  %210 = vmatpush1.msra.mxu0 0.0
  %211 = vmatprep.subr.mxu0 0.0
  %212 = vmatpush1.msra.mxu0 0.0
  %213 = vmatprep.subr.mxu0 0.0
  %214 = vmatpush1.msra.mxu0 0.0
  %215 = vmatprep.subr.mxu0 0.0
  %216 = vmatpush1.msra.mxu0 0.0
  %217 = vmatprep.subr.mxu0 0.0
  %218 = vmatpush1.msra.mxu0 0.0
  %219 = vmatprep.subr.mxu0 0.0
  %220 = vmatpush1.msra.mxu0 0.0
  %221 = vmatprep.subr.mxu0 0.0
  %222 = vmatpush1.msra.mxu0 0.0
  %223 = vmatprep.subr.mxu0 0.0
  %224 = vmatpush1.msra.mxu0 0.0
  %225 = vmatprep.subr.mxu0 0.0
  %226 = vmatpush1.msra.mxu0 0.0
  %227 = vmatprep.subr.mxu0 0.0
  %228 = vmatpush1.msra.mxu0 0.0
  %229 = vmatprep.subr.mxu0 0.0
  %230 = vmatpush1.msra.mxu0 0.0
  %231 = vmatprep.subr.mxu0 0.0
  %232 = vmatpush1.msra.mxu0 0.0
  %233 = vmatprep.subr.mxu0 0.0
  %234 = vmatpush1.msra.mxu0 0.0
  %235 = vmatprep.subr.mxu0 0.0
  %236 = vmatpush1.msra.mxu0 0.0
  %237 = vmatprep.subr.mxu0 0.0
  %238 = vmatpush1.msra.mxu0 0.0
  %239 = vmatprep.subr.mxu0 0.0
  %240 = vmatpush1.msra.mxu0 0.0
  %241 = vmatprep.subr.mxu0 0.0
  %242 = vmatpush1.msra.mxu0 0.0
  %243 = vmatprep.subr.mxu0 0.0
  %244 = vmatpush1.msra.mxu0 0.0
  %245 = vmatprep.subr.mxu0 0.0
  %246 = vmatpush1.msra.mxu0 0.0
  %247 = vmatprep.subr.mxu0 0.0
  %248 = vmatpush1.msra.mxu0 0.0
  %249 = vmatprep.subr.mxu0 0.0
  %250 = vmatpush1.msra.mxu0 0.0
  %251 = vmatprep.subr.mxu0 0.0
  %252 = vmatpush1.msra.mxu0 0.0
  %253 = vmatprep.subr.mxu0 0.0
  %254 = vmatpush1.msra.mxu0 0.0
  %255 = vmatprep.mubr.f32.mxu0 0.0
  %256 = vmatmul.mubr.f32.gmra.mrb[0].mxu0 %v144
  %v257 = vpop.f32.mrb[0].mxu0
  %v258 = vadd.f32 0.0, %v257
  %v259 = vpop.f32.mrb[0].mxu0
  %260 = vmatprep.mubr.f32.mxu0 0.0
  %261 = vmatmul.mubr.f32.gmra.mrb[0].mxu0 %v147
  %v262 = vpop.f32.mrb[0].mxu0
  %v263 = vadd.f32 0.0, %v262
  %v264 = vpop.f32.mrb[0].mxu0
  %265 = vmatprep.mubr.f32.mxu0 0.0
  %266 = vmatmul.mubr.f32.gmra.mrb[0].mxu0 %v150
  %v267 = vpop.f32.mrb[0].mxu0
  %v268 = vadd.f32 0.0, %v267
  %v269 = vpop.f32.mrb[0].mxu0
  %270 = vmatprep.mubr.f32.mxu0 0.0
  %271 = vmatmul.mubr.f32.gmra.mrb[0].mxu0 %v153
  %v272 = vpop.f32.mrb[0].mxu0
  %v273 = vadd.f32 0.0, %v272
  %v274 = vpop.f32.mrb[0].mxu0
  %275 = vmatprep.mubr.f32.mxu0 0.0
  %276 = vmatmul.mubr.f32.gmra.mrb[0].mxu0 %v156
  %v277 = vpop.f32.mrb[0].mxu0
  %v278 = vadd.f32 0.0, %v277
  %v279 = vpop.f32.mrb[0].mxu0
  %280 = vmatprep.mubr.f32.mxu0 0.0
  %281 = vmatmul.mubr.f32.gmra.mrb[0].mxu0 %v159
  %v282 = vpop.f32.mrb[0].mxu0
  %v283 = vadd.f32 0.0, %v282
  %v284 = vpop.f32.mrb[0].mxu0
  %285 = vmatprep.mubr.f32.mxu0 0.0
  %286 = vmatmul.mubr.f32.gmra.mrb[0].mxu0 %v162
  %v287 = vpop.f32.mrb[0].mxu0
  %v288 = vadd.f32 0.0, %v287
  %v289 = vpop.f32.mrb[0].mxu0
  %290 = vmatprep.mubr.f32.mxu0 0.0
  %291 = vmatmul.mubr.f32.gmra.mrb[0].mxu0 %v165
  %v292 = vpop.f32.mrb[0].mxu0
  %v293 = vadd.f32 0.0, %v292
  %v294 = vpop.f32.mrb[0].mxu0
  %295 = vmatprep.mubr.f32.mxu0 0.0
  %296 = vmatmul.mubr.f32.gmra.mrb[0].mxu0 %v168
  %v297 = vpop.f32.mrb[0].mxu0
  %v298 = vadd.f32 0.0, %v297
  %v299 = vpop.f32.mrb[0].mxu0
  %300 = vmatprep.mubr.f32.mxu0 0.0
  %301 = vmatmul.mubr.f32.gmra.mrb[0].mxu0 %v171
  %v302 = vpop.f32.mrb[0].mxu0
  %v303 = vadd.f32 0.0, %v302
  %v304 = vpop.f32.mrb[0].mxu0
  %305 = vmatprep.mubr.f32.mxu0 0.0
  %306 = vmatmul.mubr.f32.gmra.mrb[0].mxu0 %v174
  %v307 = vpop.f32.mrb[0].mxu0
  %v308 = vadd.f32 0.0, %v307
  %v309 = vpop.f32.mrb[0].mxu0
  %310 = vmatprep.mubr.f32.mxu0 0.0
  %311 = vmatmul.mubr.f32.gmra.mrb[0].mxu0 %v177
  %v312 = vpop.f32.mrb[0].mxu0
  %v313 = vadd.f32 0.0, %v312
  %v314 = vpop.f32.mrb[0].mxu0
  %315 = vmatprep.mubr.f32.mxu0 0.0
  %316 = vmatmul.mubr.f32.gmra.mrb[0].mxu0 %v180
  %v317 = vpop.f32.mrb[0].mxu0
  %v318 = vadd.f32 0.0, %v317
  %v319 = vpop.f32.mrb[0].mxu0
  %320 = vmatprep.mubr.f32.mxu0 0.0
  %321 = vmatmul.mubr.f32.gmra.mrb[0].mxu0 %v183
  %v322 = vpop.f32.mrb[0].mxu0
  %v323 = vadd.f32 0.0, %v322
  %v324 = vpop.f32.mrb[0].mxu0
  %325 = vmatprep.mubr.f32.mxu0 0.0
  %326 = vmatmul.mubr.f32.gmra.mrb[0].mxu0 %v186
  %v327 = vpop.f32.mrb[0].mxu0
  %v328 = vadd.f32 0.0, %v327
  %v329 = vpop.f32.mrb[0].mxu0
  %330 = vmatprep.mubr.f32.mxu0 0.0
  %331 = vmatmul.mubr.f32.gmra.mrb[0].mxu0 %v189
  %v332 = vpop.f32.mrb[0].mxu0
  %v333 = vadd.f32 0.0, %v332
  %v334 = vpop.f32.mrb[0].mxu0
  %335 = vdwg.mxu0
  %vm336 = vcmask 261120
  %337 = vst.msk [vmem:[%s5] sm:$0xff] %vm336, %v258
  %338 = vst.msk [vmem:[%s5 + $0x8] sm:$0xff] %vm336, %v263
  %339 = vst.msk [vmem:[%s5 + $0x10] sm:$0xff] %vm336, %v268
  %340 = vst.msk [vmem:[%s5 + $0x18] sm:$0xff] %vm336, %v273
  %341 = vst.msk [vmem:[%s5 + $0x20] sm:$0xff] %vm336, %v278
  %342 = vst.msk [vmem:[%s5 + $0x28] sm:$0xff] %vm336, %v283
  %343 = vst.msk [vmem:[%s5 + $0x30] sm:$0xff] %vm336, %v288
  %344 = vst.msk [vmem:[%s5 + $0x38] sm:$0xff] %vm336, %v293
  %345 = vst.msk [vmem:[%s5 + $0x40] sm:$0xff] %vm336, %v298
  %346 = vst.msk [vmem:[%s5 + $0x48] sm:$0xff] %vm336, %v303
  %347 = vst.msk [vmem:[%s5 + $0x50] sm:$0xff] %vm336, %v308
  %348 = vst.msk [vmem:[%s5 + $0x58] sm:$0xff] %vm336, %v313
  %349 = vst.msk [vmem:[%s5 + $0x60] sm:$0xff] %vm336, %v318
  %350 = vst.msk [vmem:[%s5 + $0x68] sm:$0xff] %vm336, %v323
  %351 = vst.msk [vmem:[%s5 + $0x70] sm:$0xff] %vm336, %v328
  %352 = vst.msk [vmem:[%s5 + $0x78] sm:$0xff] %vm336, %v333
  %v353 = vld [vmem:[%s6] sm:$0x3]
  %v354 = vsel %vm336, %v258, 0.0
  %v355 = vsel %vm336, %v263, 0.0
  %v356 = vadd.f32 %v354, %v355
  %v357 = vsel %vm336, %v268, 0.0
  %v358 = vadd.f32 %v356, %v357
  %v359 = vsel %vm336, %v273, 0.0
  %v360 = vadd.f32 %v358, %v359
  %v361 = vsel %vm336, %v278, 0.0
  %v362 = vadd.f32 %v360, %v361
  %v363 = vsel %vm336, %v283, 0.0
  %v364 = vadd.f32 %v362, %v363
  %v365 = vsel %vm336, %v288, 0.0
  %v366 = vadd.f32 %v364, %v365
  %v367 = vsel %vm336, %v293, 0.0
  %v368 = vadd.f32 %v366, %v367
  %v369 = vsel %vm336, %v298, 0.0
  %v370 = vadd.f32 %v368, %v369
  %v371 = vsel %vm336, %v303, 0.0
  %v372 = vadd.f32 %v370, %v371
  %v373 = vsel %vm336, %v308, 0.0
  %v374 = vadd.f32 %v372, %v373
  %v375 = vsel %vm336, %v313, 0.0
  %v376 = vadd.f32 %v374, %v375
  %v377 = vsel %vm336, %v318, 0.0
  %v378 = vadd.f32 %v376, %v377
  %v379 = vsel %vm336, %v323, 0.0
  %v380 = vadd.f32 %v378, %v379
  %v381 = vsel %vm336, %v328, 0.0
  %v382 = vadd.f32 %v380, %v381
  %v383 = vsel %vm336, %v333, 0.0
  %v384 = vadd.f32 %v382, %v383
  %v385 = vrot.slane %v384, 4
  %v386 = vadd.f32 %v384, %v385
  %v387 = vrot.slane %v386, 2
  %v388 = vadd.f32 %v386, %v387
  %v389 = vrot.slane %v388, 1
  %v390 = vadd.f32 %v388, %v389
  %v391 = vmul.f32 %v258, %v258
  %v392 = vmul.f32 %v263, %v263
  %v393 = vmul.f32 %v268, %v268
  %v394 = vmul.f32 %v273, %v273
  %v395 = vmul.f32 %v278, %v278
  %v396 = vmul.f32 %v283, %v283
  %v397 = vmul.f32 %v288, %v288
  %v398 = vmul.f32 %v293, %v293
  %v399 = vmul.f32 %v298, %v298
  %v400 = vmul.f32 %v303, %v303
  %v401 = vmul.f32 %v308, %v308
  %v402 = vmul.f32 %v313, %v313
  %v403 = vmul.f32 %v318, %v318
  %v404 = vmul.f32 %v323, %v323
  %v405 = vmul.f32 %v328, %v328
  %v406 = vmul.f32 %v333, %v333
  %v407 = vsel %vm336, %v391, 0.0
  %v408 = vsel %vm336, %v392, 0.0
  %v409 = vadd.f32 %v407, %v408
  %v410 = vsel %vm336, %v393, 0.0
  %v411 = vadd.f32 %v409, %v410
  %v412 = vsel %vm336, %v394, 0.0
  %v413 = vadd.f32 %v411, %v412
  %v414 = vsel %vm336, %v395, 0.0
  %v415 = vadd.f32 %v413, %v414
  %v416 = vsel %vm336, %v396, 0.0
  %v417 = vadd.f32 %v415, %v416
  %v418 = vsel %vm336, %v397, 0.0
  %v419 = vadd.f32 %v417, %v418
  %v420 = vsel %vm336, %v398, 0.0
  %v421 = vadd.f32 %v419, %v420
  %v422 = vsel %vm336, %v399, 0.0
  %v423 = vadd.f32 %v421, %v422
  %v424 = vsel %vm336, %v400, 0.0
  %v425 = vadd.f32 %v423, %v424
  %v426 = vsel %vm336, %v401, 0.0
  %v427 = vadd.f32 %v425, %v426
  %v428 = vsel %vm336, %v402, 0.0
  %v429 = vadd.f32 %v427, %v428
  %v430 = vsel %vm336, %v403, 0.0
  %v431 = vadd.f32 %v429, %v430
  %v432 = vsel %vm336, %v404, 0.0
  %v433 = vadd.f32 %v431, %v432
  %v434 = vsel %vm336, %v405, 0.0
  %v435 = vadd.f32 %v433, %v434
  %v436 = vsel %vm336, %v406, 0.0
  %v437 = vadd.f32 %v435, %v436
  %v438 = vrot.slane %v437, 4
  %v439 = vadd.f32 %v437, %v438
  %v440 = vrot.slane %v439, 2
  %v441 = vadd.f32 %v439, %v440
  %v442 = vrot.slane %v441, 1
  %v443 = vadd.f32 %v441, %v442
  %vm444 = vcmask 1040384
  %v445 = vsel %vm444, %v390, %v443
  %v446 = vadd.f32 %v353, %v445
  %vm447 = vcmask 254976
  %448 = vst.msk [vmem:[%s6] sm:$0x3] %vm447, %v446
  // Predicated region
  $region26: #{_lambda_.9} parent=0 // pred_check
    _
  $region27: #{_lambda_.9} parent=0 // pred_check_branch
    %450 = sbr.rel (0) target = $region29
  $region28: #{_lambda_.9} parent=0 // pred_region
    _
  $region29: #{_lambda_.9} parent=0 // pred_fallthru
    _
  // Predicated region
  $region30: #{_lambda_.9} parent=0 // pred_check
    _
  $region31: #{_lambda_.9} parent=0 // pred_check_branch
    %452 = sbr.rel (0) target = $region33
  $region32: #{_lambda_.9} parent=0 // pred_region
    _
  $region33: #{_lambda_.9} parent=0 // pred_fallthru
    _
  // Predicated region
  $region34: #{_lambda_.9} parent=0 // pred_check
    _
  $region35: #{_lambda_.9} parent=0 // pred_check_branch
    %454 = sbr.rel (0) target = $region37
  $region36: #{_lambda_.9} parent=0 // pred_region
    _
  $region37: #{_lambda_.9} parent=0 // pred_fallthru
    _
  // Predicated region
  $region38: #{_lambda_.9} parent=0 // pred_check
    _
  $region39: #{_lambda_.9} parent=0 // pred_check_branch
    %456 = sbr.rel (0) target = $region41
  $region40: #{_lambda_.9} parent=0 // pred_region
    _
  $region41: #{_lambda_.9} parent=0 // pred_fallthru
    _

// kernel: _lambda_.7
$region0: #{_lambda_.7}
  #allocation0 [shape = 'u32[]', space=smem, size = 0x4, offset = 0x4, fixed_abs, tag = 'smem constant byte address 0x4 - core index']
  #allocation1 [shape = 'u32[144,128]{1,0:T(1,128)}', space=vmem, size = 0x12000, scoped, tag = 'internal scratch']
  %s0 = inlined_call_operand.hbm [shape: f32[128,16], index: 0, kind: input, shape index: {}]
  %s1 = inlined_call_operand.vmem [shape: f32[16,8], index: 1, kind: input, shape index: {}]
  %s2 = inlined_call_operand.vmem [shape: f32[16,32], index: 2, kind: input, shape index: {}]
  %s3 = inlined_call_operand.vmem [shape: f32[128,8], index: 3, kind: output, shape index: {0}]
  %s4 = inlined_call_operand.vmem [shape: f32[128,32], index: 4, kind: output, shape index: {1}]
  %s5 = inlined_call_operand.vmem [shape: f32[2,8], index: 5, kind: output, shape index: {2}]
  %s6 = inlined_call_operand.vmem [shape: f32[2,32], index: 6, kind: output, shape index: {3}]
  %7 = xla_tuple %s3, %s4, %s5, %s6
  %s8 = sld [smem:[#allocation0]]
  $region54: #{_lambda_.7} parent=0
    _
  %s10 = ssub.s32 1, %s8
  %s11 = scalar_select 0, %s10, %s8
  $region1: #{_lambda_.7} parent=0
    #allocation2 [shape = 'u8[65536]{0}', space=vmem, size = 0x10000, scoped, tag = 'input window, operand 0, single buffered']
    #allocation3 [shape = 's32[1]{0}', space=sflag, size = 0x4, scoped, tag = 'scoped memory for _lambda_.7']
    %12 = vsyncpa [#allocation3], 0
    // Predicated region
    $region2: #{_lambda_.7} parent=1 // pred_check
      _
    $region3: #{_lambda_.7} parent=1 // pred_check_branch
      %14 = sbr.rel (0) target = $region5
    $region4: #{_lambda_.7} parent=1 // pred_region
      %s16 = ssub.s32 2048, 2048
      %17 = vsyncadd [#allocation3], %s16
      %s18 = sshll.u32 [#allocation2], 4
      %s19 = int_to_ptr.vmem [resolvable:$true] %s18
      %24 = dma.hbm_to_vmem [thread:$0]  %s0, 2048, %s19, [#allocation3], 128, 128, 8
    $region5: #{_lambda_.7} parent=1 // pred_fallthru
      _
    // Predicated region
    $region6: #{_lambda_.7} parent=1 // pred_check
      _
    $region7: #{_lambda_.7} parent=1 // pred_check_branch
      %26 = sbr.rel (0) target = $region9
    $region8: #{_lambda_.7} parent=1 // pred_region
      _
    $region9: #{_lambda_.7} parent=1 // pred_fallthru
      _
    // Predicated region
    $region10: #{_lambda_.7} parent=1 // pred_check
      _
    $region11: #{_lambda_.7} parent=1 // pred_check_branch
      %28 = sbr.rel (0) target = $region13
    $region12: #{_lambda_.7} parent=1 // pred_region
      _
    $region13: #{_lambda_.7} parent=1 // pred_fallthru
      _
    // Predicated region
    $region14: #{_lambda_.7} parent=1 // pred_check
      _
    $region15: #{_lambda_.7} parent=1 // pred_check_branch
      %30 = sbr.rel (0) target = $region17
    $region16: #{_lambda_.7} parent=1 // pred_region
      %31 = dma.done [#allocation3], 2048
    $region17: #{_lambda_.7} parent=1 // pred_fallthru
      _
    %p32 = scmp.eq.s32.totalorder 0, 0
    // Predicated region
    $region18: #{_lambda_.7} parent=1 // pred_check
      %p33 = pneg %p32
    $region19: #{_lambda_.7} parent=1 // pred_check_branch
      %35 = sbr.rel (%p33) target = $region21
    $region20: #{_lambda_.7} parent=1 // pred_region
      %vm36 = vcmask 58368
      %37 = vst.msk [vmem:[%s5] sm:$0x3] %vm36, 0.0
      %vm38 = vcmask 254976
      %39 = vst.msk [vmem:[%s6] sm:$0x3] %vm38, 0.0
    $region21: #{_lambda_.7} parent=1 // pred_fallthru
      _
    %v40 = vld [vmem:[#allocation2] sm:$0xff]
    %v41 = vld [vmem:[#allocation2 + $0x8] sm:$0xff]
    %v42 = vld [vmem:[#allocation2 + $0x10] sm:$0xff]
    %v43 = vld [vmem:[#allocation2 + $0x18] sm:$0xff]
    %v44 = vld [vmem:[#allocation2 + $0x20] sm:$0xff]
    %v45 = vld [vmem:[#allocation2 + $0x28] sm:$0xff]
    %v46 = vld [vmem:[#allocation2 + $0x30] sm:$0xff]
    %v47 = vld [vmem:[#allocation2 + $0x38] sm:$0xff]
    %v48 = vld [vmem:[#allocation2 + $0x40] sm:$0xff]
    %v49 = vld [vmem:[#allocation2 + $0x48] sm:$0xff]
    %v50 = vld [vmem:[#allocation2 + $0x50] sm:$0xff]
    %v51 = vld [vmem:[#allocation2 + $0x58] sm:$0xff]
    %v52 = vld [vmem:[#allocation2 + $0x60] sm:$0xff]
    %v53 = vld [vmem:[#allocation2 + $0x68] sm:$0xff]
    %v54 = vld [vmem:[#allocation2 + $0x70] sm:$0xff]
    %v55 = vld [vmem:[#allocation2 + $0x78] sm:$0xff]
    %v56 = vld [vmem:[%s1] sm:$0xff]
    %v57 = vld [vmem:[%s1 + $0x8] sm:$0xff]
    %vm58 = vcmask 130048
    %v60 = vsel %vm58, %v40, 0
    %v63 = vsel %vm58, %v41, 0
    %v66 = vsel %vm58, %v42, 0
    %v69 = vsel %vm58, %v43, 0
    %v72 = vsel %vm58, %v44, 0
    %v75 = vsel %vm58, %v45, 0
    %v78 = vsel %vm58, %v46, 0
    %v81 = vsel %vm58, %v47, 0
    %v84 = vsel %vm58, %v48, 0
    %v87 = vsel %vm58, %v49, 0
    %v90 = vsel %vm58, %v50, 0
    %v93 = vsel %vm58, %v51, 0
    %v96 = vsel %vm58, %v52, 0
    %v99 = vsel %vm58, %v53, 0
    %v102 = vsel %vm58, %v54, 0
    %v105 = vsel %vm58, %v55, 0
    %107 = vmatprep.subr.mxu0 0.0
    %108 = vmatpush1.msra.mxu0 %v56
    %109 = vmatprep.subr.mxu0 0.0
    %110 = vmatpush1.msra.mxu0 %v57
    %111 = vmatprep.subr.mxu0 0.0
    %112 = vmatpush1.msra.mxu0 0.0
    %113 = vmatprep.subr.mxu0 0.0
    %114 = vmatpush1.msra.mxu0 0.0
    %115 = vmatprep.subr.mxu0 0.0
    %116 = vmatpush1.msra.mxu0 0.0
    %117 = vmatprep.subr.mxu0 0.0
    %118 = vmatpush1.msra.mxu0 0.0
    %119 = vmatprep.subr.mxu0 0.0
    %120 = vmatpush1.msra.mxu0 0.0
    %121 = vmatprep.subr.mxu0 0.0
    %122 = vmatpush1.msra.mxu0 0.0
    %123 = vmatprep.subr.mxu0 0.0
    %124 = vmatpush1.msra.mxu0 0.0
    %125 = vmatprep.subr.mxu0 0.0
    %126 = vmatpush1.msra.mxu0 0.0
    %127 = vmatprep.subr.mxu0 0.0
    %128 = vmatpush1.msra.mxu0 0.0
    %129 = vmatprep.subr.mxu0 0.0
    %130 = vmatpush1.msra.mxu0 0.0
    %131 = vmatprep.subr.mxu0 0.0
    %132 = vmatpush1.msra.mxu0 0.0
    %133 = vmatprep.subr.mxu0 0.0
    %134 = vmatpush1.msra.mxu0 0.0
    %135 = vmatprep.subr.mxu0 0.0
    %136 = vmatpush1.msra.mxu0 0.0
    %137 = vmatprep.subr.mxu0 0.0
    %138 = vmatpush1.msra.mxu0 0.0
    %139 = vmatprep.subr.mxu0 0.0
    %140 = vmatpush1.msra.mxu0 0.0
    %141 = vmatprep.subr.mxu0 0.0
    %142 = vmatpush1.msra.mxu0 0.0
    %143 = vmatprep.subr.mxu0 0.0
    %144 = vmatpush1.msra.mxu0 0.0
    %145 = vmatprep.subr.mxu0 0.0
    %146 = vmatpush1.msra.mxu0 0.0
    %147 = vmatprep.subr.mxu0 0.0
    %148 = vmatpush1.msra.mxu0 0.0
    %149 = vmatprep.subr.mxu0 0.0
    %150 = vmatpush1.msra.mxu0 0.0
    %151 = vmatprep.subr.mxu0 0.0
    %152 = vmatpush1.msra.mxu0 0.0
    %153 = vmatprep.subr.mxu0 0.0
    %154 = vmatpush1.msra.mxu0 0.0
    %155 = vmatprep.subr.mxu0 0.0
    %156 = vmatpush1.msra.mxu0 0.0
    %157 = vmatprep.subr.mxu0 0.0
    %158 = vmatpush1.msra.mxu0 0.0
    %159 = vmatprep.subr.mxu0 0.0
    %160 = vmatpush1.msra.mxu0 0.0
    %161 = vmatprep.subr.mxu0 0.0
    %162 = vmatpush1.msra.mxu0 0.0
    %163 = vmatprep.subr.mxu0 0.0
    %164 = vmatpush1.msra.mxu0 0.0
    %165 = vmatprep.subr.mxu0 0.0
    %166 = vmatpush1.msra.mxu0 0.0
    %167 = vmatprep.subr.mxu0 0.0
    %168 = vmatpush1.msra.mxu0 0.0
    %169 = vmatprep.subr.mxu0 0.0
    %170 = vmatpush1.msra.mxu0 0.0
    %171 = vmatprep.mubr.f32.mxu0 0.0
    %172 = vmatmul.mubr.f32.gmra.mrb[0].mxu0 %v60
    %v173 = vpop.f32.mrb[0].mxu0
    %v174 = vadd.f32 0.0, %v173
    %v175 = vpop.f32.mrb[0].mxu0
    %176 = vmatprep.mubr.f32.mxu0 0.0
    %177 = vmatmul.mubr.f32.gmra.mrb[0].mxu0 %v63
    %v178 = vpop.f32.mrb[0].mxu0
    %v179 = vadd.f32 0.0, %v178
    %v180 = vpop.f32.mrb[0].mxu0
    %181 = vmatprep.mubr.f32.mxu0 0.0
    %182 = vmatmul.mubr.f32.gmra.mrb[0].mxu0 %v66
    %v183 = vpop.f32.mrb[0].mxu0
    %v184 = vadd.f32 0.0, %v183
    %v185 = vpop.f32.mrb[0].mxu0
    %186 = vmatprep.mubr.f32.mxu0 0.0
    %187 = vmatmul.mubr.f32.gmra.mrb[0].mxu0 %v69
    %v188 = vpop.f32.mrb[0].mxu0
    %v189 = vadd.f32 0.0, %v188
    %v190 = vpop.f32.mrb[0].mxu0
    %191 = vmatprep.mubr.f32.mxu0 0.0
    %192 = vmatmul.mubr.f32.gmra.mrb[0].mxu0 %v72
    %v193 = vpop.f32.mrb[0].mxu0
    %v194 = vadd.f32 0.0, %v193
    %v195 = vpop.f32.mrb[0].mxu0
    %196 = vmatprep.mubr.f32.mxu0 0.0
    %197 = vmatmul.mubr.f32.gmra.mrb[0].mxu0 %v75
    %v198 = vpop.f32.mrb[0].mxu0
    %v199 = vadd.f32 0.0, %v198
    %v200 = vpop.f32.mrb[0].mxu0
    %201 = vmatprep.mubr.f32.mxu0 0.0
    %202 = vmatmul.mubr.f32.gmra.mrb[0].mxu0 %v78
    %v203 = vpop.f32.mrb[0].mxu0
    %v204 = vadd.f32 0.0, %v203
    %v205 = vpop.f32.mrb[0].mxu0
    %206 = vmatprep.mubr.f32.mxu0 0.0
    %207 = vmatmul.mubr.f32.gmra.mrb[0].mxu0 %v81
    %v208 = vpop.f32.mrb[0].mxu0
    %v209 = vadd.f32 0.0, %v208
    %v210 = vpop.f32.mrb[0].mxu0
    %211 = vmatprep.mubr.f32.mxu0 0.0
    %212 = vmatmul.mubr.f32.gmra.mrb[0].mxu0 %v84
    %v213 = vpop.f32.mrb[0].mxu0
    %v214 = vadd.f32 0.0, %v213
    %v215 = vpop.f32.mrb[0].mxu0
    %216 = vmatprep.mubr.f32.mxu0 0.0
    %217 = vmatmul.mubr.f32.gmra.mrb[0].mxu0 %v87
    %v218 = vpop.f32.mrb[0].mxu0
    %v219 = vadd.f32 0.0, %v218
    %v220 = vpop.f32.mrb[0].mxu0
    %221 = vmatprep.mubr.f32.mxu0 0.0
    %222 = vmatmul.mubr.f32.gmra.mrb[0].mxu0 %v90
    %v223 = vpop.f32.mrb[0].mxu0
    %v224 = vadd.f32 0.0, %v223
    %v225 = vpop.f32.mrb[0].mxu0
    %226 = vmatprep.mubr.f32.mxu0 0.0
    %227 = vmatmul.mubr.f32.gmra.mrb[0].mxu0 %v93
    %v228 = vpop.f32.mrb[0].mxu0
    %v229 = vadd.f32 0.0, %v228
    %v230 = vpop.f32.mrb[0].mxu0
    %231 = vmatprep.mubr.f32.mxu0 0.0
    %232 = vmatmul.mubr.f32.gmra.mrb[0].mxu0 %v96
    %v233 = vpop.f32.mrb[0].mxu0
    %v234 = vadd.f32 0.0, %v233
    %v235 = vpop.f32.mrb[0].mxu0
    %236 = vmatprep.mubr.f32.mxu0 0.0
    %237 = vmatmul.mubr.f32.gmra.mrb[0].mxu0 %v99
    %v238 = vpop.f32.mrb[0].mxu0
    %v239 = vadd.f32 0.0, %v238
    %v240 = vpop.f32.mrb[0].mxu0
    %241 = vmatprep.mubr.f32.mxu0 0.0
    %242 = vmatmul.mubr.f32.gmra.mrb[0].mxu0 %v102
    %v243 = vpop.f32.mrb[0].mxu0
    %v244 = vadd.f32 0.0, %v243
    %v245 = vpop.f32.mrb[0].mxu0
    %246 = vmatprep.mubr.f32.mxu0 0.0
    %247 = vmatmul.mubr.f32.gmra.mrb[0].mxu0 %v105
    %v248 = vpop.f32.mrb[0].mxu0
    %v249 = vadd.f32 0.0, %v248
    %v250 = vpop.f32.mrb[0].mxu0
    %251 = vdwg.mxu0
    %vm252 = vcmask 64512
    %253 = vst.msk [vmem:[%s3] sm:$0xff] %vm252, %v174
    %254 = vst.msk [vmem:[%s3 + $0x8] sm:$0xff] %vm252, %v179
    %255 = vst.msk [vmem:[%s3 + $0x10] sm:$0xff] %vm252, %v184
    %256 = vst.msk [vmem:[%s3 + $0x18] sm:$0xff] %vm252, %v189
    %257 = vst.msk [vmem:[%s3 + $0x20] sm:$0xff] %vm252, %v194
    %258 = vst.msk [vmem:[%s3 + $0x28] sm:$0xff] %vm252, %v199
    %259 = vst.msk [vmem:[%s3 + $0x30] sm:$0xff] %vm252, %v204
    %260 = vst.msk [vmem:[%s3 + $0x38] sm:$0xff] %vm252, %v209
    %261 = vst.msk [vmem:[%s3 + $0x40] sm:$0xff] %vm252, %v214
    %262 = vst.msk [vmem:[%s3 + $0x48] sm:$0xff] %vm252, %v219
    %263 = vst.msk [vmem:[%s3 + $0x50] sm:$0xff] %vm252, %v224
    %264 = vst.msk [vmem:[%s3 + $0x58] sm:$0xff] %vm252, %v229
    %265 = vst.msk [vmem:[%s3 + $0x60] sm:$0xff] %vm252, %v234
    %266 = vst.msk [vmem:[%s3 + $0x68] sm:$0xff] %vm252, %v239
    %267 = vst.msk [vmem:[%s3 + $0x70] sm:$0xff] %vm252, %v244
    %268 = vst.msk [vmem:[%s3 + $0x78] sm:$0xff] %vm252, %v249
    %v269 = vld [vmem:[%s5] sm:$0x3]
    %v270 = vsel %vm252, %v174, 0.0
    %v271 = vsel %vm252, %v179, 0.0
    %v272 = vadd.f32 %v270, %v271
    %v273 = vsel %vm252, %v184, 0.0
    %v274 = vadd.f32 %v272, %v273
    %v275 = vsel %vm252, %v189, 0.0
    %v276 = vadd.f32 %v274, %v275
    %v277 = vsel %vm252, %v194, 0.0
    %v278 = vadd.f32 %v276, %v277
    %v279 = vsel %vm252, %v199, 0.0
    %v280 = vadd.f32 %v278, %v279
    %v281 = vsel %vm252, %v204, 0.0
    %v282 = vadd.f32 %v280, %v281
    %v283 = vsel %vm252, %v209, 0.0
    %v284 = vadd.f32 %v282, %v283
    %v285 = vsel %vm252, %v214, 0.0
    %v286 = vadd.f32 %v284, %v285
    %v287 = vsel %vm252, %v219, 0.0
    %v288 = vadd.f32 %v286, %v287
    %v289 = vsel %vm252, %v224, 0.0
    %v290 = vadd.f32 %v288, %v289
    %v291 = vsel %vm252, %v229, 0.0
    %v292 = vadd.f32 %v290, %v291
    %v293 = vsel %vm252, %v234, 0.0
    %v294 = vadd.f32 %v292, %v293
    %v295 = vsel %vm252, %v239, 0.0
    %v296 = vadd.f32 %v294, %v295
    %v297 = vsel %vm252, %v244, 0.0
    %v298 = vadd.f32 %v296, %v297
    %v299 = vsel %vm252, %v249, 0.0
    %v300 = vadd.f32 %v298, %v299
    %v301 = vrot.slane %v300, 4
    %v302 = vadd.f32 %v300, %v301
    %v303 = vrot.slane %v302, 2
    %v304 = vadd.f32 %v302, %v303
    %v305 = vrot.slane %v304, 1
    %v306 = vadd.f32 %v304, %v305
    %v307 = vmul.f32 %v174, %v174
    %v308 = vmul.f32 %v179, %v179
    %v309 = vmul.f32 %v184, %v184
    %v310 = vmul.f32 %v189, %v189
    %v311 = vmul.f32 %v194, %v194
    %v312 = vmul.f32 %v199, %v199
    %v313 = vmul.f32 %v204, %v204
    %v314 = vmul.f32 %v209, %v209
    %v315 = vmul.f32 %v214, %v214
    %v316 = vmul.f32 %v219, %v219
    %v317 = vmul.f32 %v224, %v224
    %v318 = vmul.f32 %v229, %v229
    %v319 = vmul.f32 %v234, %v234
    %v320 = vmul.f32 %v239, %v239
    %v321 = vmul.f32 %v244, %v244
    %v322 = vmul.f32 %v249, %v249
    %v323 = vsel %vm252, %v307, 0.0
    %v324 = vsel %vm252, %v308, 0.0
    %v325 = vadd.f32 %v323, %v324
    %v326 = vsel %vm252, %v309, 0.0
    %v327 = vadd.f32 %v325, %v326
    %v328 = vsel %vm252, %v310, 0.0
    %v329 = vadd.f32 %v327, %v328
    %v330 = vsel %vm252, %v311, 0.0
    %v331 = vadd.f32 %v329, %v330
    %v332 = vsel %vm252, %v312, 0.0
    %v333 = vadd.f32 %v331, %v332
    %v334 = vsel %vm252, %v313, 0.0
    %v335 = vadd.f32 %v333, %v334
    %v336 = vsel %vm252, %v314, 0.0
    %v337 = vadd.f32 %v335, %v336
    %v338 = vsel %vm252, %v315, 0.0
    %v339 = vadd.f32 %v337, %v338
    %v340 = vsel %vm252, %v316, 0.0
    %v341 = vadd.f32 %v339, %v340
    %v342 = vsel %vm252, %v317, 0.0
    %v343 = vadd.f32 %v341, %v342
    %v344 = vsel %vm252, %v318, 0.0
    %v345 = vadd.f32 %v343, %v344
    %v346 = vsel %vm252, %v319, 0.0
    %v347 = vadd.f32 %v345, %v346
    %v348 = vsel %vm252, %v320, 0.0
    %v349 = vadd.f32 %v347, %v348
    %v350 = vsel %vm252, %v321, 0.0
    %v351 = vadd.f32 %v349, %v350
    %v352 = vsel %vm252, %v322, 0.0
    %v353 = vadd.f32 %v351, %v352
    %v354 = vrot.slane %v353, 4
    %v355 = vadd.f32 %v353, %v354
    %v356 = vrot.slane %v355, 2
    %v357 = vadd.f32 %v355, %v356
    %v358 = vrot.slane %v357, 1
    %v359 = vadd.f32 %v357, %v358
    %vm360 = vcmask 1040384
    %v361 = vsel %vm360, %v306, %v359
    %v362 = vadd.f32 %v269, %v361
    %vm363 = vcmask 58368
    %364 = vst.msk [vmem:[%s5] sm:$0x3] %vm363, %v362
    %v365 = vld [vmem:[%s2] sm:$0xff]
    %v366 = vld [vmem:[%s2 + $0x8] sm:$0xff]
    %367 = vmatprep.subr.mxu0 0.0
    %368 = vmatpush1.msra.mxu0 %v365
    %369 = vmatprep.subr.mxu0 0.0
    %370 = vmatpush1.msra.mxu0 %v366
    %371 = vmatprep.subr.mxu0 0.0
    %372 = vmatpush1.msra.mxu0 0.0
    %373 = vmatprep.subr.mxu0 0.0
    %374 = vmatpush1.msra.mxu0 0.0
    %375 = vmatprep.subr.mxu0 0.0
    %376 = vmatpush1.msra.mxu0 0.0
    %377 = vmatprep.subr.mxu0 0.0
    %378 = vmatpush1.msra.mxu0 0.0
    %379 = vmatprep.subr.mxu0 0.0
    %380 = vmatpush1.msra.mxu0 0.0
    %381 = vmatprep.subr.mxu0 0.0
    %382 = vmatpush1.msra.mxu0 0.0
    %383 = vmatprep.subr.mxu0 0.0
    %384 = vmatpush1.msra.mxu0 0.0
    %385 = vmatprep.subr.mxu0 0.0
    %386 = vmatpush1.msra.mxu0 0.0
    %387 = vmatprep.subr.mxu0 0.0
    %388 = vmatpush1.msra.mxu0 0.0
    %389 = vmatprep.subr.mxu0 0.0
    %390 = vmatpush1.msra.mxu0 0.0
    %391 = vmatprep.subr.mxu0 0.0
    %392 = vmatpush1.msra.mxu0 0.0
    %393 = vmatprep.subr.mxu0 0.0
    %394 = vmatpush1.msra.mxu0 0.0
    %395 = vmatprep.subr.mxu0 0.0
    %396 = vmatpush1.msra.mxu0 0.0
    %397 = vmatprep.subr.mxu0 0.0
    %398 = vmatpush1.msra.mxu0 0.0
    %399 = vmatprep.subr.mxu0 0.0
    %400 = vmatpush1.msra.mxu0 0.0
    %401 = vmatprep.subr.mxu0 0.0
    %402 = vmatpush1.msra.mxu0 0.0
    %403 = vmatprep.subr.mxu0 0.0
    %404 = vmatpush1.msra.mxu0 0.0
    %405 = vmatprep.subr.mxu0 0.0
    %406 = vmatpush1.msra.mxu0 0.0
    %407 = vmatprep.subr.mxu0 0.0
    %408 = vmatpush1.msra.mxu0 0.0
    %409 = vmatprep.subr.mxu0 0.0
    %410 = vmatpush1.msra.mxu0 0.0
    %411 = vmatprep.subr.mxu0 0.0
    %412 = vmatpush1.msra.mxu0 0.0
    %413 = vmatprep.subr.mxu0 0.0
    %414 = vmatpush1.msra.mxu0 0.0
    %415 = vmatprep.subr.mxu0 0.0
    %416 = vmatpush1.msra.mxu0 0.0
    %417 = vmatprep.subr.mxu0 0.0
    %418 = vmatpush1.msra.mxu0 0.0
    %419 = vmatprep.subr.mxu0 0.0
    %420 = vmatpush1.msra.mxu0 0.0
    %421 = vmatprep.subr.mxu0 0.0
    %422 = vmatpush1.msra.mxu0 0.0
    %423 = vmatprep.subr.mxu0 0.0
    %424 = vmatpush1.msra.mxu0 0.0
    %425 = vmatprep.subr.mxu0 0.0
    %426 = vmatpush1.msra.mxu0 0.0
    %427 = vmatprep.subr.mxu0 0.0
    %428 = vmatpush1.msra.mxu0 0.0
    %429 = vmatprep.subr.mxu0 0.0
    %430 = vmatpush1.msra.mxu0 0.0
    %431 = vmatprep.mubr.f32.mxu0 0.0
    %432 = vmatmul.mubr.f32.gmra.mrb[0].mxu0 %v60
    %v433 = vpop.f32.mrb[0].mxu0
    %v434 = vadd.f32 0.0, %v433
    %v435 = vpop.f32.mrb[0].mxu0
    %436 = vmatprep.mubr.f32.mxu0 0.0
    %437 = vmatmul.mubr.f32.gmra.mrb[0].mxu0 %v63
    %v438 = vpop.f32.mrb[0].mxu0
    %v439 = vadd.f32 0.0, %v438
    %v440 = vpop.f32.mrb[0].mxu0
    %441 = vmatprep.mubr.f32.mxu0 0.0
    %442 = vmatmul.mubr.f32.gmra.mrb[0].mxu0 %v66
    %v443 = vpop.f32.mrb[0].mxu0
    %v444 = vadd.f32 0.0, %v443
    %v445 = vpop.f32.mrb[0].mxu0
    %446 = vmatprep.mubr.f32.mxu0 0.0
    %447 = vmatmul.mubr.f32.gmra.mrb[0].mxu0 %v69
    %v448 = vpop.f32.mrb[0].mxu0
    %v449 = vadd.f32 0.0, %v448
    %v450 = vpop.f32.mrb[0].mxu0
    %451 = vmatprep.mubr.f32.mxu0 0.0
    %452 = vmatmul.mubr.f32.gmra.mrb[0].mxu0 %v72
    %v453 = vpop.f32.mrb[0].mxu0
    %v454 = vadd.f32 0.0, %v453
    %v455 = vpop.f32.mrb[0].mxu0
    %456 = vmatprep.mubr.f32.mxu0 0.0
    %457 = vmatmul.mubr.f32.gmra.mrb[0].mxu0 %v75
    %v458 = vpop.f32.mrb[0].mxu0
    %v459 = vadd.f32 0.0, %v458
    %v460 = vpop.f32.mrb[0].mxu0
    %461 = vmatprep.mubr.f32.mxu0 0.0
    %462 = vmatmul.mubr.f32.gmra.mrb[0].mxu0 %v78
    %v463 = vpop.f32.mrb[0].mxu0
    %v464 = vadd.f32 0.0, %v463
    %v465 = vpop.f32.mrb[0].mxu0
    %466 = vmatprep.mubr.f32.mxu0 0.0
    %467 = vmatmul.mubr.f32.gmra.mrb[0].mxu0 %v81
    %v468 = vpop.f32.mrb[0].mxu0
    %v469 = vadd.f32 0.0, %v468
    %v470 = vpop.f32.mrb[0].mxu0
    %471 = vmatprep.mubr.f32.mxu0 0.0
    %472 = vmatmul.mubr.f32.gmra.mrb[0].mxu0 %v84
    %v473 = vpop.f32.mrb[0].mxu0
    %v474 = vadd.f32 0.0, %v473
    %v475 = vpop.f32.mrb[0].mxu0
    %476 = vmatprep.mubr.f32.mxu0 0.0
    %477 = vmatmul.mubr.f32.gmra.mrb[0].mxu0 %v87
    %v478 = vpop.f32.mrb[0].mxu0
    %v479 = vadd.f32 0.0, %v478
    %v480 = vpop.f32.mrb[0].mxu0
    %481 = vmatprep.mubr.f32.mxu0 0.0
    %482 = vmatmul.mubr.f32.gmra.mrb[0].mxu0 %v90
    %v483 = vpop.f32.mrb[0].mxu0
    %v484 = vadd.f32 0.0, %v483
    %v485 = vpop.f32.mrb[0].mxu0
    %486 = vmatprep.mubr.f32.mxu0 0.0
    %487 = vmatmul.mubr.f32.gmra.mrb[0].mxu0 %v93
    %v488 = vpop.f32.mrb[0].mxu0
    %v489 = vadd.f32 0.0, %v488
    %v490 = vpop.f32.mrb[0].mxu0
    %491 = vmatprep.mubr.f32.mxu0 0.0
    %492 = vmatmul.mubr.f32.gmra.mrb[0].mxu0 %v96
    %v493 = vpop.f32.mrb[0].mxu0
    %v494 = vadd.f32 0.0, %v493
    %v495 = vpop.f32.mrb[0].mxu0
    %496 = vmatprep.mubr.f32.mxu0 0.0
    %497 = vmatmul.mubr.f32.gmra.mrb[0].mxu0 %v99
    %v498 = vpop.f32.mrb[0].mxu0
    %v499 = vadd.f32 0.0, %v498
    %v500 = vpop.f32.mrb[0].mxu0
    %501 = vmatprep.mubr.f32.mxu0 0.0
    %502 = vmatmul.mubr.f32.gmra.mrb[0].mxu0 %v102
    %v503 = vpop.f32.mrb[0].mxu0
    %v504 = vadd.f32 0.0, %v503
    %v505 = vpop.f32.mrb[0].mxu0
    %506 = vmatprep.mubr.f32.mxu0 0.0
    %507 = vmatmul.mubr.f32.gmra.mrb[0].mxu0 %v105
    %v508 = vpop.f32.mrb[0].mxu0
    %v509 = vadd.f32 0.0, %v508
    %v510 = vpop.f32.mrb[0].mxu0
    %511 = vdwg.mxu0
    %vm512 = vcmask 261120
    %513 = vst.msk [vmem:[%s4] sm:$0xff] %vm512, %v434
    %514 = vst.msk [vmem:[%s4 + $0x8] sm:$0xff] %vm512, %v439
    %515 = vst.msk [vmem:[%s4 + $0x10] sm:$0xff] %vm512, %v444
    %516 = vst.msk [vmem:[%s4 + $0x18] sm:$0xff] %vm512, %v449
    %517 = vst.msk [vmem:[%s4 + $0x20] sm:$0xff] %vm512, %v454
    %518 = vst.msk [vmem:[%s4 + $0x28] sm:$0xff] %vm512, %v459
    %519 = vst.msk [vmem:[%s4 + $0x30] sm:$0xff] %vm512, %v464
    %520 = vst.msk [vmem:[%s4 + $0x38] sm:$0xff] %vm512, %v469
    %521 = vst.msk [vmem:[%s4 + $0x40] sm:$0xff] %vm512, %v474
    %522 = vst.msk [vmem:[%s4 + $0x48] sm:$0xff] %vm512, %v479
    %523 = vst.msk [vmem:[%s4 + $0x50] sm:$0xff] %vm512, %v484
    %524 = vst.msk [vmem:[%s4 + $0x58] sm:$0xff] %vm512, %v489
    %525 = vst.msk [vmem:[%s4 + $0x60] sm:$0xff] %vm512, %v494
    %526 = vst.msk [vmem:[%s4 + $0x68] sm:$0xff] %vm512, %v499
    %527 = vst.msk [vmem:[%s4 + $0x70] sm:$0xff] %vm512, %v504
    %528 = vst.msk [vmem:[%s4 + $0x78] sm:$0xff] %vm512, %v509
    %v529 = vld [vmem:[%s6] sm:$0x3]
    %v530 = vsel %vm512, %v434, 0.0
    %v531 = vsel %vm512, %v439, 0.0
    %v532 = vadd.f32 %v530, %v531
    %v533 = vsel %vm512, %v444, 0.0
    %v534 = vadd.f32 %v532, %v533
    %v535 = vsel %vm512, %v449, 0.0
    %v536 = vadd.f32 %v534, %v535
    %v537 = vsel %vm512, %v454, 0.0
    %v538 = vadd.f32 %v536, %v537
    %v539 = vsel %vm512, %v459, 0.0
    %v540 = vadd.f32 %v538, %v539
    %v541 = vsel %vm512, %v464, 0.0
    %v542 = vadd.f32 %v540, %v541
    %v543 = vsel %vm512, %v469, 0.0
    %v544 = vadd.f32 %v542, %v543
    %v545 = vsel %vm512, %v474, 0.0
    %v546 = vadd.f32 %v544, %v545
    %v547 = vsel %vm512, %v479, 0.0
    %v548 = vadd.f32 %v546, %v547
    %v549 = vsel %vm512, %v484, 0.0
    %v550 = vadd.f32 %v548, %v549
    %v551 = vsel %vm512, %v489, 0.0
    %v552 = vadd.f32 %v550, %v551
    %v553 = vsel %vm512, %v494, 0.0
    %v554 = vadd.f32 %v552, %v553
    %v555 = vsel %vm512, %v499, 0.0
    %v556 = vadd.f32 %v554, %v555
    %v557 = vsel %vm512, %v504, 0.0
    %v558 = vadd.f32 %v556, %v557
    %v559 = vsel %vm512, %v509, 0.0
    %v560 = vadd.f32 %v558, %v559
    %v561 = vrot.slane %v560, 4
    %v562 = vadd.f32 %v560, %v561
    %v563 = vrot.slane %v562, 2
    %v564 = vadd.f32 %v562, %v563
    %v565 = vrot.slane %v564, 1
    %v566 = vadd.f32 %v564, %v565
    %v567 = vmul.f32 %v434, %v434
    %v568 = vmul.f32 %v439, %v439
    %v569 = vmul.f32 %v444, %v444
    %v570 = vmul.f32 %v449, %v449
    %v571 = vmul.f32 %v454, %v454
    %v572 = vmul.f32 %v459, %v459
    %v573 = vmul.f32 %v464, %v464
    %v574 = vmul.f32 %v469, %v469
    %v575 = vmul.f32 %v474, %v474
    %v576 = vmul.f32 %v479, %v479
    %v577 = vmul.f32 %v484, %v484
    %v578 = vmul.f32 %v489, %v489
    %v579 = vmul.f32 %v494, %v494
    %v580 = vmul.f32 %v499, %v499
    %v581 = vmul.f32 %v504, %v504
    %v582 = vmul.f32 %v509, %v509
    %v583 = vsel %vm512, %v567, 0.0
    %v584 = vsel %vm512, %v568, 0.0
    %v585 = vadd.f32 %v583, %v584
    %v586 = vsel %vm512, %v569, 0.0
    %v587 = vadd.f32 %v585, %v586
    %v588 = vsel %vm512, %v570, 0.0
    %v589 = vadd.f32 %v587, %v588
    %v590 = vsel %vm512, %v571, 0.0
    %v591 = vadd.f32 %v589, %v590
    %v592 = vsel %vm512, %v572, 0.0
    %v593 = vadd.f32 %v591, %v592
    %v594 = vsel %vm512, %v573, 0.0
    %v595 = vadd.f32 %v593, %v594
    %v596 = vsel %vm512, %v574, 0.0
    %v597 = vadd.f32 %v595, %v596
    %v598 = vsel %vm512, %v575, 0.0
    %v599 = vadd.f32 %v597, %v598
    %v600 = vsel %vm512, %v576, 0.0
    %v601 = vadd.f32 %v599, %v600
    %v602 = vsel %vm512, %v577, 0.0
    %v603 = vadd.f32 %v601, %v602
    %v604 = vsel %vm512, %v578, 0.0
    %v605 = vadd.f32 %v603, %v604
    %v606 = vsel %vm512, %v579, 0.0
    %v607 = vadd.f32 %v605, %v606
    %v608 = vsel %vm512, %v580, 0.0
    %v609 = vadd.f32 %v607, %v608
    %v610 = vsel %vm512, %v581, 0.0
    %v611 = vadd.f32 %v609, %v610
    %v612 = vsel %vm512, %v582, 0.0
    %v613 = vadd.f32 %v611, %v612
    %v614 = vrot.slane %v613, 4
    %v615 = vadd.f32 %v613, %v614
    %v616 = vrot.slane %v615, 2
    %v617 = vadd.f32 %v615, %v616
    %v618 = vrot.slane %v617, 1
    %v619 = vadd.f32 %v617, %v618
    %v620 = vsel %vm360, %v566, %v619
    %v621 = vadd.f32 %v529, %v620
    %vm622 = vcmask 254976
    %623 = vst.msk [vmem:[%s6] sm:$0x3] %vm622, %v621
    // Predicated region
    $region22: #{_lambda_.7} parent=1 // pred_check
      _
    $region23: #{_lambda_.7} parent=1 // pred_check_branch
      %625 = sbr.rel (0) target = $region25
    $region24: #{_lambda_.7} parent=1 // pred_region
      _
    $region25: #{_lambda_.7} parent=1 // pred_fallthru
      _
    // Predicated region
    $region26: #{_lambda_.7} parent=1 // pred_check
      _
    $region27: #{_lambda_.7} parent=1 // pred_check_branch
      %627 = sbr.rel (0) target = $region29
    $region28: #{_lambda_.7} parent=1 // pred_region
      _
    $region29: #{_lambda_.7} parent=1 // pred_fallthru
      _
    // Predicated region
    $region30: #{_lambda_.7} parent=1 // pred_check
      _
    $region31: #{_lambda_.7} parent=1 // pred_check_branch
      %629 = sbr.rel (0) target = $region33
    $region32: #{_lambda_.7} parent=1 // pred_region
      _
    $region33: #{_lambda_.7} parent=1 // pred_fallthru
      _
    // Predicated region
    $region34: #{_lambda_.7} parent=1 // pred_check
      _
    $region35: #{_lambda_.7} parent=1 // pred_check_branch
      %631 = sbr.rel (0) target = $region37
    $region36: #{_lambda_.7} parent=1 // pred_region
      _
    $region37: #{_lambda_.7} parent=1 // pred_fallthru
      _
    // Predicated region
    $region38: #{_lambda_.7} parent=1 // pred_check
      _
    $region39: #{_lambda_.7} parent=1 // pred_check_branch
      %633 = sbr.rel (0) target = $region41
    $region40: #{_lambda_.7} parent=1 // pred_region
      _
    $region41: #{_lambda_.7} parent=1 // pred_fallthru
      _
    // Predicated region
    $region42: #{_lambda_.7} parent=1 // pred_check
      _
    $region43: #{_lambda_.7} parent=1 // pred_check_branch
      %635 = sbr.rel (0) target = $region45
    $region44: #{_lambda_.7} parent=1 // pred_region
      _
    $region45: #{_lambda_.7} parent=1 // pred_fallthru
      _
    // Predicated region
    $region46: #{_lambda_.7} parent=1 // pred_check
      _
    $region47: #{_lambda_.7} parent=1 // pred_check_branch
      %637 = sbr.rel (0) target = $region49
    $region48: #{_lambda_.7} parent=1 // pred_region
      _
    $region49: #{_lambda_.7} parent=1 // pred_fallthru
      _
    // Predicated region
    $region50: #{_lambda_.7} parent=1 // pred_check
      _
    $region51: #{_lambda_.7} parent=1 // pred_check_branch
      %639 = sbr.rel (0) target = $region53
    $region52: #{_lambda_.7} parent=1 // pred_region
      _
    $region53: #{_lambda_.7} parent=1 // pred_fallthru
      _
    %640 = vsyncpa [#allocation3], 1

// kernel: _lambda_.8
$region0: #{_lambda_.8}
  #allocation0 [shape = 'u32[]', space=smem, size = 0x4, offset = 0x4, fixed_abs, tag = 'smem constant byte address 0x4 - core index']
  #allocation1 [shape = 'u32[144,128]{1,0:T(1,128)}', space=vmem, size = 0x12000, scoped, tag = 'internal scratch']
  #allocation2 [shape = 'f32[1]{0:T(128)S(6)}', space=smem, size = 0x200, scoped, tag = 'scoped memory for _lambda_.8']
  %s0 = inlined_call_operand.vmem [shape: f32[2,8,8,8], index: 0, kind: input, shape index: {}]
  %s1 = inlined_call_operand.vmem [shape: f32[1,8], index: 1, kind: input, shape index: {}]
  %s2 = inlined_call_operand.vmem [shape: f32[1,8], index: 2, kind: input, shape index: {}]
  %s3 = inlined_call_operand.vmem [shape: f32[72,8], index: 3, kind: input, shape index: {}]
  %s4 = inlined_call_operand.<no memory space> [shape: f32[1], index: 4, kind: input, shape index: {}]
  %s5 = inlined_call_operand.vmem [shape: f32[2,64,8], index: 5, kind: output, shape index: {0}]
  %s6 = inlined_call_operand.vmem [shape: f32[2,8], index: 6, kind: output, shape index: {1}]
  %7 = xla_tuple %s5, %s6
  %s8 = sld [smem:[#allocation0]]
  $region65: #{_lambda_.8} parent=0
    _
  %s10 = ssub.s32 1, %s8
  %s11 = scalar_select 0, %s10, %s8
  %12 = sst [smem:[#allocation2]] %s4
  loop: start=0, step=1, limit=4
  $region2: #{_lambda_.8} parent=0 // loop_pre_header
    _
  $region3: #{_lambda_.8} parent=0 // loop_header
    %s14 = sphi 0, %s18
    %p15 = scmp.ge.s32.totalorder %s14, 4
    %s24 = sphi 0, %s26
    %s27 = sphi 0, %s24
    %s28 = sphi 0, %s27
    %s44 = sphi 0, %s28
    %s48 = sphi 0, %s48
    %s50 = sphi 0, %s48
    %s51 = sphi 0, %s50
    %s65 = sphi 0, %s51
    %s69 = sphi 0, %s69
    %s71 = sphi 0, %s69
    %s72 = sphi 0, %s71
    %s86 = sphi 0, %s72
    %s90 = sphi 0, %s90
    %s92 = sphi 0, %s90
    %s93 = sphi 0, %s92
    %s107 = sphi 0, %s93
    %s111 = sphi 0, %s111
    %s113 = sphi 0, %s111
    %s114 = sphi 0, %s113
    %s128 = sphi 0, %s114
    %s134 = sphi 0, %s136
    %s137 = sphi 0, %s134
    %s138 = sphi 0, %s137
    %s154 = sphi 0, %s138
    %s158 = sphi 0, %s158
    %s160 = sphi 0, %s158
    %s161 = sphi 0, %s160
    %s175 = sphi 0, %s161
  $region4: #{_lambda_.8} parent=0 // loop_header_branch
    %17 = sbr.rel (%p15) target = $region8
  $region5: #{_lambda_.8} parent=0 // loop_body
    %s19 = ssub.s32 %s14, 1
    %s20 = ssub.s32 %s14, 2
    %s21 = sadd.s32 %s14, 1
    %s22 = ssub.s32 %s14, %s21
    %p23 = scmp.eq.s32.totalorder %s22, 0
    %s25 = sadd.s32 %s24, 1
    %s26 = scalar_select %p23, %s24, %s25
    %p29 = pneg %p23
    %p30 = scmp.eq.s32.totalorder %s14, 1
    %p31 = por %p29, %p30
    %p32 = scmp.ne.s32.totalorder %s24, %s27
    %p33 = scmp.eq.s32.totalorder %s14, 0
    %p34 = por %p32, %p33
    %p35 = scmp.ne.s32.totalorder %s24, %s27
    %p36 = scmp.eq.s32.totalorder %s19, 1
    %p37 = por %p35, %p36
    %p38 = scmp.ne.s32.totalorder %s27, %s28
    %p39 = scmp.eq.s32.totalorder %s19, 0
    %p40 = por %p38, %p39
    %p41 = scmp.ne.s32.totalorder %s27, %s28
    %p42 = scmp.eq.s32.totalorder %s20, 1
    %p43 = por %p41, %p42
    %p45 = scmp.ne.s32.totalorder %s28, %s44
    %p46 = scmp.eq.s32.totalorder %s20, 0
    %p47 = por %p45, %p46
    %s49 = sadd.s32 %s48, 1
    %p52 = scmp.eq.s32.totalorder %s14, 1
    %p53 = scmp.ne.s32.totalorder %s48, %s50
    %p54 = scmp.eq.s32.totalorder %s14, 0
    %p55 = por %p53, %p54
    %p56 = scmp.ne.s32.totalorder %s48, %s50
    %p57 = scmp.eq.s32.totalorder %s19, 1
    %p58 = por %p56, %p57
    %p59 = scmp.ne.s32.totalorder %s50, %s51
    %p60 = scmp.eq.s32.totalorder %s19, 0
    %p61 = por %p59, %p60
    %p62 = scmp.ne.s32.totalorder %s50, %s51
    %p63 = scmp.eq.s32.totalorder %s20, 1
    %p64 = por %p62, %p63
    %p66 = scmp.ne.s32.totalorder %s51, %s65
    %p67 = scmp.eq.s32.totalorder %s20, 0
    %p68 = por %p66, %p67
    %s70 = sadd.s32 %s69, 1
    %p73 = scmp.eq.s32.totalorder %s14, 1
    %p74 = scmp.ne.s32.totalorder %s69, %s71
    %p75 = scmp.eq.s32.totalorder %s14, 0
    %p76 = por %p74, %p75
    %p77 = scmp.ne.s32.totalorder %s69, %s71
    %p78 = scmp.eq.s32.totalorder %s19, 1
    %p79 = por %p77, %p78
    %p80 = scmp.ne.s32.totalorder %s71, %s72
    %p81 = scmp.eq.s32.totalorder %s19, 0
    %p82 = por %p80, %p81
    %p83 = scmp.ne.s32.totalorder %s71, %s72
    %p84 = scmp.eq.s32.totalorder %s20, 1
    %p85 = por %p83, %p84
    %p87 = scmp.ne.s32.totalorder %s72, %s86
    %p88 = scmp.eq.s32.totalorder %s20, 0
    %p89 = por %p87, %p88
    %s91 = sadd.s32 %s90, 1
    %p94 = scmp.eq.s32.totalorder %s14, 1
    %p95 = scmp.ne.s32.totalorder %s90, %s92
    %p96 = scmp.eq.s32.totalorder %s14, 0
    %p97 = por %p95, %p96
    %p98 = scmp.ne.s32.totalorder %s90, %s92
    %p99 = scmp.eq.s32.totalorder %s19, 1
    %p100 = por %p98, %p99
    %p101 = scmp.ne.s32.totalorder %s92, %s93
    %p102 = scmp.eq.s32.totalorder %s19, 0
    %p103 = por %p101, %p102
    %p104 = scmp.ne.s32.totalorder %s92, %s93
    %p105 = scmp.eq.s32.totalorder %s20, 1
    %p106 = por %p104, %p105
    %p108 = scmp.ne.s32.totalorder %s93, %s107
    %p109 = scmp.eq.s32.totalorder %s20, 0
    %p110 = por %p108, %p109
    %s112 = sadd.s32 %s111, 1
    %p115 = scmp.eq.s32.totalorder %s14, 1
    %p116 = scmp.ne.s32.totalorder %s111, %s113
    %p117 = scmp.eq.s32.totalorder %s14, 0
    %p118 = por %p116, %p117
    %p119 = scmp.ne.s32.totalorder %s111, %s113
    %p120 = scmp.eq.s32.totalorder %s19, 1
    %p121 = por %p119, %p120
    %p122 = scmp.ne.s32.totalorder %s113, %s114
    %p123 = scmp.eq.s32.totalorder %s19, 0
    %p124 = por %p122, %p123
    %p125 = scmp.ne.s32.totalorder %s113, %s114
    %p126 = scmp.eq.s32.totalorder %s20, 1
    %p127 = por %p125, %p126
    %p129 = scmp.ne.s32.totalorder %s114, %s128
    %p130 = scmp.eq.s32.totalorder %s20, 0
    %p131 = por %p129, %p130
    %s132 = ssub.s32 %s14, %s21
    %p133 = scmp.eq.s32.totalorder %s132, 0
    %s135 = sadd.s32 %s134, 1
    %s136 = scalar_select %p133, %s134, %s135
    %p139 = pneg %p133
    %p140 = scmp.eq.s32.totalorder %s14, 1
    %p141 = por %p139, %p140
    %p142 = scmp.ne.s32.totalorder %s134, %s137
    %p143 = scmp.eq.s32.totalorder %s14, 0
    %p144 = por %p142, %p143
    %p145 = scmp.ne.s32.totalorder %s134, %s137
    %p146 = scmp.eq.s32.totalorder %s19, 1
    %p147 = por %p145, %p146
    %p148 = scmp.ne.s32.totalorder %s137, %s138
    %p149 = scmp.eq.s32.totalorder %s19, 0
    %p150 = por %p148, %p149
    %p151 = scmp.ne.s32.totalorder %s137, %s138
    %p152 = scmp.eq.s32.totalorder %s20, 1
    %p153 = por %p151, %p152
    %p155 = scmp.ne.s32.totalorder %s138, %s154
    %p156 = scmp.eq.s32.totalorder %s20, 0
    %p157 = por %p155, %p156
    %s159 = sadd.s32 %s158, 1
    %p162 = scmp.eq.s32.totalorder %s14, 1
    %p163 = scmp.ne.s32.totalorder %s158, %s160
    %p164 = scmp.eq.s32.totalorder %s14, 0
    %p165 = por %p163, %p164
    %p166 = scmp.ne.s32.totalorder %s158, %s160
    %p167 = scmp.eq.s32.totalorder %s19, 1
    %p168 = por %p166, %p167
    %p169 = scmp.ne.s32.totalorder %s160, %s161
    %p170 = scmp.eq.s32.totalorder %s19, 0
    %p171 = por %p169, %p170
    %p172 = scmp.ne.s32.totalorder %s160, %s161
    %p173 = scmp.eq.s32.totalorder %s20, 1
    %p174 = por %p172, %p173
    %p176 = scmp.ne.s32.totalorder %s161, %s175
    %p177 = scmp.eq.s32.totalorder %s20, 0
    %p178 = por %p176, %p177
    %p179 = scmp.le.s32.totalorder 1, %s14
    %p180 = scmp.lt.s32.totalorder %s14, 3
    %p181 = pnand %p179, %p180
    %p182 = pneg %p181
    // Predicated region
    $region9: #{_lambda_.8} parent=5 // pred_check
      _
    $region10: #{_lambda_.8} parent=5 // pred_check_branch
      %184 = sbr.rel (%p181) target = $region12
    $region11: #{_lambda_.8} parent=5 // pred_region
      %s185 = ssub.s32 %s14, 1
      // Predicated region
      $region13: #{_lambda_.8} parent=11 // pred_check
        %p186 = pneg %p61
      $region14: #{_lambda_.8} parent=11 // pred_check_branch
        %188 = sbr.rel (%p186) target = $region16
      $region15: #{_lambda_.8} parent=11 // pred_region
        _
      $region16: #{_lambda_.8} parent=11 // pred_fallthru
        _
      // Predicated region
      $region17: #{_lambda_.8} parent=11 // pred_check
        %p189 = pneg %p82
      $region18: #{_lambda_.8} parent=11 // pred_check_branch
        %191 = sbr.rel (%p189) target = $region20
      $region19: #{_lambda_.8} parent=11 // pred_region
        _
      $region20: #{_lambda_.8} parent=11 // pred_fallthru
        _
      // Predicated region
      $region21: #{_lambda_.8} parent=11 // pred_check
        %p192 = pneg %p103
      $region22: #{_lambda_.8} parent=11 // pred_check_branch
        %194 = sbr.rel (%p192) target = $region24
      $region23: #{_lambda_.8} parent=11 // pred_region
        _
      $region24: #{_lambda_.8} parent=11 // pred_fallthru
        _
      // Predicated region
      $region25: #{_lambda_.8} parent=11 // pred_check
        %p195 = pneg %p124
      $region26: #{_lambda_.8} parent=11 // pred_check_branch
        %197 = sbr.rel (%p195) target = $region28
      $region27: #{_lambda_.8} parent=11 // pred_region
        _
      $region28: #{_lambda_.8} parent=11 // pred_fallthru
        _
    $region12: #{_lambda_.8} parent=5 // pred_fallthru
      _
    %p198 = scmp.lt.s32.totalorder %s14, 2
    // Predicated region
    $region29: #{_lambda_.8} parent=5 // pred_check
      %p199 = pneg %p198
    $region30: #{_lambda_.8} parent=5 // pred_check_branch
      %201 = sbr.rel (%p199) target = $region32
    $region31: #{_lambda_.8} parent=5 // pred_region
      // Predicated region
      $region33: #{_lambda_.8} parent=31 // pred_check
        %p202 = pneg %p34
      $region34: #{_lambda_.8} parent=31 // pred_check_branch
        %204 = sbr.rel (%p202) target = $region36
      $region35: #{_lambda_.8} parent=31 // pred_region
        %p205 = scmp.lt.s32.totalorder %s14, 1
        %s206 = scalar_select %p205, %s14, 1
        %s207 = smul.addr %s206, 8
        %s208 = smul.addr %s207, 8
        %s209 = scalar_lea.vmem %s0, %s208
      $region36: #{_lambda_.8} parent=31 // pred_fallthru
        _
    $region32: #{_lambda_.8} parent=5 // pred_fallthru
      _
    %p210 = scmp.le.s32.totalorder 1, %s14
    %p211 = scmp.lt.s32.totalorder %s14, 3
    %p212 = pnand %p210, %p211
    %p213 = pneg %p212
    // Predicated region
    $region37: #{_lambda_.8} parent=5 // pred_check
      _
    $region38: #{_lambda_.8} parent=5 // pred_check_branch
      %215 = sbr.rel (%p212) target = $region40
    $region39: #{_lambda_.8} parent=5 // pred_region
      %s216 = ssub.s32 %s14, 1
      %p217 = scmp.lt.s32.totalorder %s19, 1
      %s218 = scalar_select %p217, %s19, 1
      %s219 = smul.addr %s218, 8
      %s220 = smul.addr %s219, 8
      %s221 = scalar_lea.vmem %s0, %s220
      %p222 = pneg %p40
      %p223 = pneg %p37
      %p224 = pneg %p61
      %p225 = pneg %p58
      %p226 = pneg %p82
      %p227 = pneg %p79
      %p228 = pneg %p103
      %p229 = pneg %p100
      %p230 = pneg %p124
      %p231 = pneg %p121
      %p232 = pneg %p150
      %p233 = pneg %p147
      %p234 = scmp.lt.s32.totalorder %s19, 1
      %s235 = scalar_select %p234, %s19, 1
      %s236 = smul.addr %s235, 8
      %s237 = smul.addr %s236, 8
      %s238 = scalar_lea.vmem %s5, %s237
      %p239 = pneg %p171
      %p240 = pneg %p168
      %p241 = scmp.lt.s32.totalorder %s19, 1
      %s242 = scalar_select %p241, %s19, 1
      %s243 = smul.addr %s242, 8
      %s244 = smul.addr %s243, 8
      %s245 = scalar_lea.vmem %s0, %s244
      %p246 = scmp.lt.s32.totalorder %s19, 1
      %s247 = scalar_select %p246, %s19, 1
      %s248 = smul.addr %s247, 8
      %s249 = smul.addr %s248, 8
      %s250 = scalar_lea.vmem %s5, %s249
      %p251 = scmp.eq.s32.totalorder %s19, 0
      // Predicated region
      $region41: #{_lambda_.8} parent=39 // pred_check
        %p252 = pneg %p251
      $region42: #{_lambda_.8} parent=39 // pred_check_branch
        %254 = sbr.rel (%p252) target = $region44
      $region43: #{_lambda_.8} parent=39 // pred_region
        %vm255 = vcmask 58368
        %256 = vst.msk [vmem:[%s6] sm:$0x3] %vm255, 0.0
      $region44: #{_lambda_.8} parent=39 // pred_fallthru
        _
      %v257 = vld [vmem:[%s1] sm:$0x1]
      %v258 = vld [vmem:[%s2] sm:$0x1]
      %s259 = sld [smem:[#allocation2]]
      %v260 = vld [vmem:[%s245] sm:$0xff]
      %v261 = vld [vmem:[%s245 + $0x8] sm:$0xff]
      %v262 = vld [vmem:[%s245 + $0x10] sm:$0xff]
      %v263 = vld [vmem:[%s245 + $0x18] sm:$0xff]
      %v264 = vld [vmem:[%s245 + $0x20] sm:$0xff]
      %v265 = vld [vmem:[%s245 + $0x28] sm:$0xff]
      %v266 = vld [vmem:[%s245 + $0x30] sm:$0xff]
      %v267 = vld [vmem:[%s245 + $0x38] sm:$0xff]
      %v269 = vlaneseq
      %v270 = vshrl.u32 %v269, 7
      %v271 = vsub.s32 0, %v270
      %v272 = vrot.slane %v257, %v271
      %v274 = vmul.f32 %v260, %v272
      %v275 = vmul.f32 %v261, %v272
      %v276 = vmul.f32 %v262, %v272
      %v277 = vmul.f32 %v263, %v272
      %v278 = vmul.f32 %v264, %v272
      %v279 = vmul.f32 %v265, %v272
      %v280 = vmul.f32 %v266, %v272
      %v281 = vmul.f32 %v267, %v272
      %v283 = vlaneseq
      %v284 = vshrl.u32 %v283, 7
      %v285 = vsub.s32 0, %v284
      %v286 = vrot.slane %v258, %v285
      %v288 = vadd.f32 %v274, %v286
      %v289 = vadd.f32 %v275, %v286
      %v290 = vadd.f32 %v276, %v286
      %v291 = vadd.f32 %v277, %v286
      %v292 = vadd.f32 %v278, %v286
      %v293 = vadd.f32 %v279, %v286
      %v294 = vadd.f32 %v280, %v286
      %v295 = vadd.f32 %v281, %v286
      %vm296 = vcmp.gt.f32.partialorder %v288, 0.0
      %vm297 = vcmp.gt.f32.partialorder %v289, 0.0
      %vm298 = vcmp.gt.f32.partialorder %v290, 0.0
      %vm299 = vcmp.gt.f32.partialorder %v291, 0.0
      %vm300 = vcmp.gt.f32.partialorder %v292, 0.0
      %vm301 = vcmp.gt.f32.partialorder %v293, 0.0
      %vm302 = vcmp.gt.f32.partialorder %v294, 0.0
      %vm303 = vcmp.gt.f32.partialorder %v295, 0.0
      %v304 = vstv %s259
      %v305 = vmul.f32 %v304, %v288
      %v306 = vmul.f32 %v304, %v289
      %v307 = vmul.f32 %v304, %v290
      %v308 = vmul.f32 %v304, %v291
      %v309 = vmul.f32 %v304, %v292
      %v310 = vmul.f32 %v304, %v293
      %v311 = vmul.f32 %v304, %v294
      %v312 = vmul.f32 %v304, %v295
      %v313 = vsel %vm296, %v288, %v305
      %v314 = vsel %vm297, %v289, %v306
      %v315 = vsel %vm298, %v290, %v307
      %v316 = vsel %vm299, %v291, %v308
      %v317 = vsel %vm300, %v292, %v309
      %v318 = vsel %vm301, %v293, %v310
      %v319 = vsel %vm302, %v294, %v311
      %v320 = vsel %vm303, %v295, %v312
      %v330 = vrot.slane 0.0, 7
      %v331 = vrot.slane %v313, 7
      %v332 = vrot.slane %v314, 7
      %v333 = vrot.slane %v315, 7
      %v334 = vrot.slane %v316, 7
      %v335 = vrot.slane %v317, 7
      %v336 = vrot.slane %v318, 7
      %v337 = vrot.slane %v319, 7
      %v338 = vrot.slane %v320, 7
      %vm348 = vcmask 1040384
      %v349 = vsel %vm348, 0.0, %v330
      %v350 = vsel %vm348, 0.0, %v331
      %v351 = vsel %vm348, 0.0, %v332
      %v352 = vsel %vm348, 0.0, %v333
      %v353 = vsel %vm348, 0.0, %v334
      %v354 = vsel %vm348, 0.0, %v335
      %v355 = vsel %vm348, 0.0, %v336
      %v356 = vsel %vm348, 0.0, %v337
      %v357 = vsel %vm348, 0.0, %v338
      %v358 = vsel %vm348, %v330, 0.0
      %v359 = vsel %vm348, %v331, 0.0
      %v360 = vsel %vm348, %v332, 0.0
      %v361 = vsel %vm348, %v333, 0.0
      %v362 = vsel %vm348, %v334, 0.0
      %v363 = vsel %vm348, %v335, 0.0
      %v364 = vsel %vm348, %v336, 0.0
      %v365 = vsel %vm348, %v337, 0.0
      %v366 = vsel %vm348, %v338, 0.0
      %vm383 = vcmask 1046528
      %v384 = vrot.slane %v349, 1
      %v385 = vrot.slane %v358, 1
      %v386 = vsel %vm383, %v384, %v385
      %v387 = vrot.slane %v350, 1
      %v388 = vrot.slane %v359, 1
      %v389 = vsel %vm383, %v387, %v388
      %v390 = vrot.slane %v351, 1
      %v391 = vrot.slane %v360, 1
      %v392 = vsel %vm383, %v390, %v391
      %v393 = vrot.slane %v352, 1
      %v394 = vrot.slane %v361, 1
      %v395 = vsel %vm383, %v393, %v394
      %v396 = vrot.slane %v353, 1
      %v397 = vrot.slane %v362, 1
      %v398 = vsel %vm383, %v396, %v397
      %v399 = vrot.slane %v354, 1
      %v400 = vrot.slane %v363, 1
      %v401 = vsel %vm383, %v399, %v400
      %v402 = vrot.slane %v355, 1
      %v403 = vrot.slane %v364, 1
      %v404 = vsel %vm383, %v402, %v403
      %v405 = vrot.slane %v356, 1
      %v406 = vrot.slane %v365, 1
      %v407 = vsel %vm383, %v405, %v406
      %408 = vrot.lane.b32.xlu0 %v386, 8
      %v409 = vpop.permute.xlu0 %408
      %410 = vrot.lane.b32.xlu0 %v389, 8
      %v411 = vpop.permute.xlu0 %410
      %412 = vrot.lane.b32.xlu0 %v392, 8
      %v413 = vpop.permute.xlu0 %412
      %414 = vrot.lane.b32.xlu0 %v395, 8
      %v415 = vpop.permute.xlu0 %414
      %416 = vrot.lane.b32.xlu0 %v398, 8
      %v417 = vpop.permute.xlu0 %416
      %418 = vrot.lane.b32.xlu0 %v401, 8
      %v419 = vpop.permute.xlu0 %418
      %420 = vrot.lane.b32.xlu0 %v404, 8
      %v421 = vpop.permute.xlu0 %420
      %422 = vrot.lane.b32.xlu0 %v407, 8
      %v423 = vpop.permute.xlu0 %422
      %vm432 = vcmask 1045504
      %v433 = vrot.slane %v349, 2
      %v434 = vrot.slane %v358, 2
      %v435 = vsel %vm432, %v433, %v434
      %v436 = vrot.slane %v350, 2
      %v437 = vrot.slane %v359, 2
      %v438 = vsel %vm432, %v436, %v437
      %v439 = vrot.slane %v351, 2
      %v440 = vrot.slane %v360, 2
      %v441 = vsel %vm432, %v439, %v440
      %v442 = vrot.slane %v352, 2
      %v443 = vrot.slane %v361, 2
      %v444 = vsel %vm432, %v442, %v443
      %v445 = vrot.slane %v353, 2
      %v446 = vrot.slane %v362, 2
      %v447 = vsel %vm432, %v445, %v446
      %v448 = vrot.slane %v354, 2
      %v449 = vrot.slane %v363, 2
      %v450 = vsel %vm432, %v448, %v449
      %v451 = vrot.slane %v355, 2
      %v452 = vrot.slane %v364, 2
      %v453 = vsel %vm432, %v451, %v452
      %v454 = vrot.slane %v356, 2
      %v455 = vrot.slane %v365, 2
      %v456 = vsel %vm432, %v454, %v455
      %457 = vrot.lane.b32.xlu0 %v435, 16
      %v458 = vpop.permute.xlu0 %457
      %459 = vrot.lane.b32.xlu0 %v438, 16
      %v460 = vpop.permute.xlu0 %459
      %461 = vrot.lane.b32.xlu0 %v441, 16
      %v462 = vpop.permute.xlu0 %461
      %463 = vrot.lane.b32.xlu0 %v444, 16
      %v464 = vpop.permute.xlu0 %463
      %465 = vrot.lane.b32.xlu0 %v447, 16
      %v466 = vpop.permute.xlu0 %465
      %467 = vrot.lane.b32.xlu0 %v450, 16
      %v468 = vpop.permute.xlu0 %467
      %469 = vrot.lane.b32.xlu0 %v453, 16
      %v470 = vpop.permute.xlu0 %469
      %471 = vrot.lane.b32.xlu0 %v456, 16
      %v472 = vpop.permute.xlu0 %471
      %482 = vrot.lane.b32.xlu0 %v350, 24
      %v483 = vpop.permute.xlu0 %482
      %484 = vrot.lane.b32.xlu0 %v351, 24
      %v485 = vpop.permute.xlu0 %484
      %486 = vrot.lane.b32.xlu0 %v352, 24
      %v487 = vpop.permute.xlu0 %486
      %488 = vrot.lane.b32.xlu0 %v353, 24
      %v489 = vpop.permute.xlu0 %488
      %490 = vrot.lane.b32.xlu0 %v354, 24
      %v491 = vpop.permute.xlu0 %490
      %492 = vrot.lane.b32.xlu0 %v355, 24
      %v493 = vpop.permute.xlu0 %492
      %494 = vrot.lane.b32.xlu0 %v356, 24
      %v495 = vpop.permute.xlu0 %494
      %496 = vrot.lane.b32.xlu0 %v357, 24
      %v497 = vpop.permute.xlu0 %496
      %v507 = vrot.slane %v357, 1
      %v508 = vrot.slane %v366, 1
      %v509 = vsel %vm383, %v507, %v508
      %510 = vrot.lane.b32.xlu0 %v389, 32
      %v511 = vpop.permute.xlu0 %510
      %512 = vrot.lane.b32.xlu0 %v392, 32
      %v513 = vpop.permute.xlu0 %512
      %514 = vrot.lane.b32.xlu0 %v395, 32
      %v515 = vpop.permute.xlu0 %514
      %516 = vrot.lane.b32.xlu0 %v398, 32
      %v517 = vpop.permute.xlu0 %516
      %518 = vrot.lane.b32.xlu0 %v401, 32
      %v519 = vpop.permute.xlu0 %518
      %520 = vrot.lane.b32.xlu0 %v404, 32
      %v521 = vpop.permute.xlu0 %520
      %522 = vrot.lane.b32.xlu0 %v407, 32
      %v523 = vpop.permute.xlu0 %522
      %524 = vrot.lane.b32.xlu0 %v509, 32
      %v525 = vpop.permute.xlu0 %524
      %v534 = vrot.slane %v357, 2
      %v535 = vrot.slane %v366, 2
      %v536 = vsel %vm432, %v534, %v535
      %537 = vrot.lane.b32.xlu0 %v438, 40
      %v538 = vpop.permute.xlu0 %537
      %539 = vrot.lane.b32.xlu0 %v441, 40
      %v540 = vpop.permute.xlu0 %539
      %541 = vrot.lane.b32.xlu0 %v444, 40
      %v542 = vpop.permute.xlu0 %541
      %543 = vrot.lane.b32.xlu0 %v447, 40
      %v544 = vpop.permute.xlu0 %543
      %545 = vrot.lane.b32.xlu0 %v450, 40
      %v546 = vpop.permute.xlu0 %545
      %547 = vrot.lane.b32.xlu0 %v453, 40
      %v548 = vpop.permute.xlu0 %547
      %549 = vrot.lane.b32.xlu0 %v456, 40
      %v550 = vpop.permute.xlu0 %549
      %551 = vrot.lane.b32.xlu0 %v536, 40
      %v552 = vpop.permute.xlu0 %551
      %561 = vrot.lane.b32.xlu0 %v351, 48
      %v562 = vpop.permute.xlu0 %561
      %563 = vrot.lane.b32.xlu0 %v352, 48
      %v564 = vpop.permute.xlu0 %563
      %565 = vrot.lane.b32.xlu0 %v353, 48
      %v566 = vpop.permute.xlu0 %565
      %567 = vrot.lane.b32.xlu0 %v354, 48
      %v568 = vpop.permute.xlu0 %567
      %569 = vrot.lane.b32.xlu0 %v355, 48
      %v570 = vpop.permute.xlu0 %569
      %571 = vrot.lane.b32.xlu0 %v356, 48
      %v572 = vpop.permute.xlu0 %571
      %573 = vrot.lane.b32.xlu0 %v357, 48
      %v574 = vpop.permute.xlu0 %573
      %575 = vrot.lane.b32.xlu0 %v349, 48
      %v576 = vpop.permute.xlu0 %575
      %585 = vrot.lane.b32.xlu0 %v392, 56
      %v586 = vpop.permute.xlu0 %585
      %587 = vrot.lane.b32.xlu0 %v395, 56
      %v588 = vpop.permute.xlu0 %587
      %589 = vrot.lane.b32.xlu0 %v398, 56
      %v590 = vpop.permute.xlu0 %589
      %591 = vrot.lane.b32.xlu0 %v401, 56
      %v592 = vpop.permute.xlu0 %591
      %593 = vrot.lane.b32.xlu0 %v404, 56
      %v594 = vpop.permute.xlu0 %593
      %595 = vrot.lane.b32.xlu0 %v407, 56
      %v596 = vpop.permute.xlu0 %595
      %597 = vrot.lane.b32.xlu0 %v509, 56
      %v598 = vpop.permute.xlu0 %597
      %599 = vrot.lane.b32.xlu0 %v386, 56
      %v600 = vpop.permute.xlu0 %599
      %609 = vrot.lane.b32.xlu0 %v441, 64
      %v610 = vpop.permute.xlu0 %609
      %611 = vrot.lane.b32.xlu0 %v444, 64
      %v612 = vpop.permute.xlu0 %611
      %613 = vrot.lane.b32.xlu0 %v447, 64
      %v614 = vpop.permute.xlu0 %613
      %615 = vrot.lane.b32.xlu0 %v450, 64
      %v616 = vpop.permute.xlu0 %615
      %617 = vrot.lane.b32.xlu0 %v453, 64
      %v618 = vpop.permute.xlu0 %617
      %619 = vrot.lane.b32.xlu0 %v456, 64
      %v620 = vpop.permute.xlu0 %619
      %621 = vrot.lane.b32.xlu0 %v536, 64
      %v622 = vpop.permute.xlu0 %621
      %623 = vrot.lane.b32.xlu0 %v435, 64
      %v624 = vpop.permute.xlu0 %623
      %vm633 = vcmask 64512
      %v634 = vsel %vm633, %v349, %v409
      %v635 = vsel %vm633, %v350, %v411
      %v636 = vsel %vm633, %v351, %v413
      %v637 = vsel %vm633, %v352, %v415
      %v638 = vsel %vm633, %v353, %v417
      %v639 = vsel %vm633, %v354, %v419
      %v640 = vsel %vm633, %v355, %v421
      %v641 = vsel %vm633, %v356, %v423
      %vm642 = vcmask 130048
      %v643 = vsel %vm642, %v634, %v458
      %v644 = vsel %vm642, %v635, %v460
      %v645 = vsel %vm642, %v636, %v462
      %v646 = vsel %vm642, %v637, %v464
      %v647 = vsel %vm642, %v638, %v466
      %v648 = vsel %vm642, %v639, %v468
      %v649 = vsel %vm642, %v640, %v470
      %v650 = vsel %vm642, %v641, %v472
      %vm651 = vcmask 195584
      %v652 = vsel %vm651, %v643, %v483
      %v653 = vsel %vm651, %v644, %v485
      %v654 = vsel %vm651, %v645, %v487
      %v655 = vsel %vm651, %v646, %v489
      %v656 = vsel %vm651, %v647, %v491
      %v657 = vsel %vm651, %v648, %v493
      %v658 = vsel %vm651, %v649, %v495
      %v659 = vsel %vm651, %v650, %v497
      %vm660 = vcmask 261120
      %v661 = vsel %vm660, %v652, %v511
      %v662 = vsel %vm660, %v653, %v513
      %v663 = vsel %vm660, %v654, %v515
      %v664 = vsel %vm660, %v655, %v517
      %v665 = vsel %vm660, %v656, %v519
      %v666 = vsel %vm660, %v657, %v521
      %v667 = vsel %vm660, %v658, %v523
      %v668 = vsel %vm660, %v659, %v525
      %vm669 = vcmask 326656
      %v670 = vsel %vm669, %v661, %v538
      %v671 = vsel %vm669, %v662, %v540
      %v672 = vsel %vm669, %v663, %v542
      %v673 = vsel %vm669, %v664, %v544
      %v674 = vsel %vm669, %v665, %v546
      %v675 = vsel %vm669, %v666, %v548
      %v676 = vsel %vm669, %v667, %v550
      %v677 = vsel %vm669, %v668, %v552
      %vm678 = vcmask 392192
      %v679 = vsel %vm678, %v670, %v562
      %v680 = vsel %vm678, %v671, %v564
      %v681 = vsel %vm678, %v672, %v566
      %v682 = vsel %vm678, %v673, %v568
      %v683 = vsel %vm678, %v674, %v570
      %v684 = vsel %vm678, %v675, %v572
      %v685 = vsel %vm678, %v676, %v574
      %v686 = vsel %vm678, %v677, %v576
      %vm687 = vcmask 457728
      %v688 = vsel %vm687, %v679, %v586
      %v689 = vsel %vm687, %v680, %v588
      %v690 = vsel %vm687, %v681, %v590
      %v691 = vsel %vm687, %v682, %v592
      %v692 = vsel %vm687, %v683, %v594
      %v693 = vsel %vm687, %v684, %v596
      %v694 = vsel %vm687, %v685, %v598
      %v695 = vsel %vm687, %v686, %v600
      %vm696 = vcmask 523264
      %v697 = vsel %vm696, %v688, %v610
      %v698 = vsel %vm696, %v689, %v612
      %v699 = vsel %vm696, %v690, %v614
      %v700 = vsel %vm696, %v691, %v616
      %v701 = vsel %vm696, %v692, %v618
      %v702 = vsel %vm696, %v693, %v620
      %v703 = vsel %vm696, %v694, %v622
      %v704 = vsel %vm696, %v695, %v624
      %v705 = vld [vmem:[%s3] sm:$0xff]
      %v706 = vld [vmem:[%s3 + $0x8] sm:$0xff]
      %v707 = vld [vmem:[%s3 + $0x10] sm:$0xff]
      %v708 = vld [vmem:[%s3 + $0x18] sm:$0xff]
      %v709 = vld [vmem:[%s3 + $0x20] sm:$0xff]
      %v710 = vld [vmem:[%s3 + $0x28] sm:$0xff]
      %v711 = vld [vmem:[%s3 + $0x30] sm:$0xff]
      %v712 = vld [vmem:[%s3 + $0x38] sm:$0xff]
      %v713 = vld [vmem:[%s3 + $0x40] sm:$0xff]
      %vm714 = vcmask 588800
      %v716 = vsel %vm714, %v697, 0
      %v719 = vsel %vm714, %v698, 0
      %v722 = vsel %vm714, %v699, 0
      %v725 = vsel %vm714, %v700, 0
      %v728 = vsel %vm714, %v701, 0
      %v731 = vsel %vm714, %v702, 0
      %v734 = vsel %vm714, %v703, 0
      %v737 = vsel %vm714, %v704, 0
      %739 = vmatprep.subr.mxu0 0.0
      %740 = vmatpush1.msra.mxu0 %v705
      %741 = vmatprep.subr.mxu0 0.0
      %742 = vmatpush1.msra.mxu0 %v706
      %743 = vmatprep.subr.mxu0 0.0
      %744 = vmatpush1.msra.mxu0 %v707
      %745 = vmatprep.subr.mxu0 0.0
      %746 = vmatpush1.msra.mxu0 %v708
      %747 = vmatprep.subr.mxu0 0.0
      %748 = vmatpush1.msra.mxu0 %v709
      %749 = vmatprep.subr.mxu0 0.0
      %750 = vmatpush1.msra.mxu0 %v710
      %751 = vmatprep.subr.mxu0 0.0
      %752 = vmatpush1.msra.mxu0 %v711
      %753 = vmatprep.subr.mxu0 0.0
      %754 = vmatpush1.msra.mxu0 %v712
      %755 = vmatprep.subr.mxu0 0.0
      %756 = vmatpush1.msra.mxu0 %v713
      %757 = vmatprep.subr.mxu0 0.0
      %758 = vmatpush1.msra.mxu0 0.0
      %759 = vmatprep.subr.mxu0 0.0
      %760 = vmatpush1.msra.mxu0 0.0
      %761 = vmatprep.subr.mxu0 0.0
      %762 = vmatpush1.msra.mxu0 0.0
      %763 = vmatprep.subr.mxu0 0.0
      %764 = vmatpush1.msra.mxu0 0.0
      %765 = vmatprep.subr.mxu0 0.0
      %766 = vmatpush1.msra.mxu0 0.0
      %767 = vmatprep.subr.mxu0 0.0
      %768 = vmatpush1.msra.mxu0 0.0
      %769 = vmatprep.subr.mxu0 0.0
      %770 = vmatpush1.msra.mxu0 0.0
      %771 = vmatprep.subr.mxu0 0.0
      %772 = vmatpush1.msra.mxu0 0.0
      %773 = vmatprep.subr.mxu0 0.0
      %774 = vmatpush1.msra.mxu0 0.0
      %775 = vmatprep.subr.mxu0 0.0
      %776 = vmatpush1.msra.mxu0 0.0
      %777 = vmatprep.subr.mxu0 0.0
      %778 = vmatpush1.msra.mxu0 0.0
      %779 = vmatprep.subr.mxu0 0.0
      %780 = vmatpush1.msra.mxu0 0.0
      %781 = vmatprep.subr.mxu0 0.0
      %782 = vmatpush1.msra.mxu0 0.0
      %783 = vmatprep.subr.mxu0 0.0
      %784 = vmatpush1.msra.mxu0 0.0
      %785 = vmatprep.subr.mxu0 0.0
      %786 = vmatpush1.msra.mxu0 0.0
      %787 = vmatprep.subr.mxu0 0.0
      %788 = vmatpush1.msra.mxu0 0.0
      %789 = vmatprep.subr.mxu0 0.0
      %790 = vmatpush1.msra.mxu0 0.0
      %791 = vmatprep.subr.mxu0 0.0
      %792 = vmatpush1.msra.mxu0 0.0
      %793 = vmatprep.subr.mxu0 0.0
      %794 = vmatpush1.msra.mxu0 0.0
      %795 = vmatprep.subr.mxu0 0.0
      %796 = vmatpush1.msra.mxu0 0.0
      %797 = vmatprep.subr.mxu0 0.0
      %798 = vmatpush1.msra.mxu0 0.0
      %799 = vmatprep.subr.mxu0 0.0
      %800 = vmatpush1.msra.mxu0 0.0
      %801 = vmatprep.subr.mxu0 0.0
      %802 = vmatpush1.msra.mxu0 0.0
      %803 = vmatprep.mubr.f32.mxu0 0.0
      %804 = vmatmul.mubr.f32.gmra.mrb[0].mxu0 %v716
      %v805 = vpop.f32.mrb[0].mxu0
      %v806 = vadd.f32 0.0, %v805
      %v807 = vpop.f32.mrb[0].mxu0
      %808 = vmatprep.mubr.f32.mxu0 0.0
      %809 = vmatmul.mubr.f32.gmra.mrb[0].mxu0 %v719
      %v810 = vpop.f32.mrb[0].mxu0
      %v811 = vadd.f32 0.0, %v810
      %v812 = vpop.f32.mrb[0].mxu0
      %813 = vmatprep.mubr.f32.mxu0 0.0
      %814 = vmatmul.mubr.f32.gmra.mrb[0].mxu0 %v722
      %v815 = vpop.f32.mrb[0].mxu0
      %v816 = vadd.f32 0.0, %v815
      %v817 = vpop.f32.mrb[0].mxu0
      %818 = vmatprep.mubr.f32.mxu0 0.0
      %819 = vmatmul.mubr.f32.gmra.mrb[0].mxu0 %v725
      %v820 = vpop.f32.mrb[0].mxu0
      %v821 = vadd.f32 0.0, %v820
      %v822 = vpop.f32.mrb[0].mxu0
      %823 = vmatprep.mubr.f32.mxu0 0.0
      %824 = vmatmul.mubr.f32.gmra.mrb[0].mxu0 %v728
      %v825 = vpop.f32.mrb[0].mxu0
      %v826 = vadd.f32 0.0, %v825
      %v827 = vpop.f32.mrb[0].mxu0
      %828 = vmatprep.mubr.f32.mxu0 0.0
      %829 = vmatmul.mubr.f32.gmra.mrb[0].mxu0 %v731
      %v830 = vpop.f32.mrb[0].mxu0
      %v831 = vadd.f32 0.0, %v830
      %v832 = vpop.f32.mrb[0].mxu0
      %833 = vmatprep.mubr.f32.mxu0 0.0
      %834 = vmatmul.mubr.f32.gmra.mrb[0].mxu0 %v734
      %v835 = vpop.f32.mrb[0].mxu0
      %v836 = vadd.f32 0.0, %v835
      %v837 = vpop.f32.mrb[0].mxu0
      %838 = vmatprep.mubr.f32.mxu0 0.0
      %839 = vmatmul.mubr.f32.gmra.mrb[0].mxu0 %v737
      %v840 = vpop.f32.mrb[0].mxu0
      %v841 = vadd.f32 0.0, %v840
      %v842 = vpop.f32.mrb[0].mxu0
      %843 = vdwg.mxu0
      %844 = vst.msk [vmem:[%s250] sm:$0xff] %vm633, %v806
      %845 = vst.msk [vmem:[%s250 + $0x8] sm:$0xff] %vm633, %v811
      %846 = vst.msk [vmem:[%s250 + $0x10] sm:$0xff] %vm633, %v816
      %847 = vst.msk [vmem:[%s250 + $0x18] sm:$0xff] %vm633, %v821
      %848 = vst.msk [vmem:[%s250 + $0x20] sm:$0xff] %vm633, %v826
      %849 = vst.msk [vmem:[%s250 + $0x28] sm:$0xff] %vm633, %v831
      %850 = vst.msk [vmem:[%s250 + $0x30] sm:$0xff] %vm633, %v836
      %851 = vst.msk [vmem:[%s250 + $0x38] sm:$0xff] %vm633, %v841
      %v852 = vld [vmem:[%s6] sm:$0x3]
      %v853 = vsel %vm633, %v806, 0.0
      %v854 = vsel %vm633, %v811, 0.0
      %v855 = vadd.f32 %v853, %v854
      %v856 = vsel %vm633, %v816, 0.0
      %v857 = vadd.f32 %v855, %v856
      %v858 = vsel %vm633, %v821, 0.0
      %v859 = vadd.f32 %v857, %v858
      %v860 = vsel %vm633, %v826, 0.0
      %v861 = vadd.f32 %v859, %v860
      %v862 = vsel %vm633, %v831, 0.0
      %v863 = vadd.f32 %v861, %v862
      %v864 = vsel %vm633, %v836, 0.0
      %v865 = vadd.f32 %v863, %v864
      %v866 = vsel %vm633, %v841, 0.0
      %v867 = vadd.f32 %v865, %v866
      %v868 = vrot.slane %v867, 4
      %v869 = vadd.f32 %v867, %v868
      %v870 = vrot.slane %v869, 2
      %v871 = vadd.f32 %v869, %v870
      %v872 = vrot.slane %v871, 1
      %v873 = vadd.f32 %v871, %v872
      %v874 = vmul.f32 %v806, %v806
      %v875 = vmul.f32 %v811, %v811
      %v876 = vmul.f32 %v816, %v816
      %v877 = vmul.f32 %v821, %v821
      %v878 = vmul.f32 %v826, %v826
      %v879 = vmul.f32 %v831, %v831
      %v880 = vmul.f32 %v836, %v836
      %v881 = vmul.f32 %v841, %v841
      %v882 = vsel %vm633, %v874, 0.0
      %v883 = vsel %vm633, %v875, 0.0
      %v884 = vadd.f32 %v882, %v883
      %v885 = vsel %vm633, %v876, 0.0
      %v886 = vadd.f32 %v884, %v885
      %v887 = vsel %vm633, %v877, 0.0
      %v888 = vadd.f32 %v886, %v887
      %v889 = vsel %vm633, %v878, 0.0
      %v890 = vadd.f32 %v888, %v889
      %v891 = vsel %vm633, %v879, 0.0
      %v892 = vadd.f32 %v890, %v891
      %v893 = vsel %vm633, %v880, 0.0
      %v894 = vadd.f32 %v892, %v893
      %v895 = vsel %vm633, %v881, 0.0
      %v896 = vadd.f32 %v894, %v895
      %v897 = vrot.slane %v896, 4
      %v898 = vadd.f32 %v896, %v897
      %v899 = vrot.slane %v898, 2
      %v900 = vadd.f32 %v898, %v899
      %v901 = vrot.slane %v900, 1
      %v902 = vadd.f32 %v900, %v901
      %v903 = vsel %vm348, %v873, %v902
      %v904 = vadd.f32 %v852, %v903
      %vm905 = vcmask 58368
      %906 = vst.msk [vmem:[%s6] sm:$0x3] %vm905, %v904
      %p907 = scmp.lt.s32.totalorder %s19, 1
      %s908 = scalar_select %p907, %s19, 1
      %s909 = smul.addr %s908, 8
      %s910 = smul.addr %s909, 8
      %s911 = scalar_lea.vmem %s5, %s910
      // Predicated region
      $region45: #{_lambda_.8} parent=39 // pred_check
        %p912 = pneg %p147
      $region46: #{_lambda_.8} parent=39 // pred_check_branch
        %914 = sbr.rel (%p912) target = $region48
      $region47: #{_lambda_.8} parent=39 // pred_region
        _
      $region48: #{_lambda_.8} parent=39 // pred_fallthru
        _
      // Predicated region
      $region49: #{_lambda_.8} parent=39 // pred_check
        %p915 = pneg %p168
      $region50: #{_lambda_.8} parent=39 // pred_check_branch
        %917 = sbr.rel (%p915) target = $region52
      $region51: #{_lambda_.8} parent=39 // pred_region
        _
      $region52: #{_lambda_.8} parent=39 // pred_fallthru
        _
      // Predicated region
      $region53: #{_lambda_.8} parent=39 // pred_check
        %p918 = pneg %p168
      $region54: #{_lambda_.8} parent=39 // pred_check_branch
        %920 = sbr.rel (%p918) target = $region56
      $region55: #{_lambda_.8} parent=39 // pred_region
        _
      $region56: #{_lambda_.8} parent=39 // pred_fallthru
        _
    $region40: #{_lambda_.8} parent=5 // pred_fallthru
      _
    %p921 = scmp.le.s32.totalorder 2, %s14
    // Predicated region
    $region57: #{_lambda_.8} parent=5 // pred_check
      %p922 = pneg %p921
    $region58: #{_lambda_.8} parent=5 // pred_check_branch
      %924 = sbr.rel (%p922) target = $region60
    $region59: #{_lambda_.8} parent=5 // pred_region
      %s925 = ssub.s32 %s14, 2
      // Predicated region
      $region61: #{_lambda_.8} parent=59 // pred_check
        %p926 = pneg %p153
      $region62: #{_lambda_.8} parent=59 // pred_check_branch
        %928 = sbr.rel (%p926) target = $region64
      $region63: #{_lambda_.8} parent=59 // pred_region
        %p929 = scmp.lt.s32.totalorder %s20, 1
        %s930 = scalar_select %p929, %s20, 1
        %s931 = smul.addr %s930, 8
        %s932 = smul.addr %s931, 8
        %s933 = scalar_lea.vmem %s5, %s932
      $region64: #{_lambda_.8} parent=59 // pred_fallthru
        _
    $region60: #{_lambda_.8} parent=5 // pred_fallthru
      _
  $region6: #{_lambda_.8} parent=0 // loop_footer
    %s18 = sadd.s32 1, %s14
  $region7: #{_lambda_.8} parent=0 // loop_footer_branch
    %13 = sbr.rel target = $region3
  $region8: #{_lambda_.8} parent=0 // loop_exit
    _

// kernel: _lambda_.10
$region0: #{_lambda_.10}
  #allocation0 [shape = 'u32[]', space=smem, size = 0x4, offset = 0x4, fixed_abs, tag = 'smem constant byte address 0x4 - core index']
  #allocation1 [shape = 'u32[144,128]{1,0:T(1,128)}', space=vmem, size = 0x12000, scoped, tag = 'internal scratch']
  #allocation2 [shape = 'f32[1]{0:T(128)S(6)}', space=smem, size = 0x200, scoped, tag = 'scoped memory for _lambda_.10']
  %s0 = inlined_call_operand.vmem [shape: f32[128,32], index: 0, kind: input, shape index: {}]
  %s1 = inlined_call_operand.vmem [shape: f32[128,32], index: 1, kind: input, shape index: {}]
  %s2 = inlined_call_operand.vmem [shape: f32[1,32], index: 2, kind: input, shape index: {}]
  %s3 = inlined_call_operand.vmem [shape: f32[1,32], index: 3, kind: input, shape index: {}]
  %s4 = inlined_call_operand.vmem [shape: f32[1,32], index: 4, kind: input, shape index: {}]
  %s5 = inlined_call_operand.vmem [shape: f32[1,32], index: 5, kind: input, shape index: {}]
  %s6 = inlined_call_operand.<no memory space> [shape: f32[1], index: 6, kind: input, shape index: {}]
  %s7 = inlined_call_operand.vmem [shape: f32[32,8], index: 7, kind: input, shape index: {}]
  %s8 = inlined_call_operand.vmem [shape: f32[128,32], index: 8, kind: output, shape index: {0}]
  %s9 = inlined_call_operand.vmem [shape: f32[128,8], index: 9, kind: output, shape index: {1}]
  %s10 = inlined_call_operand.vmem [shape: f32[2,8], index: 10, kind: output, shape index: {2}]
  %11 = xla_tuple %s8, %s9, %s10
  %s12 = sld [smem:[#allocation0]]
  $region62: #{_lambda_.10} parent=0
    _
  %s14 = ssub.s32 1, %s12
  %s15 = scalar_select 0, %s14, %s12
  %16 = sst [smem:[#allocation2]] %s6
  // Predicated region
  $region2: #{_lambda_.10} parent=0 // pred_check
    _
  $region3: #{_lambda_.10} parent=0 // pred_check_branch
    %18 = sbr.rel (0) target = $region5
  $region4: #{_lambda_.10} parent=0 // pred_region
    _
  $region5: #{_lambda_.10} parent=0 // pred_fallthru
    _
  // Predicated region
  $region6: #{_lambda_.10} parent=0 // pred_check
    _
  $region7: #{_lambda_.10} parent=0 // pred_check_branch
    %20 = sbr.rel (0) target = $region9
  $region8: #{_lambda_.10} parent=0 // pred_region
    _
  $region9: #{_lambda_.10} parent=0 // pred_fallthru
    _
  // Predicated region
  $region10: #{_lambda_.10} parent=0 // pred_check
    _
  $region11: #{_lambda_.10} parent=0 // pred_check_branch
    %22 = sbr.rel (0) target = $region13
  $region12: #{_lambda_.10} parent=0 // pred_region
    _
  $region13: #{_lambda_.10} parent=0 // pred_fallthru
    _
  // Predicated region
  $region14: #{_lambda_.10} parent=0 // pred_check
    _
  $region15: #{_lambda_.10} parent=0 // pred_check_branch
    %24 = sbr.rel (0) target = $region17
  $region16: #{_lambda_.10} parent=0 // pred_region
    _
  $region17: #{_lambda_.10} parent=0 // pred_fallthru
    _
  // Predicated region
  $region18: #{_lambda_.10} parent=0 // pred_check
    _
  $region19: #{_lambda_.10} parent=0 // pred_check_branch
    %26 = sbr.rel (0) target = $region21
  $region20: #{_lambda_.10} parent=0 // pred_region
    _
  $region21: #{_lambda_.10} parent=0 // pred_fallthru
    _
  // Predicated region
  $region22: #{_lambda_.10} parent=0 // pred_check
    _
  $region23: #{_lambda_.10} parent=0 // pred_check_branch
    %28 = sbr.rel (0) target = $region25
  $region24: #{_lambda_.10} parent=0 // pred_region
    _
  $region25: #{_lambda_.10} parent=0 // pred_fallthru
    _
  // Predicated region
  $region26: #{_lambda_.10} parent=0 // pred_check
    _
  $region27: #{_lambda_.10} parent=0 // pred_check_branch
    %30 = sbr.rel (0) target = $region29
  $region28: #{_lambda_.10} parent=0 // pred_region
    _
  $region29: #{_lambda_.10} parent=0 // pred_fallthru
    _
  // Predicated region
  $region30: #{_lambda_.10} parent=0 // pred_check
    _
  $region31: #{_lambda_.10} parent=0 // pred_check_branch
    %32 = sbr.rel (0) target = $region33
  $region32: #{_lambda_.10} parent=0 // pred_region
    _
  $region33: #{_lambda_.10} parent=0 // pred_fallthru
    _
  %p33 = scmp.eq.s32.totalorder 0, 0
  // Predicated region
  $region34: #{_lambda_.10} parent=0 // pred_check
    %p34 = pneg %p33
  $region35: #{_lambda_.10} parent=0 // pred_check_branch
    %36 = sbr.rel (%p34) target = $region37
  $region36: #{_lambda_.10} parent=0 // pred_region
    %vm37 = vcmask 58368
    %38 = vst.msk [vmem:[%s10] sm:$0x3] %vm37, 0.0
  $region37: #{_lambda_.10} parent=0 // pred_fallthru
    _
  %s39 = sld [smem:[#allocation2]]
  %v40 = vld [vmem:[%s0] sm:$0xff]
  %v41 = vld [vmem:[%s0 + $0x8] sm:$0xff]
  %v42 = vld [vmem:[%s0 + $0x10] sm:$0xff]
  %v43 = vld [vmem:[%s0 + $0x18] sm:$0xff]
  %v44 = vld [vmem:[%s0 + $0x20] sm:$0xff]
  %v45 = vld [vmem:[%s0 + $0x28] sm:$0xff]
  %v46 = vld [vmem:[%s0 + $0x30] sm:$0xff]
  %v47 = vld [vmem:[%s0 + $0x38] sm:$0xff]
  %v48 = vld [vmem:[%s0 + $0x40] sm:$0xff]
  %v49 = vld [vmem:[%s0 + $0x48] sm:$0xff]
  %v50 = vld [vmem:[%s0 + $0x50] sm:$0xff]
  %v51 = vld [vmem:[%s0 + $0x58] sm:$0xff]
  %v52 = vld [vmem:[%s0 + $0x60] sm:$0xff]
  %v53 = vld [vmem:[%s0 + $0x68] sm:$0xff]
  %v54 = vld [vmem:[%s0 + $0x70] sm:$0xff]
  %v55 = vld [vmem:[%s0 + $0x78] sm:$0xff]
  %v56 = vld [vmem:[%s2] sm:$0x1]
  %v58 = vlaneseq
  %v59 = vshrl.u32 %v58, 7
  %v60 = vsub.s32 0, %v59
  %v61 = vrot.slane %v56, %v60
  %v63 = vmul.f32 %v40, %v61
  %v64 = vmul.f32 %v41, %v61
  %v65 = vmul.f32 %v42, %v61
  %v66 = vmul.f32 %v43, %v61
  %v67 = vmul.f32 %v44, %v61
  %v68 = vmul.f32 %v45, %v61
  %v69 = vmul.f32 %v46, %v61
  %v70 = vmul.f32 %v47, %v61
  %v71 = vmul.f32 %v48, %v61
  %v72 = vmul.f32 %v49, %v61
  %v73 = vmul.f32 %v50, %v61
  %v74 = vmul.f32 %v51, %v61
  %v75 = vmul.f32 %v52, %v61
  %v76 = vmul.f32 %v53, %v61
  %v77 = vmul.f32 %v54, %v61
  %v78 = vmul.f32 %v55, %v61
  %v79 = vld [vmem:[%s3] sm:$0x1]
  %v81 = vlaneseq
  %v82 = vshrl.u32 %v81, 7
  %v83 = vsub.s32 0, %v82
  %v84 = vrot.slane %v79, %v83
  %v86 = vadd.f32 %v63, %v84
  %v87 = vadd.f32 %v64, %v84
  %v88 = vadd.f32 %v65, %v84
  %v89 = vadd.f32 %v66, %v84
  %v90 = vadd.f32 %v67, %v84
  %v91 = vadd.f32 %v68, %v84
  %v92 = vadd.f32 %v69, %v84
  %v93 = vadd.f32 %v70, %v84
  %v94 = vadd.f32 %v71, %v84
  %v95 = vadd.f32 %v72, %v84
  %v96 = vadd.f32 %v73, %v84
  %v97 = vadd.f32 %v74, %v84
  %v98 = vadd.f32 %v75, %v84
  %v99 = vadd.f32 %v76, %v84
  %v100 = vadd.f32 %v77, %v84
  %v101 = vadd.f32 %v78, %v84
  %v102 = vld [vmem:[%s1] sm:$0xff]
  %v103 = vld [vmem:[%s1 + $0x8] sm:$0xff]
  %v104 = vld [vmem:[%s1 + $0x10] sm:$0xff]
  %v105 = vld [vmem:[%s1 + $0x18] sm:$0xff]
  %v106 = vld [vmem:[%s1 + $0x20] sm:$0xff]
  %v107 = vld [vmem:[%s1 + $0x28] sm:$0xff]
  %v108 = vld [vmem:[%s1 + $0x30] sm:$0xff]
  %v109 = vld [vmem:[%s1 + $0x38] sm:$0xff]
  %v110 = vld [vmem:[%s1 + $0x40] sm:$0xff]
  %v111 = vld [vmem:[%s1 + $0x48] sm:$0xff]
  %v112 = vld [vmem:[%s1 + $0x50] sm:$0xff]
  %v113 = vld [vmem:[%s1 + $0x58] sm:$0xff]
  %v114 = vld [vmem:[%s1 + $0x60] sm:$0xff]
  %v115 = vld [vmem:[%s1 + $0x68] sm:$0xff]
  %v116 = vld [vmem:[%s1 + $0x70] sm:$0xff]
  %v117 = vld [vmem:[%s1 + $0x78] sm:$0xff]
  %v118 = vld [vmem:[%s4] sm:$0x1]
  %v120 = vlaneseq
  %v121 = vshrl.u32 %v120, 7
  %v122 = vsub.s32 0, %v121
  %v123 = vrot.slane %v118, %v122
  %v125 = vmul.f32 %v102, %v123
  %v126 = vmul.f32 %v103, %v123
  %v127 = vmul.f32 %v104, %v123
  %v128 = vmul.f32 %v105, %v123
  %v129 = vmul.f32 %v106, %v123
  %v130 = vmul.f32 %v107, %v123
  %v131 = vmul.f32 %v108, %v123
  %v132 = vmul.f32 %v109, %v123
  %v133 = vmul.f32 %v110, %v123
  %v134 = vmul.f32 %v111, %v123
  %v135 = vmul.f32 %v112, %v123
  %v136 = vmul.f32 %v113, %v123
  %v137 = vmul.f32 %v114, %v123
  %v138 = vmul.f32 %v115, %v123
  %v139 = vmul.f32 %v116, %v123
  %v140 = vmul.f32 %v117, %v123
  %v141 = vld [vmem:[%s5] sm:$0x1]
  %v143 = vlaneseq
  %v144 = vshrl.u32 %v143, 7
  %v145 = vsub.s32 0, %v144
  %v146 = vrot.slane %v141, %v145
  %v148 = vadd.f32 %v125, %v146
  %v149 = vadd.f32 %v126, %v146
  %v150 = vadd.f32 %v127, %v146
  %v151 = vadd.f32 %v128, %v146
  %v152 = vadd.f32 %v129, %v146
  %v153 = vadd.f32 %v130, %v146
  %v154 = vadd.f32 %v131, %v146
  %v155 = vadd.f32 %v132, %v146
  %v156 = vadd.f32 %v133, %v146
  %v157 = vadd.f32 %v134, %v146
  %v158 = vadd.f32 %v135, %v146
  %v159 = vadd.f32 %v136, %v146
  %v160 = vadd.f32 %v137, %v146
  %v161 = vadd.f32 %v138, %v146
  %v162 = vadd.f32 %v139, %v146
  %v163 = vadd.f32 %v140, %v146
  %v164 = vadd.f32 %v86, %v148
  %v165 = vadd.f32 %v87, %v149
  %v166 = vadd.f32 %v88, %v150
  %v167 = vadd.f32 %v89, %v151
  %v168 = vadd.f32 %v90, %v152
  %v169 = vadd.f32 %v91, %v153
  %v170 = vadd.f32 %v92, %v154
  %v171 = vadd.f32 %v93, %v155
  %v172 = vadd.f32 %v94, %v156
  %v173 = vadd.f32 %v95, %v157
  %v174 = vadd.f32 %v96, %v158
  %v175 = vadd.f32 %v97, %v159
  %v176 = vadd.f32 %v98, %v160
  %v177 = vadd.f32 %v99, %v161
  %v178 = vadd.f32 %v100, %v162
  %v179 = vadd.f32 %v101, %v163
  %vm180 = vcmp.gt.f32.partialorder %v164, 0.0
  %vm181 = vcmp.gt.f32.partialorder %v165, 0.0
  %vm182 = vcmp.gt.f32.partialorder %v166, 0.0
  %vm183 = vcmp.gt.f32.partialorder %v167, 0.0
  %vm184 = vcmp.gt.f32.partialorder %v168, 0.0
  %vm185 = vcmp.gt.f32.partialorder %v169, 0.0
  %vm186 = vcmp.gt.f32.partialorder %v170, 0.0
  %vm187 = vcmp.gt.f32.partialorder %v171, 0.0
  %vm188 = vcmp.gt.f32.partialorder %v172, 0.0
  %vm189 = vcmp.gt.f32.partialorder %v173, 0.0
  %vm190 = vcmp.gt.f32.partialorder %v174, 0.0
  %vm191 = vcmp.gt.f32.partialorder %v175, 0.0
  %vm192 = vcmp.gt.f32.partialorder %v176, 0.0
  %vm193 = vcmp.gt.f32.partialorder %v177, 0.0
  %vm194 = vcmp.gt.f32.partialorder %v178, 0.0
  %vm195 = vcmp.gt.f32.partialorder %v179, 0.0
  %v196 = vstv %s39
  %v197 = vmul.f32 %v196, %v164
  %v198 = vmul.f32 %v196, %v165
  %v199 = vmul.f32 %v196, %v166
  %v200 = vmul.f32 %v196, %v167
  %v201 = vmul.f32 %v196, %v168
  %v202 = vmul.f32 %v196, %v169
  %v203 = vmul.f32 %v196, %v170
  %v204 = vmul.f32 %v196, %v171
  %v205 = vmul.f32 %v196, %v172
  %v206 = vmul.f32 %v196, %v173
  %v207 = vmul.f32 %v196, %v174
  %v208 = vmul.f32 %v196, %v175
  %v209 = vmul.f32 %v196, %v176
  %v210 = vmul.f32 %v196, %v177
  %v211 = vmul.f32 %v196, %v178
  %v212 = vmul.f32 %v196, %v179
  %v213 = vsel %vm180, %v164, %v197
  %v214 = vsel %vm181, %v165, %v198
  %v215 = vsel %vm182, %v166, %v199
  %v216 = vsel %vm183, %v167, %v200
  %v217 = vsel %vm184, %v168, %v201
  %v218 = vsel %vm185, %v169, %v202
  %v219 = vsel %vm186, %v170, %v203
  %v220 = vsel %vm187, %v171, %v204
  %v221 = vsel %vm188, %v172, %v205
  %v222 = vsel %vm189, %v173, %v206
  %v223 = vsel %vm190, %v174, %v207
  %v224 = vsel %vm191, %v175, %v208
  %v225 = vsel %vm192, %v176, %v209
  %v226 = vsel %vm193, %v177, %v210
  %v227 = vsel %vm194, %v178, %v211
  %v228 = vsel %vm195, %v179, %v212
  %vm229 = vcmask 261120
  %230 = vst.msk [vmem:[%s8] sm:$0xff] %vm229, %v213
  %231 = vst.msk [vmem:[%s8 + $0x8] sm:$0xff] %vm229, %v214
  %232 = vst.msk [vmem:[%s8 + $0x10] sm:$0xff] %vm229, %v215
  %233 = vst.msk [vmem:[%s8 + $0x18] sm:$0xff] %vm229, %v216
  %234 = vst.msk [vmem:[%s8 + $0x20] sm:$0xff] %vm229, %v217
  %235 = vst.msk [vmem:[%s8 + $0x28] sm:$0xff] %vm229, %v218
  %236 = vst.msk [vmem:[%s8 + $0x30] sm:$0xff] %vm229, %v219
  %237 = vst.msk [vmem:[%s8 + $0x38] sm:$0xff] %vm229, %v220
  %238 = vst.msk [vmem:[%s8 + $0x40] sm:$0xff] %vm229, %v221
  %239 = vst.msk [vmem:[%s8 + $0x48] sm:$0xff] %vm229, %v222
  %240 = vst.msk [vmem:[%s8 + $0x50] sm:$0xff] %vm229, %v223
  %241 = vst.msk [vmem:[%s8 + $0x58] sm:$0xff] %vm229, %v224
  %242 = vst.msk [vmem:[%s8 + $0x60] sm:$0xff] %vm229, %v225
  %243 = vst.msk [vmem:[%s8 + $0x68] sm:$0xff] %vm229, %v226
  %244 = vst.msk [vmem:[%s8 + $0x70] sm:$0xff] %vm229, %v227
  %245 = vst.msk [vmem:[%s8 + $0x78] sm:$0xff] %vm229, %v228
  %v246 = vld [vmem:[%s7] sm:$0xff]
  %v247 = vld [vmem:[%s7 + $0x8] sm:$0xff]
  %v248 = vld [vmem:[%s7 + $0x10] sm:$0xff]
  %v249 = vld [vmem:[%s7 + $0x18] sm:$0xff]
  %v251 = vsel %vm229, %v213, 0
  %v254 = vsel %vm229, %v214, 0
  %v257 = vsel %vm229, %v215, 0
  %v260 = vsel %vm229, %v216, 0
  %v263 = vsel %vm229, %v217, 0
  %v266 = vsel %vm229, %v218, 0
  %v269 = vsel %vm229, %v219, 0
  %v272 = vsel %vm229, %v220, 0
  %v275 = vsel %vm229, %v221, 0
  %v278 = vsel %vm229, %v222, 0
  %v281 = vsel %vm229, %v223, 0
  %v284 = vsel %vm229, %v224, 0
  %v287 = vsel %vm229, %v225, 0
  %v290 = vsel %vm229, %v226, 0
  %v293 = vsel %vm229, %v227, 0
  %v296 = vsel %vm229, %v228, 0
  %298 = vmatprep.subr.mxu0 0.0
  %299 = vmatpush1.msra.mxu0 %v246
  %300 = vmatprep.subr.mxu0 0.0
  %301 = vmatpush1.msra.mxu0 %v247
  %302 = vmatprep.subr.mxu0 0.0
  %303 = vmatpush1.msra.mxu0 %v248
  %304 = vmatprep.subr.mxu0 0.0
  %305 = vmatpush1.msra.mxu0 %v249
  %306 = vmatprep.subr.mxu0 0.0
  %307 = vmatpush1.msra.mxu0 0.0
  %308 = vmatprep.subr.mxu0 0.0
  %309 = vmatpush1.msra.mxu0 0.0
  %310 = vmatprep.subr.mxu0 0.0
  %311 = vmatpush1.msra.mxu0 0.0
  %312 = vmatprep.subr.mxu0 0.0
  %313 = vmatpush1.msra.mxu0 0.0
  %314 = vmatprep.subr.mxu0 0.0
  %315 = vmatpush1.msra.mxu0 0.0
  %316 = vmatprep.subr.mxu0 0.0
  %317 = vmatpush1.msra.mxu0 0.0
  %318 = vmatprep.subr.mxu0 0.0
  %319 = vmatpush1.msra.mxu0 0.0
  %320 = vmatprep.subr.mxu0 0.0
  %321 = vmatpush1.msra.mxu0 0.0
  %322 = vmatprep.subr.mxu0 0.0
  %323 = vmatpush1.msra.mxu0 0.0
  %324 = vmatprep.subr.mxu0 0.0
  %325 = vmatpush1.msra.mxu0 0.0
  %326 = vmatprep.subr.mxu0 0.0
  %327 = vmatpush1.msra.mxu0 0.0
  %328 = vmatprep.subr.mxu0 0.0
  %329 = vmatpush1.msra.mxu0 0.0
  %330 = vmatprep.subr.mxu0 0.0
  %331 = vmatpush1.msra.mxu0 0.0
  %332 = vmatprep.subr.mxu0 0.0
  %333 = vmatpush1.msra.mxu0 0.0
  %334 = vmatprep.subr.mxu0 0.0
  %335 = vmatpush1.msra.mxu0 0.0
  %336 = vmatprep.subr.mxu0 0.0
  %337 = vmatpush1.msra.mxu0 0.0
  %338 = vmatprep.subr.mxu0 0.0
  %339 = vmatpush1.msra.mxu0 0.0
  %340 = vmatprep.subr.mxu0 0.0
  %341 = vmatpush1.msra.mxu0 0.0
  %342 = vmatprep.subr.mxu0 0.0
  %343 = vmatpush1.msra.mxu0 0.0
  %344 = vmatprep.subr.mxu0 0.0
  %345 = vmatpush1.msra.mxu0 0.0
  %346 = vmatprep.subr.mxu0 0.0
  %347 = vmatpush1.msra.mxu0 0.0
  %348 = vmatprep.subr.mxu0 0.0
  %349 = vmatpush1.msra.mxu0 0.0
  %350 = vmatprep.subr.mxu0 0.0
  %351 = vmatpush1.msra.mxu0 0.0
  %352 = vmatprep.subr.mxu0 0.0
  %353 = vmatpush1.msra.mxu0 0.0
  %354 = vmatprep.subr.mxu0 0.0
  %355 = vmatpush1.msra.mxu0 0.0
  %356 = vmatprep.subr.mxu0 0.0
  %357 = vmatpush1.msra.mxu0 0.0
  %358 = vmatprep.subr.mxu0 0.0
  %359 = vmatpush1.msra.mxu0 0.0
  %360 = vmatprep.subr.mxu0 0.0
  %361 = vmatpush1.msra.mxu0 0.0
  %362 = vmatprep.mubr.f32.mxu0 0.0
  %363 = vmatmul.mubr.f32.gmra.mrb[0].mxu0 %v251
  %v364 = vpop.f32.mrb[0].mxu0
  %v365 = vadd.f32 0.0, %v364
  %v366 = vpop.f32.mrb[0].mxu0
  %367 = vmatprep.mubr.f32.mxu0 0.0
  %368 = vmatmul.mubr.f32.gmra.mrb[0].mxu0 %v254
  %v369 = vpop.f32.mrb[0].mxu0
  %v370 = vadd.f32 0.0, %v369
  %v371 = vpop.f32.mrb[0].mxu0
  %372 = vmatprep.mubr.f32.mxu0 0.0
  %373 = vmatmul.mubr.f32.gmra.mrb[0].mxu0 %v257
  %v374 = vpop.f32.mrb[0].mxu0
  %v375 = vadd.f32 0.0, %v374
  %v376 = vpop.f32.mrb[0].mxu0
  %377 = vmatprep.mubr.f32.mxu0 0.0
  %378 = vmatmul.mubr.f32.gmra.mrb[0].mxu0 %v260
  %v379 = vpop.f32.mrb[0].mxu0
  %v380 = vadd.f32 0.0, %v379
  %v381 = vpop.f32.mrb[0].mxu0
  %382 = vmatprep.mubr.f32.mxu0 0.0
  %383 = vmatmul.mubr.f32.gmra.mrb[0].mxu0 %v263
  %v384 = vpop.f32.mrb[0].mxu0
  %v385 = vadd.f32 0.0, %v384
  %v386 = vpop.f32.mrb[0].mxu0
  %387 = vmatprep.mubr.f32.mxu0 0.0
  %388 = vmatmul.mubr.f32.gmra.mrb[0].mxu0 %v266
  %v389 = vpop.f32.mrb[0].mxu0
  %v390 = vadd.f32 0.0, %v389
  %v391 = vpop.f32.mrb[0].mxu0
  %392 = vmatprep.mubr.f32.mxu0 0.0
  %393 = vmatmul.mubr.f32.gmra.mrb[0].mxu0 %v269
  %v394 = vpop.f32.mrb[0].mxu0
  %v395 = vadd.f32 0.0, %v394
  %v396 = vpop.f32.mrb[0].mxu0
  %397 = vmatprep.mubr.f32.mxu0 0.0
  %398 = vmatmul.mubr.f32.gmra.mrb[0].mxu0 %v272
  %v399 = vpop.f32.mrb[0].mxu0
  %v400 = vadd.f32 0.0, %v399
  %v401 = vpop.f32.mrb[0].mxu0
  %402 = vmatprep.mubr.f32.mxu0 0.0
  %403 = vmatmul.mubr.f32.gmra.mrb[0].mxu0 %v275
  %v404 = vpop.f32.mrb[0].mxu0
  %v405 = vadd.f32 0.0, %v404
  %v406 = vpop.f32.mrb[0].mxu0
  %407 = vmatprep.mubr.f32.mxu0 0.0
  %408 = vmatmul.mubr.f32.gmra.mrb[0].mxu0 %v278
  %v409 = vpop.f32.mrb[0].mxu0
  %v410 = vadd.f32 0.0, %v409
  %v411 = vpop.f32.mrb[0].mxu0
  %412 = vmatprep.mubr.f32.mxu0 0.0
  %413 = vmatmul.mubr.f32.gmra.mrb[0].mxu0 %v281
  %v414 = vpop.f32.mrb[0].mxu0
  %v415 = vadd.f32 0.0, %v414
  %v416 = vpop.f32.mrb[0].mxu0
  %417 = vmatprep.mubr.f32.mxu0 0.0
  %418 = vmatmul.mubr.f32.gmra.mrb[0].mxu0 %v284
  %v419 = vpop.f32.mrb[0].mxu0
  %v420 = vadd.f32 0.0, %v419
  %v421 = vpop.f32.mrb[0].mxu0
  %422 = vmatprep.mubr.f32.mxu0 0.0
  %423 = vmatmul.mubr.f32.gmra.mrb[0].mxu0 %v287
  %v424 = vpop.f32.mrb[0].mxu0
  %v425 = vadd.f32 0.0, %v424
  %v426 = vpop.f32.mrb[0].mxu0
  %427 = vmatprep.mubr.f32.mxu0 0.0
  %428 = vmatmul.mubr.f32.gmra.mrb[0].mxu0 %v290
  %v429 = vpop.f32.mrb[0].mxu0
  %v430 = vadd.f32 0.0, %v429
  %v431 = vpop.f32.mrb[0].mxu0
  %432 = vmatprep.mubr.f32.mxu0 0.0
  %433 = vmatmul.mubr.f32.gmra.mrb[0].mxu0 %v293
  %v434 = vpop.f32.mrb[0].mxu0
  %v435 = vadd.f32 0.0, %v434
  %v436 = vpop.f32.mrb[0].mxu0
  %437 = vmatprep.mubr.f32.mxu0 0.0
  %438 = vmatmul.mubr.f32.gmra.mrb[0].mxu0 %v296
  %v439 = vpop.f32.mrb[0].mxu0
  %v440 = vadd.f32 0.0, %v439
  %v441 = vpop.f32.mrb[0].mxu0
  %442 = vdwg.mxu0
  %vm443 = vcmask 64512
  %444 = vst.msk [vmem:[%s9] sm:$0xff] %vm443, %v365
  %445 = vst.msk [vmem:[%s9 + $0x8] sm:$0xff] %vm443, %v370
  %446 = vst.msk [vmem:[%s9 + $0x10] sm:$0xff] %vm443, %v375
  %447 = vst.msk [vmem:[%s9 + $0x18] sm:$0xff] %vm443, %v380
  %448 = vst.msk [vmem:[%s9 + $0x20] sm:$0xff] %vm443, %v385
  %449 = vst.msk [vmem:[%s9 + $0x28] sm:$0xff] %vm443, %v390
  %450 = vst.msk [vmem:[%s9 + $0x30] sm:$0xff] %vm443, %v395
  %451 = vst.msk [vmem:[%s9 + $0x38] sm:$0xff] %vm443, %v400
  %452 = vst.msk [vmem:[%s9 + $0x40] sm:$0xff] %vm443, %v405
  %453 = vst.msk [vmem:[%s9 + $0x48] sm:$0xff] %vm443, %v410
  %454 = vst.msk [vmem:[%s9 + $0x50] sm:$0xff] %vm443, %v415
  %455 = vst.msk [vmem:[%s9 + $0x58] sm:$0xff] %vm443, %v420
  %456 = vst.msk [vmem:[%s9 + $0x60] sm:$0xff] %vm443, %v425
  %457 = vst.msk [vmem:[%s9 + $0x68] sm:$0xff] %vm443, %v430
  %458 = vst.msk [vmem:[%s9 + $0x70] sm:$0xff] %vm443, %v435
  %459 = vst.msk [vmem:[%s9 + $0x78] sm:$0xff] %vm443, %v440
  %v460 = vld [vmem:[%s10] sm:$0x3]
  %v461 = vsel %vm443, %v365, 0.0
  %v462 = vsel %vm443, %v370, 0.0
  %v463 = vadd.f32 %v461, %v462
  %v464 = vsel %vm443, %v375, 0.0
  %v465 = vadd.f32 %v463, %v464
  %v466 = vsel %vm443, %v380, 0.0
  %v467 = vadd.f32 %v465, %v466
  %v468 = vsel %vm443, %v385, 0.0
  %v469 = vadd.f32 %v467, %v468
  %v470 = vsel %vm443, %v390, 0.0
  %v471 = vadd.f32 %v469, %v470
  %v472 = vsel %vm443, %v395, 0.0
  %v473 = vadd.f32 %v471, %v472
  %v474 = vsel %vm443, %v400, 0.0
  %v475 = vadd.f32 %v473, %v474
  %v476 = vsel %vm443, %v405, 0.0
  %v477 = vadd.f32 %v475, %v476
  %v478 = vsel %vm443, %v410, 0.0
  %v479 = vadd.f32 %v477, %v478
  %v480 = vsel %vm443, %v415, 0.0
  %v481 = vadd.f32 %v479, %v480
  %v482 = vsel %vm443, %v420, 0.0
  %v483 = vadd.f32 %v481, %v482
  %v484 = vsel %vm443, %v425, 0.0
  %v485 = vadd.f32 %v483, %v484
  %v486 = vsel %vm443, %v430, 0.0
  %v487 = vadd.f32 %v485, %v486
  %v488 = vsel %vm443, %v435, 0.0
  %v489 = vadd.f32 %v487, %v488
  %v490 = vsel %vm443, %v440, 0.0
  %v491 = vadd.f32 %v489, %v490
  %v492 = vrot.slane %v491, 4
  %v493 = vadd.f32 %v491, %v492
  %v494 = vrot.slane %v493, 2
  %v495 = vadd.f32 %v493, %v494
  %v496 = vrot.slane %v495, 1
  %v497 = vadd.f32 %v495, %v496
  %v498 = vmul.f32 %v365, %v365
  %v499 = vmul.f32 %v370, %v370
  %v500 = vmul.f32 %v375, %v375
  %v501 = vmul.f32 %v380, %v380
  %v502 = vmul.f32 %v385, %v385
  %v503 = vmul.f32 %v390, %v390
  %v504 = vmul.f32 %v395, %v395
  %v505 = vmul.f32 %v400, %v400
  %v506 = vmul.f32 %v405, %v405
  %v507 = vmul.f32 %v410, %v410
  %v508 = vmul.f32 %v415, %v415
  %v509 = vmul.f32 %v420, %v420
  %v510 = vmul.f32 %v425, %v425
  %v511 = vmul.f32 %v430, %v430
  %v512 = vmul.f32 %v435, %v435
  %v513 = vmul.f32 %v440, %v440
  %v514 = vsel %vm443, %v498, 0.0
  %v515 = vsel %vm443, %v499, 0.0
  %v516 = vadd.f32 %v514, %v515
  %v517 = vsel %vm443, %v500, 0.0
  %v518 = vadd.f32 %v516, %v517
  %v519 = vsel %vm443, %v501, 0.0
  %v520 = vadd.f32 %v518, %v519
  %v521 = vsel %vm443, %v502, 0.0
  %v522 = vadd.f32 %v520, %v521
  %v523 = vsel %vm443, %v503, 0.0
  %v524 = vadd.f32 %v522, %v523
  %v525 = vsel %vm443, %v504, 0.0
  %v526 = vadd.f32 %v524, %v525
  %v527 = vsel %vm443, %v505, 0.0
  %v528 = vadd.f32 %v526, %v527
  %v529 = vsel %vm443, %v506, 0.0
  %v530 = vadd.f32 %v528, %v529
  %v531 = vsel %vm443, %v507, 0.0
  %v532 = vadd.f32 %v530, %v531
  %v533 = vsel %vm443, %v508, 0.0
  %v534 = vadd.f32 %v532, %v533
  %v535 = vsel %vm443, %v509, 0.0
  %v536 = vadd.f32 %v534, %v535
  %v537 = vsel %vm443, %v510, 0.0
  %v538 = vadd.f32 %v536, %v537
  %v539 = vsel %vm443, %v511, 0.0
  %v540 = vadd.f32 %v538, %v539
  %v541 = vsel %vm443, %v512, 0.0
  %v542 = vadd.f32 %v540, %v541
  %v543 = vsel %vm443, %v513, 0.0
  %v544 = vadd.f32 %v542, %v543
  %v545 = vrot.slane %v544, 4
  %v546 = vadd.f32 %v544, %v545
  %v547 = vrot.slane %v546, 2
  %v548 = vadd.f32 %v546, %v547
  %v549 = vrot.slane %v548, 1
  %v550 = vadd.f32 %v548, %v549
  %vm551 = vcmask 1040384
  %v552 = vsel %vm551, %v497, %v550
  %v553 = vadd.f32 %v460, %v552
  %vm554 = vcmask 58368
  %555 = vst.msk [vmem:[%s10] sm:$0x3] %vm554, %v553
  // Predicated region
  $region38: #{_lambda_.10} parent=0 // pred_check
    _
  $region39: #{_lambda_.10} parent=0 // pred_check_branch
    %557 = sbr.rel (0) target = $region41
  $region40: #{_lambda_.10} parent=0 // pred_region
    _
  $region41: #{_lambda_.10} parent=0 // pred_fallthru
    _
  // Predicated region
  $region42: #{_lambda_.10} parent=0 // pred_check
    _
  $region43: #{_lambda_.10} parent=0 // pred_check_branch
    %559 = sbr.rel (0) target = $region45
  $region44: #{_lambda_.10} parent=0 // pred_region
    _
  $region45: #{_lambda_.10} parent=0 // pred_fallthru
    _
  // Predicated region
  $region46: #{_lambda_.10} parent=0 // pred_check
    _
  $region47: #{_lambda_.10} parent=0 // pred_check_branch
    %561 = sbr.rel (0) target = $region49
  $region48: #{_lambda_.10} parent=0 // pred_region
    _
  $region49: #{_lambda_.10} parent=0 // pred_fallthru
    _
  // Predicated region
  $region50: #{_lambda_.10} parent=0 // pred_check
    _
  $region51: #{_lambda_.10} parent=0 // pred_check_branch
    %563 = sbr.rel (0) target = $region53
  $region52: #{_lambda_.10} parent=0 // pred_region
    _
  $region53: #{_lambda_.10} parent=0 // pred_fallthru
    _
  // Predicated region
  $region54: #{_lambda_.10} parent=0 // pred_check
    _
  $region55: #{_lambda_.10} parent=0 // pred_check_branch
    %565 = sbr.rel (0) target = $region57
  $region56: #{_lambda_.10} parent=0 // pred_region
    _
  $region57: #{_lambda_.10} parent=0 // pred_fallthru
    _
  // Predicated region
  $region58: #{_lambda_.10} parent=0 // pred_check
    _
  $region59: #{_lambda_.10} parent=0 // pred_check_branch
    %567 = sbr.rel (0) target = $region61
  $region60: #{_lambda_.10} parent=0 // pred_region
    _
  $region61: #{_lambda_.10} parent=0 // pred_fallthru
    _

// kernel: _lambda_.13
$region0: #{_lambda_.13}
  #allocation0 [shape = 'u32[]', space=smem, size = 0x4, offset = 0x4, fixed_abs, tag = 'smem constant byte address 0x4 - core index']
  #allocation1 [shape = 'u32[144,128]{1,0:T(1,128)}', space=vmem, size = 0x12000, scoped, tag = 'internal scratch']
  #allocation2 [shape = 'f32[1]{0:T(128)S(6)}', space=smem, size = 0x200, scoped, tag = 'scoped memory for _lambda_.13']
  %s0 = inlined_call_operand.vmem [shape: f32[128,32], index: 0, kind: input, shape index: {}]
  %s1 = inlined_call_operand.vmem [shape: f32[128,32], index: 1, kind: input, shape index: {}]
  %s2 = inlined_call_operand.vmem [shape: f32[1,32], index: 2, kind: input, shape index: {}]
  %s3 = inlined_call_operand.vmem [shape: f32[1,32], index: 3, kind: input, shape index: {}]
  %s4 = inlined_call_operand.<no memory space> [shape: f32[1], index: 4, kind: input, shape index: {}]
  %s5 = inlined_call_operand.vmem [shape: f32[32,32], index: 5, kind: input, shape index: {}]
  %s6 = inlined_call_operand.vmem [shape: f32[1,32], index: 6, kind: input, shape index: {}]
  %s7 = inlined_call_operand.vmem [shape: f32[128,32], index: 7, kind: output, shape index: {}]
  %s8 = sld [smem:[#allocation0]]
  $region38: #{_lambda_.13} parent=0
    _
  %s10 = ssub.s32 1, %s8
  %s11 = scalar_select 0, %s10, %s8
  %12 = sst [smem:[#allocation2]] %s4
  // Predicated region
  $region2: #{_lambda_.13} parent=0 // pred_check
    _
  $region3: #{_lambda_.13} parent=0 // pred_check_branch
    %14 = sbr.rel (0) target = $region5
  $region4: #{_lambda_.13} parent=0 // pred_region
    _
  $region5: #{_lambda_.13} parent=0 // pred_fallthru
    _
  // Predicated region
  $region6: #{_lambda_.13} parent=0 // pred_check
    _
  $region7: #{_lambda_.13} parent=0 // pred_check_branch
    %16 = sbr.rel (0) target = $region9
  $region8: #{_lambda_.13} parent=0 // pred_region
    _
  $region9: #{_lambda_.13} parent=0 // pred_fallthru
    _
  // Predicated region
  $region10: #{_lambda_.13} parent=0 // pred_check
    _
  $region11: #{_lambda_.13} parent=0 // pred_check_branch
    %18 = sbr.rel (0) target = $region13
  $region12: #{_lambda_.13} parent=0 // pred_region
    _
  $region13: #{_lambda_.13} parent=0 // pred_fallthru
    _
  // Predicated region
  $region14: #{_lambda_.13} parent=0 // pred_check
    _
  $region15: #{_lambda_.13} parent=0 // pred_check_branch
    %20 = sbr.rel (0) target = $region17
  $region16: #{_lambda_.13} parent=0 // pred_region
    _
  $region17: #{_lambda_.13} parent=0 // pred_fallthru
    _
  // Predicated region
  $region18: #{_lambda_.13} parent=0 // pred_check
    _
  $region19: #{_lambda_.13} parent=0 // pred_check_branch
    %22 = sbr.rel (0) target = $region21
  $region20: #{_lambda_.13} parent=0 // pred_region
    _
  $region21: #{_lambda_.13} parent=0 // pred_fallthru
    _
  // Predicated region
  $region22: #{_lambda_.13} parent=0 // pred_check
    _
  $region23: #{_lambda_.13} parent=0 // pred_check_branch
    %24 = sbr.rel (0) target = $region25
  $region24: #{_lambda_.13} parent=0 // pred_region
    _
  $region25: #{_lambda_.13} parent=0 // pred_fallthru
    _
  // Predicated region
  $region26: #{_lambda_.13} parent=0 // pred_check
    _
  $region27: #{_lambda_.13} parent=0 // pred_check_branch
    %26 = sbr.rel (0) target = $region29
  $region28: #{_lambda_.13} parent=0 // pred_region
    _
  $region29: #{_lambda_.13} parent=0 // pred_fallthru
    _
  %s27 = sld [smem:[#allocation2]]
  %v28 = vld [vmem:[%s0] sm:$0xff]
  %v29 = vld [vmem:[%s0 + $0x8] sm:$0xff]
  %v30 = vld [vmem:[%s0 + $0x10] sm:$0xff]
  %v31 = vld [vmem:[%s0 + $0x18] sm:$0xff]
  %v32 = vld [vmem:[%s0 + $0x20] sm:$0xff]
  %v33 = vld [vmem:[%s0 + $0x28] sm:$0xff]
  %v34 = vld [vmem:[%s0 + $0x30] sm:$0xff]
  %v35 = vld [vmem:[%s0 + $0x38] sm:$0xff]
  %v36 = vld [vmem:[%s0 + $0x40] sm:$0xff]
  %v37 = vld [vmem:[%s0 + $0x48] sm:$0xff]
  %v38 = vld [vmem:[%s0 + $0x50] sm:$0xff]
  %v39 = vld [vmem:[%s0 + $0x58] sm:$0xff]
  %v40 = vld [vmem:[%s0 + $0x60] sm:$0xff]
  %v41 = vld [vmem:[%s0 + $0x68] sm:$0xff]
  %v42 = vld [vmem:[%s0 + $0x70] sm:$0xff]
  %v43 = vld [vmem:[%s0 + $0x78] sm:$0xff]
  %v44 = vld [vmem:[%s2] sm:$0x1]
  %v46 = vlaneseq
  %v47 = vshrl.u32 %v46, 7
  %v48 = vsub.s32 0, %v47
  %v49 = vrot.slane %v44, %v48
  %v51 = vmul.f32 %v28, %v49
  %v52 = vmul.f32 %v29, %v49
  %v53 = vmul.f32 %v30, %v49
  %v54 = vmul.f32 %v31, %v49
  %v55 = vmul.f32 %v32, %v49
  %v56 = vmul.f32 %v33, %v49
  %v57 = vmul.f32 %v34, %v49
  %v58 = vmul.f32 %v35, %v49
  %v59 = vmul.f32 %v36, %v49
  %v60 = vmul.f32 %v37, %v49
  %v61 = vmul.f32 %v38, %v49
  %v62 = vmul.f32 %v39, %v49
  %v63 = vmul.f32 %v40, %v49
  %v64 = vmul.f32 %v41, %v49
  %v65 = vmul.f32 %v42, %v49
  %v66 = vmul.f32 %v43, %v49
  %v67 = vld [vmem:[%s3] sm:$0x1]
  %v69 = vlaneseq
  %v70 = vshrl.u32 %v69, 7
  %v71 = vsub.s32 0, %v70
  %v72 = vrot.slane %v67, %v71
  %v74 = vadd.f32 %v51, %v72
  %v75 = vadd.f32 %v52, %v72
  %v76 = vadd.f32 %v53, %v72
  %v77 = vadd.f32 %v54, %v72
  %v78 = vadd.f32 %v55, %v72
  %v79 = vadd.f32 %v56, %v72
  %v80 = vadd.f32 %v57, %v72
  %v81 = vadd.f32 %v58, %v72
  %v82 = vadd.f32 %v59, %v72
  %v83 = vadd.f32 %v60, %v72
  %v84 = vadd.f32 %v61, %v72
  %v85 = vadd.f32 %v62, %v72
  %v86 = vadd.f32 %v63, %v72
  %v87 = vadd.f32 %v64, %v72
  %v88 = vadd.f32 %v65, %v72
  %v89 = vadd.f32 %v66, %v72
  %v90 = vld [vmem:[%s1] sm:$0xff]
  %v91 = vld [vmem:[%s1 + $0x8] sm:$0xff]
  %v92 = vld [vmem:[%s1 + $0x10] sm:$0xff]
  %v93 = vld [vmem:[%s1 + $0x18] sm:$0xff]
  %v94 = vld [vmem:[%s1 + $0x20] sm:$0xff]
  %v95 = vld [vmem:[%s1 + $0x28] sm:$0xff]
  %v96 = vld [vmem:[%s1 + $0x30] sm:$0xff]
  %v97 = vld [vmem:[%s1 + $0x38] sm:$0xff]
  %v98 = vld [vmem:[%s1 + $0x40] sm:$0xff]
  %v99 = vld [vmem:[%s1 + $0x48] sm:$0xff]
  %v100 = vld [vmem:[%s1 + $0x50] sm:$0xff]
  %v101 = vld [vmem:[%s1 + $0x58] sm:$0xff]
  %v102 = vld [vmem:[%s1 + $0x60] sm:$0xff]
  %v103 = vld [vmem:[%s1 + $0x68] sm:$0xff]
  %v104 = vld [vmem:[%s1 + $0x70] sm:$0xff]
  %v105 = vld [vmem:[%s1 + $0x78] sm:$0xff]
  %v106 = vadd.f32 %v74, %v90
  %v107 = vadd.f32 %v75, %v91
  %v108 = vadd.f32 %v76, %v92
  %v109 = vadd.f32 %v77, %v93
  %v110 = vadd.f32 %v78, %v94
  %v111 = vadd.f32 %v79, %v95
  %v112 = vadd.f32 %v80, %v96
  %v113 = vadd.f32 %v81, %v97
  %v114 = vadd.f32 %v82, %v98
  %v115 = vadd.f32 %v83, %v99
  %v116 = vadd.f32 %v84, %v100
  %v117 = vadd.f32 %v85, %v101
  %v118 = vadd.f32 %v86, %v102
  %v119 = vadd.f32 %v87, %v103
  %v120 = vadd.f32 %v88, %v104
  %v121 = vadd.f32 %v89, %v105
  %vm122 = vcmp.gt.f32.partialorder %v106, 0.0
  %vm123 = vcmp.gt.f32.partialorder %v107, 0.0
  %vm124 = vcmp.gt.f32.partialorder %v108, 0.0
  %vm125 = vcmp.gt.f32.partialorder %v109, 0.0
  %vm126 = vcmp.gt.f32.partialorder %v110, 0.0
  %vm127 = vcmp.gt.f32.partialorder %v111, 0.0
  %vm128 = vcmp.gt.f32.partialorder %v112, 0.0
  %vm129 = vcmp.gt.f32.partialorder %v113, 0.0
  %vm130 = vcmp.gt.f32.partialorder %v114, 0.0
  %vm131 = vcmp.gt.f32.partialorder %v115, 0.0
  %vm132 = vcmp.gt.f32.partialorder %v116, 0.0
  %vm133 = vcmp.gt.f32.partialorder %v117, 0.0
  %vm134 = vcmp.gt.f32.partialorder %v118, 0.0
  %vm135 = vcmp.gt.f32.partialorder %v119, 0.0
  %vm136 = vcmp.gt.f32.partialorder %v120, 0.0
  %vm137 = vcmp.gt.f32.partialorder %v121, 0.0
  %v138 = vstv %s27
  %v139 = vmul.f32 %v138, %v106
  %v140 = vmul.f32 %v138, %v107
  %v141 = vmul.f32 %v138, %v108
  %v142 = vmul.f32 %v138, %v109
  %v143 = vmul.f32 %v138, %v110
  %v144 = vmul.f32 %v138, %v111
  %v145 = vmul.f32 %v138, %v112
  %v146 = vmul.f32 %v138, %v113
  %v147 = vmul.f32 %v138, %v114
  %v148 = vmul.f32 %v138, %v115
  %v149 = vmul.f32 %v138, %v116
  %v150 = vmul.f32 %v138, %v117
  %v151 = vmul.f32 %v138, %v118
  %v152 = vmul.f32 %v138, %v119
  %v153 = vmul.f32 %v138, %v120
  %v154 = vmul.f32 %v138, %v121
  %v155 = vsel %vm122, %v106, %v139
  %v156 = vsel %vm123, %v107, %v140
  %v157 = vsel %vm124, %v108, %v141
  %v158 = vsel %vm125, %v109, %v142
  %v159 = vsel %vm126, %v110, %v143
  %v160 = vsel %vm127, %v111, %v144
  %v161 = vsel %vm128, %v112, %v145
  %v162 = vsel %vm129, %v113, %v146
  %v163 = vsel %vm130, %v114, %v147
  %v164 = vsel %vm131, %v115, %v148
  %v165 = vsel %vm132, %v116, %v149
  %v166 = vsel %vm133, %v117, %v150
  %v167 = vsel %vm134, %v118, %v151
  %v168 = vsel %vm135, %v119, %v152
  %v169 = vsel %vm136, %v120, %v153
  %v170 = vsel %vm137, %v121, %v154
  %v171 = vld [vmem:[%s5] sm:$0xff]
  %v172 = vld [vmem:[%s5 + $0x8] sm:$0xff]
  %v173 = vld [vmem:[%s5 + $0x10] sm:$0xff]
  %v174 = vld [vmem:[%s5 + $0x18] sm:$0xff]
  %v175 = vld [vmem:[%s6] sm:$0x1]
  %v177 = vlaneseq
  %v178 = vshrl.u32 %v177, 7
  %v179 = vsub.s32 0, %v178
  %v180 = vrot.slane %v175, %v179
  %vm182 = vcmask 261120
  %v184 = vsel %vm182, %v155, 0
  %v187 = vsel %vm182, %v156, 0
  %v190 = vsel %vm182, %v157, 0
  %v193 = vsel %vm182, %v158, 0
  %v196 = vsel %vm182, %v159, 0
  %v199 = vsel %vm182, %v160, 0
  %v202 = vsel %vm182, %v161, 0
  %v205 = vsel %vm182, %v162, 0
  %v208 = vsel %vm182, %v163, 0
  %v211 = vsel %vm182, %v164, 0
  %v214 = vsel %vm182, %v165, 0
  %v217 = vsel %vm182, %v166, 0
  %v220 = vsel %vm182, %v167, 0
  %v223 = vsel %vm182, %v168, 0
  %v226 = vsel %vm182, %v169, 0
  %v229 = vsel %vm182, %v170, 0
  %231 = vmatprep.subr.mxu0 0.0
  %232 = vmatpush1.msra.mxu0 %v171
  %233 = vmatprep.subr.mxu0 0.0
  %234 = vmatpush1.msra.mxu0 %v172
  %235 = vmatprep.subr.mxu0 0.0
  %236 = vmatpush1.msra.mxu0 %v173
  %237 = vmatprep.subr.mxu0 0.0
  %238 = vmatpush1.msra.mxu0 %v174
  %239 = vmatprep.subr.mxu0 0.0
  %240 = vmatpush1.msra.mxu0 0.0
  %241 = vmatprep.subr.mxu0 0.0
  %242 = vmatpush1.msra.mxu0 0.0
  %243 = vmatprep.subr.mxu0 0.0
  %244 = vmatpush1.msra.mxu0 0.0
  %245 = vmatprep.subr.mxu0 0.0
  %246 = vmatpush1.msra.mxu0 0.0
  %247 = vmatprep.subr.mxu0 0.0
  %248 = vmatpush1.msra.mxu0 0.0
  %249 = vmatprep.subr.mxu0 0.0
  %250 = vmatpush1.msra.mxu0 0.0
  %251 = vmatprep.subr.mxu0 0.0
  %252 = vmatpush1.msra.mxu0 0.0
  %253 = vmatprep.subr.mxu0 0.0
  %254 = vmatpush1.msra.mxu0 0.0
  %255 = vmatprep.subr.mxu0 0.0
  %256 = vmatpush1.msra.mxu0 0.0
  %257 = vmatprep.subr.mxu0 0.0
  %258 = vmatpush1.msra.mxu0 0.0
  %259 = vmatprep.subr.mxu0 0.0
  %260 = vmatpush1.msra.mxu0 0.0
  %261 = vmatprep.subr.mxu0 0.0
  %262 = vmatpush1.msra.mxu0 0.0
  %263 = vmatprep.subr.mxu0 0.0
  %264 = vmatpush1.msra.mxu0 0.0
  %265 = vmatprep.subr.mxu0 0.0
  %266 = vmatpush1.msra.mxu0 0.0
  %267 = vmatprep.subr.mxu0 0.0
  %268 = vmatpush1.msra.mxu0 0.0
  %269 = vmatprep.subr.mxu0 0.0
  %270 = vmatpush1.msra.mxu0 0.0
  %271 = vmatprep.subr.mxu0 0.0
  %272 = vmatpush1.msra.mxu0 0.0
  %273 = vmatprep.subr.mxu0 0.0
  %274 = vmatpush1.msra.mxu0 0.0
  %275 = vmatprep.subr.mxu0 0.0
  %276 = vmatpush1.msra.mxu0 0.0
  %277 = vmatprep.subr.mxu0 0.0
  %278 = vmatpush1.msra.mxu0 0.0
  %279 = vmatprep.subr.mxu0 0.0
  %280 = vmatpush1.msra.mxu0 0.0
  %281 = vmatprep.subr.mxu0 0.0
  %282 = vmatpush1.msra.mxu0 0.0
  %283 = vmatprep.subr.mxu0 0.0
  %284 = vmatpush1.msra.mxu0 0.0
  %285 = vmatprep.subr.mxu0 0.0
  %286 = vmatpush1.msra.mxu0 0.0
  %287 = vmatprep.subr.mxu0 0.0
  %288 = vmatpush1.msra.mxu0 0.0
  %289 = vmatprep.subr.mxu0 0.0
  %290 = vmatpush1.msra.mxu0 0.0
  %291 = vmatprep.subr.mxu0 0.0
  %292 = vmatpush1.msra.mxu0 0.0
  %293 = vmatprep.subr.mxu0 0.0
  %294 = vmatpush1.msra.mxu0 0.0
  %295 = vmatprep.mubr.f32.mxu0 0.0
  %296 = vmatmul.mubr.f32.gmra.mrb[0].mxu0 %v184
  %v297 = vpop.f32.mrb[0].mxu0
  %v298 = vadd.f32 %v180, %v297
  %v299 = vpop.f32.mrb[0].mxu0
  %300 = vmatprep.mubr.f32.mxu0 0.0
  %301 = vmatmul.mubr.f32.gmra.mrb[0].mxu0 %v187
  %v302 = vpop.f32.mrb[0].mxu0
  %v303 = vadd.f32 %v180, %v302
  %v304 = vpop.f32.mrb[0].mxu0
  %305 = vmatprep.mubr.f32.mxu0 0.0
  %306 = vmatmul.mubr.f32.gmra.mrb[0].mxu0 %v190
  %v307 = vpop.f32.mrb[0].mxu0
  %v308 = vadd.f32 %v180, %v307
  %v309 = vpop.f32.mrb[0].mxu0
  %310 = vmatprep.mubr.f32.mxu0 0.0
  %311 = vmatmul.mubr.f32.gmra.mrb[0].mxu0 %v193
  %v312 = vpop.f32.mrb[0].mxu0
  %v313 = vadd.f32 %v180, %v312
  %v314 = vpop.f32.mrb[0].mxu0
  %315 = vmatprep.mubr.f32.mxu0 0.0
  %316 = vmatmul.mubr.f32.gmra.mrb[0].mxu0 %v196
  %v317 = vpop.f32.mrb[0].mxu0
  %v318 = vadd.f32 %v180, %v317
  %v319 = vpop.f32.mrb[0].mxu0
  %320 = vmatprep.mubr.f32.mxu0 0.0
  %321 = vmatmul.mubr.f32.gmra.mrb[0].mxu0 %v199
  %v322 = vpop.f32.mrb[0].mxu0
  %v323 = vadd.f32 %v180, %v322
  %v324 = vpop.f32.mrb[0].mxu0
  %325 = vmatprep.mubr.f32.mxu0 0.0
  %326 = vmatmul.mubr.f32.gmra.mrb[0].mxu0 %v202
  %v327 = vpop.f32.mrb[0].mxu0
  %v328 = vadd.f32 %v180, %v327
  %v329 = vpop.f32.mrb[0].mxu0
  %330 = vmatprep.mubr.f32.mxu0 0.0
  %331 = vmatmul.mubr.f32.gmra.mrb[0].mxu0 %v205
  %v332 = vpop.f32.mrb[0].mxu0
  %v333 = vadd.f32 %v180, %v332
  %v334 = vpop.f32.mrb[0].mxu0
  %335 = vmatprep.mubr.f32.mxu0 0.0
  %336 = vmatmul.mubr.f32.gmra.mrb[0].mxu0 %v208
  %v337 = vpop.f32.mrb[0].mxu0
  %v338 = vadd.f32 %v180, %v337
  %v339 = vpop.f32.mrb[0].mxu0
  %340 = vmatprep.mubr.f32.mxu0 0.0
  %341 = vmatmul.mubr.f32.gmra.mrb[0].mxu0 %v211
  %v342 = vpop.f32.mrb[0].mxu0
  %v343 = vadd.f32 %v180, %v342
  %v344 = vpop.f32.mrb[0].mxu0
  %345 = vmatprep.mubr.f32.mxu0 0.0
  %346 = vmatmul.mubr.f32.gmra.mrb[0].mxu0 %v214
  %v347 = vpop.f32.mrb[0].mxu0
  %v348 = vadd.f32 %v180, %v347
  %v349 = vpop.f32.mrb[0].mxu0
  %350 = vmatprep.mubr.f32.mxu0 0.0
  %351 = vmatmul.mubr.f32.gmra.mrb[0].mxu0 %v217
  %v352 = vpop.f32.mrb[0].mxu0
  %v353 = vadd.f32 %v180, %v352
  %v354 = vpop.f32.mrb[0].mxu0
  %355 = vmatprep.mubr.f32.mxu0 0.0
  %356 = vmatmul.mubr.f32.gmra.mrb[0].mxu0 %v220
  %v357 = vpop.f32.mrb[0].mxu0
  %v358 = vadd.f32 %v180, %v357
  %v359 = vpop.f32.mrb[0].mxu0
  %360 = vmatprep.mubr.f32.mxu0 0.0
  %361 = vmatmul.mubr.f32.gmra.mrb[0].mxu0 %v223
  %v362 = vpop.f32.mrb[0].mxu0
  %v363 = vadd.f32 %v180, %v362
  %v364 = vpop.f32.mrb[0].mxu0
  %365 = vmatprep.mubr.f32.mxu0 0.0
  %366 = vmatmul.mubr.f32.gmra.mrb[0].mxu0 %v226
  %v367 = vpop.f32.mrb[0].mxu0
  %v368 = vadd.f32 %v180, %v367
  %v369 = vpop.f32.mrb[0].mxu0
  %370 = vmatprep.mubr.f32.mxu0 0.0
  %371 = vmatmul.mubr.f32.gmra.mrb[0].mxu0 %v229
  %v372 = vpop.f32.mrb[0].mxu0
  %v373 = vadd.f32 %v180, %v372
  %v374 = vpop.f32.mrb[0].mxu0
  %375 = vdwg.mxu0
  %376 = vst.msk [vmem:[%s7] sm:$0xff] %vm182, %v298
  %377 = vst.msk [vmem:[%s7 + $0x8] sm:$0xff] %vm182, %v303
  %378 = vst.msk [vmem:[%s7 + $0x10] sm:$0xff] %vm182, %v308
  %379 = vst.msk [vmem:[%s7 + $0x18] sm:$0xff] %vm182, %v313
  %380 = vst.msk [vmem:[%s7 + $0x20] sm:$0xff] %vm182, %v318
  %381 = vst.msk [vmem:[%s7 + $0x28] sm:$0xff] %vm182, %v323
  %382 = vst.msk [vmem:[%s7 + $0x30] sm:$0xff] %vm182, %v328
  %383 = vst.msk [vmem:[%s7 + $0x38] sm:$0xff] %vm182, %v333
  %384 = vst.msk [vmem:[%s7 + $0x40] sm:$0xff] %vm182, %v338
  %385 = vst.msk [vmem:[%s7 + $0x48] sm:$0xff] %vm182, %v343
  %386 = vst.msk [vmem:[%s7 + $0x50] sm:$0xff] %vm182, %v348
  %387 = vst.msk [vmem:[%s7 + $0x58] sm:$0xff] %vm182, %v353
  %388 = vst.msk [vmem:[%s7 + $0x60] sm:$0xff] %vm182, %v358
  %389 = vst.msk [vmem:[%s7 + $0x68] sm:$0xff] %vm182, %v363
  %390 = vst.msk [vmem:[%s7 + $0x70] sm:$0xff] %vm182, %v368
  %391 = vst.msk [vmem:[%s7 + $0x78] sm:$0xff] %vm182, %v373
  // Predicated region
  $region30: #{_lambda_.13} parent=0 // pred_check
    _
  $region31: #{_lambda_.13} parent=0 // pred_check_branch
    %393 = sbr.rel (0) target = $region33
  $region32: #{_lambda_.13} parent=0 // pred_region
    _
  $region33: #{_lambda_.13} parent=0 // pred_fallthru
    _
  // Predicated region
  $region34: #{_lambda_.13} parent=0 // pred_check
    _
  $region35: #{_lambda_.13} parent=0 // pred_check_branch
    %395 = sbr.rel (0) target = $region37
  $region36: #{_lambda_.13} parent=0 // pred_region
    _
  $region37: #{_lambda_.13} parent=0 // pred_fallthru
    _

</llo_original>
